<compile_context>
chip_gen: v6e
topology: v6e:2x2x1
jax: 0.10.0
libtpu: 0.0.40
codegen_flags: <defaults>
</compile_context>

<pallas_src>
import jax
import jax.numpy as jnp
from jax.experimental import pallas as pl
from jax.experimental.pallas import tpu as pltpu

# ----------------------------- small CLIP config -----------------------------
BATCH = 2
CHANNELS = 3
IMAGE_SIZE = 16
PATCH_SIZE = 8
HIDDEN = 32
HEADS = 4
HEAD_DIM = HIDDEN // HEADS
INTERMEDIATE = 64
NUM_LAYERS = 3
LN_EPS = 1e-5
SELECT_LAYER = -2          # args.mm_vision_select_layer (LLaVA default)
SELECT_FEATURE = "patch"   # drop CLS token

NUM_PATCHES = (IMAGE_SIZE // PATCH_SIZE) ** 2
SEQ = NUM_PATCHES + 1      # +1 CLS token
T_PAD = 8                  # sequence padded to a sublane multiple
CPP = CHANNELS * PATCH_SIZE * PATCH_SIZE

# hidden_states[SELECT_LAYER] is produced after this many encoder layers; layers
# past it are never computed (their outputs would be dead).
SELECT_IDX = SELECT_LAYER % (NUM_LAYERS + 1)
LAYERS_COMPUTED = SELECT_IDX


# ------------------------------- fused kernel --------------------------------
def _clip_fused_kernel(pm_ref, pw_ref, base_ref,
                       pre_g_ref, pre_b_ref,
                       ln1_g_ref, ln1_b_ref, qkv_w_ref, qkv_b_ref,
                       o_w_ref, o_b_ref,
                       ln2_g_ref, ln2_b_ref,
                       fc1_w_ref, fc1_b_ref, fc2_w_ref, fc2_b_ref,
                       out_ref):
    """One image per grid step; activations stay resident in VMEM.

    pm_ref   : [T_PAD, CPP] bf16  unfolded patches (CLS / pad rows are zero)
    pw_ref   : [CPP, D]     bf16  patch-embedding conv weight (flattened)
    base_ref : [T_PAD, D]   f32   class_emb (CLS row) + positional embeddings
    *_ref    : weights for the LAYERS_COMPUTED layers, stacked on axis 0
    out_ref  : [T_PAD, D]   f32   hidden_states[SELECT_LAYER] for this image
    """
    f32 = jnp.float32
    bf16 = jnp.bfloat16

    def layer_norm(x, g, b):
        # one-pass variance: E[x^2] - E[x]^2 (halves cross-lane reductions)
        mu = jnp.mean(x, axis=-1, keepdims=True)
        ex2 = jnp.mean(x * x, axis=-1, keepdims=True)
        var = ex2 - mu * mu
        return (x - mu) * jax.lax.rsqrt(var + LN_EPS) * g + b

    # --- patch embedding (stride==kernel conv as one matmul) + cls/pos add ---
    x = jnp.dot(pm_ref[...], pw_ref[...], preferred_element_type=f32) + base_ref[...]

    # --- pre_layrnorm ---
    h = layer_norm(x, pre_g_ref[...], pre_b_ref[...])

    # key-padding mask built in-kernel (no HBM DMA): pad columns -> -1e9
    col = jax.lax.broadcasted_iota(jnp.int32, (T_PAD, T_PAD), 1)
    kmask = jnp.where(col < SEQ, jnp.float32(0.0), jnp.float32(-1e9))

    scale = HEAD_DIM ** -0.5

    for l in range(LAYERS_COMPUTED):      # static unroll (tiny layer count)
        # ---------------- self-attention block ----------------
        resid = h
        hn = layer_norm(h, ln1_g_ref[l:l + 1, :], ln1_b_ref[l:l + 1, :])
        # fused QKV projection: one lane-dense [T, 3*D] bf16 matmul
        qkv = (jnp.dot(hn.astype(bf16), qkv_w_ref[l],
                       preferred_element_type=f32)
               + qkv_b_ref[l:l + 1, :])

        # per-head softmax attention; contexts are lane-concatenated and the
        # head merge is done with ONE [T,D]@[D,D] output-projection matmul.
        ctxs = []
        for hd in range(HEADS):
            lo = hd * HEAD_DIM
            q = (qkv[:, lo:lo + HEAD_DIM] * scale).astype(bf16)
            k = qkv[:, HIDDEN + lo:HIDDEN + lo + HEAD_DIM].astype(bf16)
            v = qkv[:, 2 * HIDDEN + lo:2 * HIDDEN + lo + HEAD_DIM].astype(bf16)
            s = jax.lax.dot_general(q, k, (((1,), (1,)), ((), ())),
                                    preferred_element_type=f32) + kmask
            s = s - jnp.max(s, axis=-1, keepdims=True)
            p = jnp.exp(s)
            p = p * pl.reciprocal(jnp.sum(p, axis=-1, keepdims=True),
                                  approx=True)
            ctxs.append(jnp.dot(p.astype(bf16), v,
                                preferred_element_type=f32))     # [T, Dh]
        ctx = jnp.concatenate(ctxs, axis=-1)                      # [T, D]
        attn = (jnp.dot(ctx.astype(bf16), o_w_ref[l],
                        preferred_element_type=f32)
                + o_b_ref[l:l + 1, :])
        h = attn + resid

        # ---------------- MLP block (quick_gelu) ----------------
        resid = h
        hn = layer_norm(h, ln2_g_ref[l:l + 1, :], ln2_b_ref[l:l + 1, :])
        hn = (jnp.dot(hn.astype(bf16), fc1_w_ref[l],
                      preferred_element_type=f32)
              + fc1_b_ref[l:l + 1, :])
        hn = hn * jax.nn.sigmoid(1.702 * hn)          # quick-GELU, f32
        h = (jnp.dot(hn.astype(bf16), fc2_w_ref[l],
                     preferred_element_type=f32)
             + fc2_b_ref[l:l + 1, :]) + resid

    out_ref[...] = h.astype(out_ref.dtype)


# ------------------------------ parameter init --------------------------------
def init_params(key):
    def nrm(k, shape, scale=0.02):
        return (scale * jax.random.normal(k, shape)).astype(jnp.float32)

    keys = iter(jax.random.split(key, 8 + NUM_LAYERS * 16))
    params = {
        # Conv2d(C, D, ps, ps, bias=False) stored pre-flattened as [C*ps*ps, D]
        "patch_w": nrm(next(keys), (CPP, HIDDEN)),
        "class_emb": nrm(next(keys), (HIDDEN,)),
        "pos_emb": nrm(next(keys), (SEQ, HIDDEN)),
        "pre_ln_g": jnp.ones((HIDDEN,), jnp.float32),
        "pre_ln_b": jnp.zeros((HIDDEN,), jnp.float32),
        "layers": [],
    }
    for _ in range(NUM_LAYERS):
        lp = {
            "ln1_g": jnp.ones((HIDDEN,), jnp.float32),
            "ln1_b": jnp.zeros((HIDDEN,), jnp.float32),
            "q_w": nrm(next(keys), (HIDDEN, HIDDEN)),
            "q_b": nrm(next(keys), (HIDDEN,)),
            "k_w": nrm(next(keys), (HIDDEN, HIDDEN)),
            "k_b": nrm(next(keys), (HIDDEN,)),
            "v_w": nrm(next(keys), (HIDDEN, HIDDEN)),
            "v_b": nrm(next(keys), (HIDDEN,)),
            "o_w": nrm(next(keys), (HIDDEN, HIDDEN)),
            "o_b": nrm(next(keys), (HIDDEN,)),
            "ln2_g": jnp.ones((HIDDEN,), jnp.float32),
            "ln2_b": jnp.zeros((HIDDEN,), jnp.float32),
            "fc1_w": nrm(next(keys), (HIDDEN, INTERMEDIATE)),
            "fc1_b": nrm(next(keys), (INTERMEDIATE,)),
            "fc2_w": nrm(next(keys), (INTERMEDIATE, HIDDEN)),
            "fc2_b": nrm(next(keys), (HIDDEN,)),
        }
        params["layers"].append(lp)
    return params


def pack_params(params):
    """Stack only the LAYERS_COMPUTED layers' weights; fuse QKV; bf16 matmul weights."""
    L = params["layers"][:LAYERS_COMPUTED]
    s32 = lambda name: jnp.stack([lp[name] for lp in L], axis=0).astype(jnp.float32)
    s16 = lambda name: jnp.stack([lp[name] for lp in L], axis=0).astype(jnp.bfloat16)
    return {
        "patch_w": params["patch_w"].astype(jnp.bfloat16),
        "class_emb": params["class_emb"],
        "pos_emb": params["pos_emb"],
        "pre_ln_g": params["pre_ln_g"].reshape(1, HIDDEN),
        "pre_ln_b": params["pre_ln_b"].reshape(1, HIDDEN),
        "ln1_g": s32("ln1_g"), "ln1_b": s32("ln1_b"),
        "qkv_w": jnp.stack(
            [jnp.concatenate([lp["q_w"], lp["k_w"], lp["v_w"]], axis=1) for lp in L],
            axis=0).astype(jnp.bfloat16),
        "qkv_b": jnp.stack(
            [jnp.concatenate([lp["q_b"], lp["k_b"], lp["v_b"]], axis=0) for lp in L],
            axis=0).astype(jnp.float32),
        "o_w": s16("o_w"), "o_b": s32("o_b"),
        "ln2_g": s32("ln2_g"), "ln2_b": s32("ln2_b"),
        "fc1_w": s16("fc1_w"), "fc1_b": s32("fc1_b"),
        "fc2_w": s16("fc2_w"), "fc2_b": s32("fc2_b"),
    }


# ------------------------- CLIPVisionTower.forward ----------------------------
@jax.jit
def clip_vision_tower_forward(images, packed):
    """images: NCHW float32 [B, C, H, W] -> [B, num_patches, hidden]."""
    B, C, H, W = images.shape
    ps = PATCH_SIZE
    gh, gw = H // ps, W // ps

    # --- layout glue (plain JAX): unfold patches; row 0 = CLS (zero patch),
    #     rows SEQ..T_PAD-1 = padding (zero).  bf16 halves the DMA bytes. ---
    patches = images.reshape(B, C, gh, ps, gw, ps).transpose(0, 2, 4, 1, 3, 5)
    patches = patches.reshape(B, gh * gw, CPP)
    pm = jnp.zeros((B, T_PAD, CPP), jnp.bfloat16)
    pm = pm.at[:, 1:SEQ, :].set(patches.astype(jnp.bfloat16))

    # class/positional embedding baseline, passed ONCE as [T_PAD, D]
    base_tok = packed["pos_emb"].at[0].add(packed["class_emb"])      # [SEQ, D]
    base = jnp.zeros((T_PAD, HIDDEN), jnp.float32).at[:SEQ].set(base_tok)

    rep2 = lambda b: (0, 0)
    rep3 = lambda b: (0, 0, 0)
    full2 = lambda shape: pl.BlockSpec(shape, rep2)
    full3 = lambda shape: pl.BlockSpec(shape, rep3)
    Lc = LAYERS_COMPUTED

    out = pl.pallas_call(
        _clip_fused_kernel,
        out_shape=jax.ShapeDtypeStruct((B, T_PAD, HIDDEN), jnp.float32),
        grid=(B,),
        in_specs=[
            pl.BlockSpec((None, T_PAD, CPP), lambda b: (b, 0, 0)),   # pm
            full2((CPP, HIDDEN)),                                    # patch_w
            full2((T_PAD, HIDDEN)),                                  # base
            full2((1, HIDDEN)), full2((1, HIDDEN)),                  # pre LN
            full2((Lc, HIDDEN)), full2((Lc, HIDDEN)),                # ln1
            full3((Lc, HIDDEN, 3 * HIDDEN)), full2((Lc, 3 * HIDDEN)),  # qkv
            full3((Lc, HIDDEN, HIDDEN)), full2((Lc, HIDDEN)),        # out proj
            full2((Lc, HIDDEN)), full2((Lc, HIDDEN)),                # ln2
            full3((Lc, HIDDEN, INTERMEDIATE)), full2((Lc, INTERMEDIATE)),  # fc1
            full3((Lc, INTERMEDIATE, HIDDEN)), full2((Lc, HIDDEN)),  # fc2
        ],
        out_specs=pl.BlockSpec((None, T_PAD, HIDDEN), lambda b: (b, 0, 0)),
        compiler_params=pltpu.CompilerParams(
            dimension_semantics=("parallel",)),
    )(pm, packed["patch_w"], base,
      packed["pre_ln_g"], packed["pre_ln_b"],
      packed["ln1_g"], packed["ln1_b"], packed["qkv_w"], packed["qkv_b"],
      packed["o_w"], packed["o_b"],
      packed["ln2_g"], packed["ln2_b"],
      packed["fc1_w"], packed["fc1_b"], packed["fc2_w"], packed["fc2_b"])

    # --- feature_select: drop CLS for 'patch'; strip sequence padding ---
    if SELECT_FEATURE == "patch":
        feats = out[:, 1:SEQ, :]
    else:  # 'cls_patch'
        feats = out[:, :SEQ, :]
    return feats.astype(images.dtype)


# ------------------------------ pure-JAX reference -----------------------------
def reference_forward(images, params):
    B, C, H, W = images.shape
    ps = PATCH_SIZE
    gh, gw = H // ps, W // ps
    patches = images.reshape(B, C, gh, ps, gw, ps).transpose(0, 2, 4, 1, 3, 5)
    patches = patches.reshape(B * gh * gw, CPP)
    patch_emb = (patches @ params["patch_w"]).reshape(B, gh * gw, HIDDEN)
    cls = jnp.broadcast_to(params["class_emb"][None, None, :], (B, 1, HIDDEN))
    x = jnp.concatenate([cls, patch_emb], axis=1) + params["pos_emb"][None]
    T = x.shape[1]

    def ln(x, g, b):
        mu = jnp.mean(x, -1, keepdims=True)
        var = jnp.mean((x - mu) ** 2, -1, keepdims=True)
        return (x - mu) * jax.lax.rsqrt(var + LN_EPS) * g + b

    h = ln(x, params["pre_ln_g"], params["pre_ln_b"])
    hs = [h]
    scale = HEAD_DIM ** -0.5
    for lp in params["layers"]:
        r = h
        hn = ln(h, lp["ln1_g"], lp["ln1_b"])
        q = (hn @ lp["q_w"] + lp["q_b"]).reshape(B, T, HEADS, HEAD_DIM).transpose(0, 2, 1, 3)
        k = (hn @ lp["k_w"] + lp["k_b"]).reshape(B, T, HEADS, HEAD_DIM).transpose(0, 2, 1, 3)
        v = (hn @ lp["v_w"] + lp["v_b"]).reshape(B, T, HEADS, HEAD_DIM).transpose(0, 2, 1, 3)
        s = jnp.einsum("bhtd,bhsd->bhts", q * scale, k)
        p = jax.nn.softmax(s, axis=-1)
        o = jnp.einsum("bhts,bhsd->bhtd", p, v).transpose(0, 2, 1, 3).reshape(B, T, HIDDEN)
        h = r + (o @ lp["o_w"] + lp["o_b"])
        r = h
        hn = ln(h, lp["ln2_g"], lp["ln2_b"])
        hn = hn @ lp["fc1_w"] + lp["fc1_b"]
        hn = hn * jax.nn.sigmoid(1.702 * hn)
        h = r + (hn @ lp["fc2_w"] + lp["fc2_b"])
        hs.append(h)
    feats = hs[SELECT_LAYER]
    if SELECT_FEATURE == "patch":
        feats = feats[:, 1:]
    return feats


# ------------------------------------ main -------------------------------------
if __name__ == "__main__":
    key = jax.random.PRNGKey(0)
    k_img, k_par = jax.random.split(key)
    images = jax.random.normal(
        k_img, (BATCH, CHANNELS, IMAGE_SIZE, IMAGE_SIZE), dtype=jnp.float32
    )
    params = init_params(k_par)
    packed = pack_params(params)

    out = clip_vision_tower_forward(images, packed)
    out = jax.block_until_ready(out)

    assert out.shape == (BATCH, NUM_PATCHES, HIDDEN), out.shape
    ref = reference_forward(images, params)
    assert jnp.all(jnp.isfinite(out))
    # bf16 MXU operands -> looser tolerance than the all-f32 reference
    assert jnp.allclose(out, ref, atol=5e-2, rtol=5e-2), \
        float(jnp.max(jnp.abs(out - ref)))

    print("KERNEL_OK")
</pallas_src>

<mosaic_0001>
module attributes {stable_mosaic.version = 11 : i64} {
  func.func @_clip_fused_kernel(%arg0: i32, %arg1: memref<1x8x192xbf16, #tpu.memory_space<vmem>>, %arg2: memref<192x32xbf16, #tpu.memory_space<vmem>>, %arg3: memref<8x32xf32, #tpu.memory_space<vmem>>, %arg4: memref<1x32xf32, #tpu.memory_space<vmem>>, %arg5: memref<1x32xf32, #tpu.memory_space<vmem>>, %arg6: memref<2x32xf32, #tpu.memory_space<vmem>>, %arg7: memref<2x32xf32, #tpu.memory_space<vmem>>, %arg8: memref<2x32x96xbf16, #tpu.memory_space<vmem>>, %arg9: memref<2x96xf32, #tpu.memory_space<vmem>>, %arg10: memref<2x32x32xbf16, #tpu.memory_space<vmem>>, %arg11: memref<2x32xf32, #tpu.memory_space<vmem>>, %arg12: memref<2x32xf32, #tpu.memory_space<vmem>>, %arg13: memref<2x32xf32, #tpu.memory_space<vmem>>, %arg14: memref<2x32x64xbf16, #tpu.memory_space<vmem>>, %arg15: memref<2x64xf32, #tpu.memory_space<vmem>>, %arg16: memref<2x64x32xbf16, #tpu.memory_space<vmem>>, %arg17: memref<2x32xf32, #tpu.memory_space<vmem>>, %arg18: memref<1x8x32xf32, #tpu.memory_space<vmem>>) attributes {dimension_semantics = [#tpu.dimension_semantics<parallel>], iteration_bounds = array<i64: 2>, scalar_prefetch = 0 : i64, scratch_operands = 0 : i64, tpu.core_type = #tpu.core_type<tc>, window_params = [{transform_indices = @transform_0, window_bounds = array<i64: 1, 8, 192>}, {pipeline_mode = #tpu.pipeline_mode<synchronous>, transform_indices = @transform_1, window_bounds = array<i64: 192, 32>}, {pipeline_mode = #tpu.pipeline_mode<synchronous>, transform_indices = @transform_2, window_bounds = array<i64: 8, 32>}, {pipeline_mode = #tpu.pipeline_mode<synchronous>, transform_indices = @transform_3, window_bounds = array<i64: 1, 32>}, {pipeline_mode = #tpu.pipeline_mode<synchronous>, transform_indices = @transform_4, window_bounds = array<i64: 1, 32>}, {pipeline_mode = #tpu.pipeline_mode<synchronous>, transform_indices = @transform_5, window_bounds = array<i64: 2, 32>}, {pipeline_mode = #tpu.pipeline_mode<synchronous>, transform_indices = @transform_6, window_bounds = array<i64: 2, 32>}, {pipeline_mode = #tpu.pipeline_mode<synchronous>, transform_indices = @transform_7, window_bounds = array<i64: 2, 32, 96>}, {pipeline_mode = #tpu.pipeline_mode<synchronous>, transform_indices = @transform_8, window_bounds = array<i64: 2, 96>}, {pipeline_mode = #tpu.pipeline_mode<synchronous>, transform_indices = @transform_9, window_bounds = array<i64: 2, 32, 32>}, {pipeline_mode = #tpu.pipeline_mode<synchronous>, transform_indices = @transform_10, window_bounds = array<i64: 2, 32>}, {pipeline_mode = #tpu.pipeline_mode<synchronous>, transform_indices = @transform_11, window_bounds = array<i64: 2, 32>}, {pipeline_mode = #tpu.pipeline_mode<synchronous>, transform_indices = @transform_12, window_bounds = array<i64: 2, 32>}, {pipeline_mode = #tpu.pipeline_mode<synchronous>, transform_indices = @transform_13, window_bounds = array<i64: 2, 32, 64>}, {pipeline_mode = #tpu.pipeline_mode<synchronous>, transform_indices = @transform_14, window_bounds = array<i64: 2, 64>}, {pipeline_mode = #tpu.pipeline_mode<synchronous>, transform_indices = @transform_15, window_bounds = array<i64: 2, 64, 32>}, {pipeline_mode = #tpu.pipeline_mode<synchronous>, transform_indices = @transform_16, window_bounds = array<i64: 2, 32>}, {transform_indices = @transform_17, window_bounds = array<i64: 1, 8, 32>}]} {
    %c0 = arith.constant 0 : index
    %c0_0 = arith.constant 0 : index
    %c0_1 = arith.constant 0 : index
    %0 = vector.load %arg1[%c0, %c0_0, %c0_1] : memref<1x8x192xbf16, #tpu.memory_space<vmem>>, vector<1x8x192xbf16>
    %1 = vector.shape_cast %0 : vector<1x8x192xbf16> to vector<8x192xbf16>
    %c0_2 = arith.constant 0 : index
    %c0_3 = arith.constant 0 : index
    %2 = vector.load %arg2[%c0_2, %c0_3] : memref<192x32xbf16, #tpu.memory_space<vmem>>, vector<192x32xbf16>
    %cst = arith.constant dense<0.000000e+00> : vector<8x32xf32>
    %3 = tpu.matmul %1, %2, %cst {dimension_numbers = #tpu.dot_dimension_numbers<[1], [0], [0], [1], [0, 0, 1, 1], [], []>} : vector<8x192xbf16>, vector<192x32xbf16>, vector<8x32xf32> -> vector<8x32xf32>
    %c0_4 = arith.constant 0 : index
    %c0_5 = arith.constant 0 : index
    %4 = vector.load %arg3[%c0_4, %c0_5] : memref<8x32xf32, #tpu.memory_space<vmem>>, vector<8x32xf32>
    %5 = arith.addf %3, %4 : vector<8x32xf32>
    %c0_6 = arith.constant 0 : index
    %c0_7 = arith.constant 0 : index
    %6 = vector.load %arg4[%c0_6, %c0_7] : memref<1x32xf32, #tpu.memory_space<vmem>>, vector<1x32xf32>
    %c0_8 = arith.constant 0 : index
    %c0_9 = arith.constant 0 : index
    %7 = vector.load %arg5[%c0_8, %c0_9] : memref<1x32xf32, #tpu.memory_space<vmem>>, vector<1x32xf32>
    %cst_10 = arith.constant dense<0.000000e+00> : vector<8xf32>
    %8 = vector.multi_reduction <add>, %5, %cst_10 [1] : vector<8x32xf32> to vector<8xf32>
    %9 = vector.shape_cast %8 : vector<8xf32> to vector<8x1xf32>
    %cst_11 = arith.constant 3.200000e+01 : f32
    %10 = vector.broadcast %cst_11 : f32 to vector<8x1xf32>
    %11 = arith.divf %9, %10 : vector<8x1xf32>
    %12 = arith.mulf %5, %5 : vector<8x32xf32>
    %cst_12 = arith.constant dense<0.000000e+00> : vector<8xf32>
    %13 = vector.multi_reduction <add>, %12, %cst_12 [1] : vector<8x32xf32> to vector<8xf32>
    %14 = vector.shape_cast %13 : vector<8xf32> to vector<8x1xf32>
    %cst_13 = arith.constant 3.200000e+01 : f32
    %15 = vector.broadcast %cst_13 : f32 to vector<8x1xf32>
    %16 = arith.divf %14, %15 : vector<8x1xf32>
    %17 = arith.mulf %11, %11 : vector<8x1xf32>
    %18 = arith.subf %16, %17 : vector<8x1xf32>
    %19 = vector.broadcast %11 : vector<8x1xf32> to vector<8x32xf32>
    %20 = arith.subf %5, %19 : vector<8x32xf32>
    %cst_14 = arith.constant 9.99999974E-6 : f32
    %21 = vector.broadcast %cst_14 : f32 to vector<8x1xf32>
    %22 = arith.addf %18, %21 : vector<8x1xf32>
    %23 = math.rsqrt %22 : vector<8x1xf32>
    %24 = vector.broadcast %23 : vector<8x1xf32> to vector<8x32xf32>
    %25 = arith.mulf %20, %24 : vector<8x32xf32>
    %26 = vector.broadcast %6 : vector<1x32xf32> to vector<8x32xf32>
    %27 = arith.mulf %25, %26 : vector<8x32xf32>
    %28 = vector.broadcast %7 : vector<1x32xf32> to vector<8x32xf32>
    %29 = arith.addf %27, %28 : vector<8x32xf32>
    %30 = tpu.iota {dimensions = array<i32: 1>} : vector<8x8xi32>
    %c5_i32 = arith.constant 5 : i32
    %31 = vector.broadcast %c5_i32 : i32 to vector<8x8xi32>
    %32 = arith.cmpi slt, %30, %31 : vector<8x8xi32>
    %cst_15 = arith.constant 0.000000e+00 : f32
    %cst_16 = arith.constant -1.000000e+09 : f32
    %33 = vector.broadcast %cst_15 : f32 to vector<8x8xf32>
    %34 = vector.broadcast %cst_16 : f32 to vector<8x8xf32>
    %35 = arith.select %32, %33, %34 : vector<8x8xi1>, vector<8x8xf32>
    %c0_17 = arith.constant 0 : index
    %c0_18 = arith.constant 0 : index
    %36 = vector.load %arg6[%c0_17, %c0_18] : memref<2x32xf32, #tpu.memory_space<vmem>>, vector<1x32xf32>
    %c0_19 = arith.constant 0 : index
    %c0_20 = arith.constant 0 : index
    %37 = vector.load %arg7[%c0_19, %c0_20] : memref<2x32xf32, #tpu.memory_space<vmem>>, vector<1x32xf32>
    %cst_21 = arith.constant dense<0.000000e+00> : vector<8xf32>
    %38 = vector.multi_reduction <add>, %29, %cst_21 [1] : vector<8x32xf32> to vector<8xf32>
    %39 = vector.shape_cast %38 : vector<8xf32> to vector<8x1xf32>
    %cst_22 = arith.constant 3.200000e+01 : f32
    %40 = vector.broadcast %cst_22 : f32 to vector<8x1xf32>
    %41 = arith.divf %39, %40 : vector<8x1xf32>
    %42 = arith.mulf %29, %29 : vector<8x32xf32>
    %cst_23 = arith.constant dense<0.000000e+00> : vector<8xf32>
    %43 = vector.multi_reduction <add>, %42, %cst_23 [1] : vector<8x32xf32> to vector<8xf32>
    %44 = vector.shape_cast %43 : vector<8xf32> to vector<8x1xf32>
    %cst_24 = arith.constant 3.200000e+01 : f32
    %45 = vector.broadcast %cst_24 : f32 to vector<8x1xf32>
    %46 = arith.divf %44, %45 : vector<8x1xf32>
    %47 = arith.mulf %41, %41 : vector<8x1xf32>
    %48 = arith.subf %46, %47 : vector<8x1xf32>
    %49 = vector.broadcast %41 : vector<8x1xf32> to vector<8x32xf32>
    %50 = arith.subf %29, %49 : vector<8x32xf32>
    %cst_25 = arith.constant 9.99999974E-6 : f32
    %51 = vector.broadcast %cst_25 : f32 to vector<8x1xf32>
    %52 = arith.addf %48, %51 : vector<8x1xf32>
    %53 = math.rsqrt %52 : vector<8x1xf32>
    %54 = vector.broadcast %53 : vector<8x1xf32> to vector<8x32xf32>
    %55 = arith.mulf %50, %54 : vector<8x32xf32>
    %56 = vector.broadcast %36 : vector<1x32xf32> to vector<8x32xf32>
    %57 = arith.mulf %55, %56 : vector<8x32xf32>
    %58 = vector.broadcast %37 : vector<1x32xf32> to vector<8x32xf32>
    %59 = arith.addf %57, %58 : vector<8x32xf32>
    %60 = arith.truncf %59 : vector<8x32xf32> to vector<8x32xbf16>
    %c0_26 = arith.constant 0 : index
    %c0_27 = arith.constant 0 : index
    %c0_28 = arith.constant 0 : index
    %61 = vector.load %arg8[%c0_26, %c0_27, %c0_28] : memref<2x32x96xbf16, #tpu.memory_space<vmem>>, vector<1x32x96xbf16>
    %62 = vector.shape_cast %61 : vector<1x32x96xbf16> to vector<32x96xbf16>
    %cst_29 = arith.constant dense<0.000000e+00> : vector<8x96xf32>
    %63 = tpu.matmul %60, %62, %cst_29 {dimension_numbers = #tpu.dot_dimension_numbers<[1], [0], [0], [1], [0, 0, 1, 1], [], []>} : vector<8x32xbf16>, vector<32x96xbf16>, vector<8x96xf32> -> vector<8x96xf32>
    %c0_30 = arith.constant 0 : index
    %c0_31 = arith.constant 0 : index
    %64 = vector.load %arg9[%c0_30, %c0_31] : memref<2x96xf32, #tpu.memory_space<vmem>>, vector<1x96xf32>
    %65 = vector.broadcast %64 : vector<1x96xf32> to vector<8x96xf32>
    %66 = arith.addf %63, %65 : vector<8x96xf32>
    %67 = vector.extract_strided_slice %66 {offsets = [0, 0], sizes = [8, 8], strides = [1, 1]} : vector<8x96xf32> to vector<8x8xf32>
    %cst_32 = arith.constant 0.353553385 : f32
    %68 = vector.broadcast %cst_32 : f32 to vector<8x8xf32>
    %69 = arith.mulf %67, %68 : vector<8x8xf32>
    %70 = arith.truncf %69 : vector<8x8xf32> to vector<8x8xbf16>
    %71 = vector.extract_strided_slice %66 {offsets = [0, 32], sizes = [8, 8], strides = [1, 1]} : vector<8x96xf32> to vector<8x8xf32>
    %72 = arith.truncf %71 : vector<8x8xf32> to vector<8x8xbf16>
    %73 = vector.extract_strided_slice %66 {offsets = [0, 64], sizes = [8, 8], strides = [1, 1]} : vector<8x96xf32> to vector<8x8xf32>
    %74 = arith.truncf %73 : vector<8x8xf32> to vector<8x8xbf16>
    %cst_33 = arith.constant dense<0.000000e+00> : vector<8x8xf32>
    %75 = tpu.matmul %70, %72, %cst_33 {dimension_numbers = #tpu.dot_dimension_numbers<[1], [1], [0], [0], [0, 0, 1, 0], [], []>} : vector<8x8xbf16>, vector<8x8xbf16>, vector<8x8xf32> -> vector<8x8xf32>
    %76 = arith.addf %75, %35 : vector<8x8xf32>
    %cst_34 = arith.constant dense<0xFF800000> : vector<8xf32>
    %77 = vector.multi_reduction <maximumf>, %76, %cst_34 [1] : vector<8x8xf32> to vector<8xf32>
    %78 = vector.shape_cast %77 : vector<8xf32> to vector<8x1xf32>
    %79 = vector.broadcast %78 : vector<8x1xf32> to vector<8x8xf32>
    %80 = arith.subf %76, %79 : vector<8x8xf32>
    %81 = math.exp %80 : vector<8x8xf32>
    %cst_35 = arith.constant dense<0.000000e+00> : vector<8xf32>
    %82 = vector.multi_reduction <add>, %81, %cst_35 [1] : vector<8x8xf32> to vector<8xf32>
    %83 = vector.shape_cast %82 : vector<8xf32> to vector<8x1xf32>
    %84 = tpu.reciprocal %83 {approx = true} : vector<8x1xf32> -> vector<8x1xf32>
    %85 = vector.broadcast %84 : vector<8x1xf32> to vector<8x8xf32>
    %86 = arith.mulf %81, %85 : vector<8x8xf32>
    %87 = arith.truncf %86 : vector<8x8xf32> to vector<8x8xbf16>
    %cst_36 = arith.constant dense<0.000000e+00> : vector<8x8xf32>
    %88 = tpu.matmul %87, %74, %cst_36 {dimension_numbers = #tpu.dot_dimension_numbers<[1], [0], [0], [1], [0, 0, 1, 1], [], []>} : vector<8x8xbf16>, vector<8x8xbf16>, vector<8x8xf32> -> vector<8x8xf32>
    %89 = vector.extract_strided_slice %66 {offsets = [0, 8], sizes = [8, 8], strides = [1, 1]} : vector<8x96xf32> to vector<8x8xf32>
    %cst_37 = arith.constant 0.353553385 : f32
    %90 = vector.broadcast %cst_37 : f32 to vector<8x8xf32>
    %91 = arith.mulf %89, %90 : vector<8x8xf32>
    %92 = arith.truncf %91 : vector<8x8xf32> to vector<8x8xbf16>
    %93 = vector.extract_strided_slice %66 {offsets = [0, 40], sizes = [8, 8], strides = [1, 1]} : vector<8x96xf32> to vector<8x8xf32>
    %94 = arith.truncf %93 : vector<8x8xf32> to vector<8x8xbf16>
    %95 = vector.extract_strided_slice %66 {offsets = [0, 72], sizes = [8, 8], strides = [1, 1]} : vector<8x96xf32> to vector<8x8xf32>
    %96 = arith.truncf %95 : vector<8x8xf32> to vector<8x8xbf16>
    %cst_38 = arith.constant dense<0.000000e+00> : vector<8x8xf32>
    %97 = tpu.matmul %92, %94, %cst_38 {dimension_numbers = #tpu.dot_dimension_numbers<[1], [1], [0], [0], [0, 0, 1, 0], [], []>} : vector<8x8xbf16>, vector<8x8xbf16>, vector<8x8xf32> -> vector<8x8xf32>
    %98 = arith.addf %97, %35 : vector<8x8xf32>
    %cst_39 = arith.constant dense<0xFF800000> : vector<8xf32>
    %99 = vector.multi_reduction <maximumf>, %98, %cst_39 [1] : vector<8x8xf32> to vector<8xf32>
    %100 = vector.shape_cast %99 : vector<8xf32> to vector<8x1xf32>
    %101 = vector.broadcast %100 : vector<8x1xf32> to vector<8x8xf32>
    %102 = arith.subf %98, %101 : vector<8x8xf32>
    %103 = math.exp %102 : vector<8x8xf32>
    %cst_40 = arith.constant dense<0.000000e+00> : vector<8xf32>
    %104 = vector.multi_reduction <add>, %103, %cst_40 [1] : vector<8x8xf32> to vector<8xf32>
    %105 = vector.shape_cast %104 : vector<8xf32> to vector<8x1xf32>
    %106 = tpu.reciprocal %105 {approx = true} : vector<8x1xf32> -> vector<8x1xf32>
    %107 = vector.broadcast %106 : vector<8x1xf32> to vector<8x8xf32>
    %108 = arith.mulf %103, %107 : vector<8x8xf32>
    %109 = arith.truncf %108 : vector<8x8xf32> to vector<8x8xbf16>
    %cst_41 = arith.constant dense<0.000000e+00> : vector<8x8xf32>
    %110 = tpu.matmul %109, %96, %cst_41 {dimension_numbers = #tpu.dot_dimension_numbers<[1], [0], [0], [1], [0, 0, 1, 1], [], []>} : vector<8x8xbf16>, vector<8x8xbf16>, vector<8x8xf32> -> vector<8x8xf32>
    %111 = vector.extract_strided_slice %66 {offsets = [0, 16], sizes = [8, 8], strides = [1, 1]} : vector<8x96xf32> to vector<8x8xf32>
    %cst_42 = arith.constant 0.353553385 : f32
    %112 = vector.broadcast %cst_42 : f32 to vector<8x8xf32>
    %113 = arith.mulf %111, %112 : vector<8x8xf32>
    %114 = arith.truncf %113 : vector<8x8xf32> to vector<8x8xbf16>
    %115 = vector.extract_strided_slice %66 {offsets = [0, 48], sizes = [8, 8], strides = [1, 1]} : vector<8x96xf32> to vector<8x8xf32>
    %116 = arith.truncf %115 : vector<8x8xf32> to vector<8x8xbf16>
    %117 = vector.extract_strided_slice %66 {offsets = [0, 80], sizes = [8, 8], strides = [1, 1]} : vector<8x96xf32> to vector<8x8xf32>
    %118 = arith.truncf %117 : vector<8x8xf32> to vector<8x8xbf16>
    %cst_43 = arith.constant dense<0.000000e+00> : vector<8x8xf32>
    %119 = tpu.matmul %114, %116, %cst_43 {dimension_numbers = #tpu.dot_dimension_numbers<[1], [1], [0], [0], [0, 0, 1, 0], [], []>} : vector<8x8xbf16>, vector<8x8xbf16>, vector<8x8xf32> -> vector<8x8xf32>
    %120 = arith.addf %119, %35 : vector<8x8xf32>
    %cst_44 = arith.constant dense<0xFF800000> : vector<8xf32>
    %121 = vector.multi_reduction <maximumf>, %120, %cst_44 [1] : vector<8x8xf32> to vector<8xf32>
    %122 = vector.shape_cast %121 : vector<8xf32> to vector<8x1xf32>
    %123 = vector.broadcast %122 : vector<8x1xf32> to vector<8x8xf32>
    %124 = arith.subf %120, %123 : vector<8x8xf32>
    %125 = math.exp %124 : vector<8x8xf32>
    %cst_45 = arith.constant dense<0.000000e+00> : vector<8xf32>
    %126 = vector.multi_reduction <add>, %125, %cst_45 [1] : vector<8x8xf32> to vector<8xf32>
    %127 = vector.shape_cast %126 : vector<8xf32> to vector<8x1xf32>
    %128 = tpu.reciprocal %127 {approx = true} : vector<8x1xf32> -> vector<8x1xf32>
    %129 = vector.broadcast %128 : vector<8x1xf32> to vector<8x8xf32>
    %130 = arith.mulf %125, %129 : vector<8x8xf32>
    %131 = arith.truncf %130 : vector<8x8xf32> to vector<8x8xbf16>
    %cst_46 = arith.constant dense<0.000000e+00> : vector<8x8xf32>
    %132 = tpu.matmul %131, %118, %cst_46 {dimension_numbers = #tpu.dot_dimension_numbers<[1], [0], [0], [1], [0, 0, 1, 1], [], []>} : vector<8x8xbf16>, vector<8x8xbf16>, vector<8x8xf32> -> vector<8x8xf32>
    %133 = vector.extract_strided_slice %66 {offsets = [0, 24], sizes = [8, 8], strides = [1, 1]} : vector<8x96xf32> to vector<8x8xf32>
    %cst_47 = arith.constant 0.353553385 : f32
    %134 = vector.broadcast %cst_47 : f32 to vector<8x8xf32>
    %135 = arith.mulf %133, %134 : vector<8x8xf32>
    %136 = arith.truncf %135 : vector<8x8xf32> to vector<8x8xbf16>
    %137 = vector.extract_strided_slice %66 {offsets = [0, 56], sizes = [8, 8], strides = [1, 1]} : vector<8x96xf32> to vector<8x8xf32>
    %138 = arith.truncf %137 : vector<8x8xf32> to vector<8x8xbf16>
    %139 = vector.extract_strided_slice %66 {offsets = [0, 88], sizes = [8, 8], strides = [1, 1]} : vector<8x96xf32> to vector<8x8xf32>
    %140 = arith.truncf %139 : vector<8x8xf32> to vector<8x8xbf16>
    %cst_48 = arith.constant dense<0.000000e+00> : vector<8x8xf32>
    %141 = tpu.matmul %136, %138, %cst_48 {dimension_numbers = #tpu.dot_dimension_numbers<[1], [1], [0], [0], [0, 0, 1, 0], [], []>} : vector<8x8xbf16>, vector<8x8xbf16>, vector<8x8xf32> -> vector<8x8xf32>
    %142 = arith.addf %141, %35 : vector<8x8xf32>
    %cst_49 = arith.constant dense<0xFF800000> : vector<8xf32>
    %143 = vector.multi_reduction <maximumf>, %142, %cst_49 [1] : vector<8x8xf32> to vector<8xf32>
    %144 = vector.shape_cast %143 : vector<8xf32> to vector<8x1xf32>
    %145 = vector.broadcast %144 : vector<8x1xf32> to vector<8x8xf32>
    %146 = arith.subf %142, %145 : vector<8x8xf32>
    %147 = math.exp %146 : vector<8x8xf32>
    %cst_50 = arith.constant dense<0.000000e+00> : vector<8xf32>
    %148 = vector.multi_reduction <add>, %147, %cst_50 [1] : vector<8x8xf32> to vector<8xf32>
    %149 = vector.shape_cast %148 : vector<8xf32> to vector<8x1xf32>
    %150 = tpu.reciprocal %149 {approx = true} : vector<8x1xf32> -> vector<8x1xf32>
    %151 = vector.broadcast %150 : vector<8x1xf32> to vector<8x8xf32>
    %152 = arith.mulf %147, %151 : vector<8x8xf32>
    %153 = arith.truncf %152 : vector<8x8xf32> to vector<8x8xbf16>
    %cst_51 = arith.constant dense<0.000000e+00> : vector<8x8xf32>
    %154 = tpu.matmul %153, %140, %cst_51 {dimension_numbers = #tpu.dot_dimension_numbers<[1], [0], [0], [1], [0, 0, 1, 1], [], []>} : vector<8x8xbf16>, vector<8x8xbf16>, vector<8x8xf32> -> vector<8x8xf32>
    %155 = tpu.concatenate %88, %110, %132, %154 in 1 : vector<8x8xf32>, vector<8x8xf32>, vector<8x8xf32>, vector<8x8xf32> -> vector<8x32xf32>
    %156 = arith.truncf %155 : vector<8x32xf32> to vector<8x32xbf16>
    %c0_52 = arith.constant 0 : index
    %c0_53 = arith.constant 0 : index
    %c0_54 = arith.constant 0 : index
    %157 = vector.load %arg10[%c0_52, %c0_53, %c0_54] : memref<2x32x32xbf16, #tpu.memory_space<vmem>>, vector<1x32x32xbf16>
    %158 = vector.shape_cast %157 : vector<1x32x32xbf16> to vector<32x32xbf16>
    %cst_55 = arith.constant dense<0.000000e+00> : vector<8x32xf32>
    %159 = tpu.matmul %156, %158, %cst_55 {dimension_numbers = #tpu.dot_dimension_numbers<[1], [0], [0], [1], [0, 0, 1, 1], [], []>} : vector<8x32xbf16>, vector<32x32xbf16>, vector<8x32xf32> -> vector<8x32xf32>
    %c0_56 = arith.constant 0 : index
    %c0_57 = arith.constant 0 : index
    %160 = vector.load %arg11[%c0_56, %c0_57] : memref<2x32xf32, #tpu.memory_space<vmem>>, vector<1x32xf32>
    %161 = vector.broadcast %160 : vector<1x32xf32> to vector<8x32xf32>
    %162 = arith.addf %159, %161 : vector<8x32xf32>
    %163 = arith.addf %162, %29 : vector<8x32xf32>
    %c0_58 = arith.constant 0 : index
    %c0_59 = arith.constant 0 : index
    %164 = vector.load %arg12[%c0_58, %c0_59] : memref<2x32xf32, #tpu.memory_space<vmem>>, vector<1x32xf32>
    %c0_60 = arith.constant 0 : index
    %c0_61 = arith.constant 0 : index
    %165 = vector.load %arg13[%c0_60, %c0_61] : memref<2x32xf32, #tpu.memory_space<vmem>>, vector<1x32xf32>
    %cst_62 = arith.constant dense<0.000000e+00> : vector<8xf32>
    %166 = vector.multi_reduction <add>, %163, %cst_62 [1] : vector<8x32xf32> to vector<8xf32>
    %167 = vector.shape_cast %166 : vector<8xf32> to vector<8x1xf32>
    %cst_63 = arith.constant 3.200000e+01 : f32
    %168 = vector.broadcast %cst_63 : f32 to vector<8x1xf32>
    %169 = arith.divf %167, %168 : vector<8x1xf32>
    %170 = arith.mulf %163, %163 : vector<8x32xf32>
    %cst_64 = arith.constant dense<0.000000e+00> : vector<8xf32>
    %171 = vector.multi_reduction <add>, %170, %cst_64 [1] : vector<8x32xf32> to vector<8xf32>
    %172 = vector.shape_cast %171 : vector<8xf32> to vector<8x1xf32>
    %cst_65 = arith.constant 3.200000e+01 : f32
    %173 = vector.broadcast %cst_65 : f32 to vector<8x1xf32>
    %174 = arith.divf %172, %173 : vector<8x1xf32>
    %175 = arith.mulf %169, %169 : vector<8x1xf32>
    %176 = arith.subf %174, %175 : vector<8x1xf32>
    %177 = vector.broadcast %169 : vector<8x1xf32> to vector<8x32xf32>
    %178 = arith.subf %163, %177 : vector<8x32xf32>
    %cst_66 = arith.constant 9.99999974E-6 : f32
    %179 = vector.broadcast %cst_66 : f32 to vector<8x1xf32>
    %180 = arith.addf %176, %179 : vector<8x1xf32>
    %181 = math.rsqrt %180 : vector<8x1xf32>
    %182 = vector.broadcast %181 : vector<8x1xf32> to vector<8x32xf32>
    %183 = arith.mulf %178, %182 : vector<8x32xf32>
    %184 = vector.broadcast %164 : vector<1x32xf32> to vector<8x32xf32>
    %185 = arith.mulf %183, %184 : vector<8x32xf32>
    %186 = vector.broadcast %165 : vector<1x32xf32> to vector<8x32xf32>
    %187 = arith.addf %185, %186 : vector<8x32xf32>
    %188 = arith.truncf %187 : vector<8x32xf32> to vector<8x32xbf16>
    %c0_67 = arith.constant 0 : index
    %c0_68 = arith.constant 0 : index
    %c0_69 = arith.constant 0 : index
    %189 = vector.load %arg14[%c0_67, %c0_68, %c0_69] : memref<2x32x64xbf16, #tpu.memory_space<vmem>>, vector<1x32x64xbf16>
    %190 = vector.shape_cast %189 : vector<1x32x64xbf16> to vector<32x64xbf16>
    %cst_70 = arith.constant dense<0.000000e+00> : vector<8x64xf32>
    %191 = tpu.matmul %188, %190, %cst_70 {dimension_numbers = #tpu.dot_dimension_numbers<[1], [0], [0], [1], [0, 0, 1, 1], [], []>} : vector<8x32xbf16>, vector<32x64xbf16>, vector<8x64xf32> -> vector<8x64xf32>
    %c0_71 = arith.constant 0 : index
    %c0_72 = arith.constant 0 : index
    %192 = vector.load %arg15[%c0_71, %c0_72] : memref<2x64xf32, #tpu.memory_space<vmem>>, vector<1x64xf32>
    %193 = vector.broadcast %192 : vector<1x64xf32> to vector<8x64xf32>
    %194 = arith.addf %191, %193 : vector<8x64xf32>
    %cst_73 = arith.constant 1.702000e+00 : f32
    %195 = vector.broadcast %cst_73 : f32 to vector<8x64xf32>
    %196 = arith.mulf %195, %194 : vector<8x64xf32>
    %197 = arith.negf %196 : vector<8x64xf32>
    %198 = math.exp %197 : vector<8x64xf32>
    %cst_74 = arith.constant 1.000000e+00 : f32
    %199 = vector.broadcast %cst_74 : f32 to vector<8x64xf32>
    %200 = arith.addf %199, %198 : vector<8x64xf32>
    %201 = arith.divf %199, %200 : vector<8x64xf32>
    %202 = arith.mulf %194, %201 : vector<8x64xf32>
    %203 = arith.truncf %202 : vector<8x64xf32> to vector<8x64xbf16>
    %c0_75 = arith.constant 0 : index
    %c0_76 = arith.constant 0 : index
    %c0_77 = arith.constant 0 : index
    %204 = vector.load %arg16[%c0_75, %c0_76, %c0_77] : memref<2x64x32xbf16, #tpu.memory_space<vmem>>, vector<1x64x32xbf16>
    %205 = vector.shape_cast %204 : vector<1x64x32xbf16> to vector<64x32xbf16>
    %cst_78 = arith.constant dense<0.000000e+00> : vector<8x32xf32>
    %206 = tpu.matmul %203, %205, %cst_78 {dimension_numbers = #tpu.dot_dimension_numbers<[1], [0], [0], [1], [0, 0, 1, 1], [], []>} : vector<8x64xbf16>, vector<64x32xbf16>, vector<8x32xf32> -> vector<8x32xf32>
    %c0_79 = arith.constant 0 : index
    %c0_80 = arith.constant 0 : index
    %207 = vector.load %arg17[%c0_79, %c0_80] : memref<2x32xf32, #tpu.memory_space<vmem>>, vector<1x32xf32>
    %208 = vector.broadcast %207 : vector<1x32xf32> to vector<8x32xf32>
    %209 = arith.addf %206, %208 : vector<8x32xf32>
    %210 = arith.addf %209, %163 : vector<8x32xf32>
    %c1 = arith.constant 1 : index
    %c0_81 = arith.constant 0 : index
    %211 = vector.load %arg6[%c1, %c0_81] : memref<2x32xf32, #tpu.memory_space<vmem>>, vector<1x32xf32>
    %c1_82 = arith.constant 1 : index
    %c0_83 = arith.constant 0 : index
    %212 = vector.load %arg7[%c1_82, %c0_83] : memref<2x32xf32, #tpu.memory_space<vmem>>, vector<1x32xf32>
    %cst_84 = arith.constant dense<0.000000e+00> : vector<8xf32>
    %213 = vector.multi_reduction <add>, %210, %cst_84 [1] : vector<8x32xf32> to vector<8xf32>
    %214 = vector.shape_cast %213 : vector<8xf32> to vector<8x1xf32>
    %cst_85 = arith.constant 3.200000e+01 : f32
    %215 = vector.broadcast %cst_85 : f32 to vector<8x1xf32>
    %216 = arith.divf %214, %215 : vector<8x1xf32>
    %217 = arith.mulf %210, %210 : vector<8x32xf32>
    %cst_86 = arith.constant dense<0.000000e+00> : vector<8xf32>
    %218 = vector.multi_reduction <add>, %217, %cst_86 [1] : vector<8x32xf32> to vector<8xf32>
    %219 = vector.shape_cast %218 : vector<8xf32> to vector<8x1xf32>
    %cst_87 = arith.constant 3.200000e+01 : f32
    %220 = vector.broadcast %cst_87 : f32 to vector<8x1xf32>
    %221 = arith.divf %219, %220 : vector<8x1xf32>
    %222 = arith.mulf %216, %216 : vector<8x1xf32>
    %223 = arith.subf %221, %222 : vector<8x1xf32>
    %224 = vector.broadcast %216 : vector<8x1xf32> to vector<8x32xf32>
    %225 = arith.subf %210, %224 : vector<8x32xf32>
    %cst_88 = arith.constant 9.99999974E-6 : f32
    %226 = vector.broadcast %cst_88 : f32 to vector<8x1xf32>
    %227 = arith.addf %223, %226 : vector<8x1xf32>
    %228 = math.rsqrt %227 : vector<8x1xf32>
    %229 = vector.broadcast %228 : vector<8x1xf32> to vector<8x32xf32>
    %230 = arith.mulf %225, %229 : vector<8x32xf32>
    %231 = vector.broadcast %211 : vector<1x32xf32> to vector<8x32xf32>
    %232 = arith.mulf %230, %231 : vector<8x32xf32>
    %233 = vector.broadcast %212 : vector<1x32xf32> to vector<8x32xf32>
    %234 = arith.addf %232, %233 : vector<8x32xf32>
    %235 = arith.truncf %234 : vector<8x32xf32> to vector<8x32xbf16>
    %c1_89 = arith.constant 1 : index
    %c0_90 = arith.constant 0 : index
    %c0_91 = arith.constant 0 : index
    %236 = vector.load %arg8[%c1_89, %c0_90, %c0_91] : memref<2x32x96xbf16, #tpu.memory_space<vmem>>, vector<1x32x96xbf16>
    %237 = vector.shape_cast %236 : vector<1x32x96xbf16> to vector<32x96xbf16>
    %cst_92 = arith.constant dense<0.000000e+00> : vector<8x96xf32>
    %238 = tpu.matmul %235, %237, %cst_92 {dimension_numbers = #tpu.dot_dimension_numbers<[1], [0], [0], [1], [0, 0, 1, 1], [], []>} : vector<8x32xbf16>, vector<32x96xbf16>, vector<8x96xf32> -> vector<8x96xf32>
    %c1_93 = arith.constant 1 : index
    %c0_94 = arith.constant 0 : index
    %239 = vector.load %arg9[%c1_93, %c0_94] : memref<2x96xf32, #tpu.memory_space<vmem>>, vector<1x96xf32>
    %240 = vector.broadcast %239 : vector<1x96xf32> to vector<8x96xf32>
    %241 = arith.addf %238, %240 : vector<8x96xf32>
    %242 = vector.extract_strided_slice %241 {offsets = [0, 0], sizes = [8, 8], strides = [1, 1]} : vector<8x96xf32> to vector<8x8xf32>
    %cst_95 = arith.constant 0.353553385 : f32
    %243 = vector.broadcast %cst_95 : f32 to vector<8x8xf32>
    %244 = arith.mulf %242, %243 : vector<8x8xf32>
    %245 = arith.truncf %244 : vector<8x8xf32> to vector<8x8xbf16>
    %246 = vector.extract_strided_slice %241 {offsets = [0, 32], sizes = [8, 8], strides = [1, 1]} : vector<8x96xf32> to vector<8x8xf32>
    %247 = arith.truncf %246 : vector<8x8xf32> to vector<8x8xbf16>
    %248 = vector.extract_strided_slice %241 {offsets = [0, 64], sizes = [8, 8], strides = [1, 1]} : vector<8x96xf32> to vector<8x8xf32>
    %249 = arith.truncf %248 : vector<8x8xf32> to vector<8x8xbf16>
    %cst_96 = arith.constant dense<0.000000e+00> : vector<8x8xf32>
    %250 = tpu.matmul %245, %247, %cst_96 {dimension_numbers = #tpu.dot_dimension_numbers<[1], [1], [0], [0], [0, 0, 1, 0], [], []>} : vector<8x8xbf16>, vector<8x8xbf16>, vector<8x8xf32> -> vector<8x8xf32>
    %251 = arith.addf %250, %35 : vector<8x8xf32>
    %cst_97 = arith.constant dense<0xFF800000> : vector<8xf32>
    %252 = vector.multi_reduction <maximumf>, %251, %cst_97 [1] : vector<8x8xf32> to vector<8xf32>
    %253 = vector.shape_cast %252 : vector<8xf32> to vector<8x1xf32>
    %254 = vector.broadcast %253 : vector<8x1xf32> to vector<8x8xf32>
    %255 = arith.subf %251, %254 : vector<8x8xf32>
    %256 = math.exp %255 : vector<8x8xf32>
    %cst_98 = arith.constant dense<0.000000e+00> : vector<8xf32>
    %257 = vector.multi_reduction <add>, %256, %cst_98 [1] : vector<8x8xf32> to vector<8xf32>
    %258 = vector.shape_cast %257 : vector<8xf32> to vector<8x1xf32>
    %259 = tpu.reciprocal %258 {approx = true} : vector<8x1xf32> -> vector<8x1xf32>
    %260 = vector.broadcast %259 : vector<8x1xf32> to vector<8x8xf32>
    %261 = arith.mulf %256, %260 : vector<8x8xf32>
    %262 = arith.truncf %261 : vector<8x8xf32> to vector<8x8xbf16>
    %cst_99 = arith.constant dense<0.000000e+00> : vector<8x8xf32>
    %263 = tpu.matmul %262, %249, %cst_99 {dimension_numbers = #tpu.dot_dimension_numbers<[1], [0], [0], [1], [0, 0, 1, 1], [], []>} : vector<8x8xbf16>, vector<8x8xbf16>, vector<8x8xf32> -> vector<8x8xf32>
    %264 = vector.extract_strided_slice %241 {offsets = [0, 8], sizes = [8, 8], strides = [1, 1]} : vector<8x96xf32> to vector<8x8xf32>
    %cst_100 = arith.constant 0.353553385 : f32
    %265 = vector.broadcast %cst_100 : f32 to vector<8x8xf32>
    %266 = arith.mulf %264, %265 : vector<8x8xf32>
    %267 = arith.truncf %266 : vector<8x8xf32> to vector<8x8xbf16>
    %268 = vector.extract_strided_slice %241 {offsets = [0, 40], sizes = [8, 8], strides = [1, 1]} : vector<8x96xf32> to vector<8x8xf32>
    %269 = arith.truncf %268 : vector<8x8xf32> to vector<8x8xbf16>
    %270 = vector.extract_strided_slice %241 {offsets = [0, 72], sizes = [8, 8], strides = [1, 1]} : vector<8x96xf32> to vector<8x8xf32>
    %271 = arith.truncf %270 : vector<8x8xf32> to vector<8x8xbf16>
    %cst_101 = arith.constant dense<0.000000e+00> : vector<8x8xf32>
    %272 = tpu.matmul %267, %269, %cst_101 {dimension_numbers = #tpu.dot_dimension_numbers<[1], [1], [0], [0], [0, 0, 1, 0], [], []>} : vector<8x8xbf16>, vector<8x8xbf16>, vector<8x8xf32> -> vector<8x8xf32>
    %273 = arith.addf %272, %35 : vector<8x8xf32>
    %cst_102 = arith.constant dense<0xFF800000> : vector<8xf32>
    %274 = vector.multi_reduction <maximumf>, %273, %cst_102 [1] : vector<8x8xf32> to vector<8xf32>
    %275 = vector.shape_cast %274 : vector<8xf32> to vector<8x1xf32>
    %276 = vector.broadcast %275 : vector<8x1xf32> to vector<8x8xf32>
    %277 = arith.subf %273, %276 : vector<8x8xf32>
    %278 = math.exp %277 : vector<8x8xf32>
    %cst_103 = arith.constant dense<0.000000e+00> : vector<8xf32>
    %279 = vector.multi_reduction <add>, %278, %cst_103 [1] : vector<8x8xf32> to vector<8xf32>
    %280 = vector.shape_cast %279 : vector<8xf32> to vector<8x1xf32>
    %281 = tpu.reciprocal %280 {approx = true} : vector<8x1xf32> -> vector<8x1xf32>
    %282 = vector.broadcast %281 : vector<8x1xf32> to vector<8x8xf32>
    %283 = arith.mulf %278, %282 : vector<8x8xf32>
    %284 = arith.truncf %283 : vector<8x8xf32> to vector<8x8xbf16>
    %cst_104 = arith.constant dense<0.000000e+00> : vector<8x8xf32>
    %285 = tpu.matmul %284, %271, %cst_104 {dimension_numbers = #tpu.dot_dimension_numbers<[1], [0], [0], [1], [0, 0, 1, 1], [], []>} : vector<8x8xbf16>, vector<8x8xbf16>, vector<8x8xf32> -> vector<8x8xf32>
    %286 = vector.extract_strided_slice %241 {offsets = [0, 16], sizes = [8, 8], strides = [1, 1]} : vector<8x96xf32> to vector<8x8xf32>
    %cst_105 = arith.constant 0.353553385 : f32
    %287 = vector.broadcast %cst_105 : f32 to vector<8x8xf32>
    %288 = arith.mulf %286, %287 : vector<8x8xf32>
    %289 = arith.truncf %288 : vector<8x8xf32> to vector<8x8xbf16>
    %290 = vector.extract_strided_slice %241 {offsets = [0, 48], sizes = [8, 8], strides = [1, 1]} : vector<8x96xf32> to vector<8x8xf32>
    %291 = arith.truncf %290 : vector<8x8xf32> to vector<8x8xbf16>
    %292 = vector.extract_strided_slice %241 {offsets = [0, 80], sizes = [8, 8], strides = [1, 1]} : vector<8x96xf32> to vector<8x8xf32>
    %293 = arith.truncf %292 : vector<8x8xf32> to vector<8x8xbf16>
    %cst_106 = arith.constant dense<0.000000e+00> : vector<8x8xf32>
    %294 = tpu.matmul %289, %291, %cst_106 {dimension_numbers = #tpu.dot_dimension_numbers<[1], [1], [0], [0], [0, 0, 1, 0], [], []>} : vector<8x8xbf16>, vector<8x8xbf16>, vector<8x8xf32> -> vector<8x8xf32>
    %295 = arith.addf %294, %35 : vector<8x8xf32>
    %cst_107 = arith.constant dense<0xFF800000> : vector<8xf32>
    %296 = vector.multi_reduction <maximumf>, %295, %cst_107 [1] : vector<8x8xf32> to vector<8xf32>
    %297 = vector.shape_cast %296 : vector<8xf32> to vector<8x1xf32>
    %298 = vector.broadcast %297 : vector<8x1xf32> to vector<8x8xf32>
    %299 = arith.subf %295, %298 : vector<8x8xf32>
    %300 = math.exp %299 : vector<8x8xf32>
    %cst_108 = arith.constant dense<0.000000e+00> : vector<8xf32>
    %301 = vector.multi_reduction <add>, %300, %cst_108 [1] : vector<8x8xf32> to vector<8xf32>
    %302 = vector.shape_cast %301 : vector<8xf32> to vector<8x1xf32>
    %303 = tpu.reciprocal %302 {approx = true} : vector<8x1xf32> -> vector<8x1xf32>
    %304 = vector.broadcast %303 : vector<8x1xf32> to vector<8x8xf32>
    %305 = arith.mulf %300, %304 : vector<8x8xf32>
    %306 = arith.truncf %305 : vector<8x8xf32> to vector<8x8xbf16>
    %cst_109 = arith.constant dense<0.000000e+00> : vector<8x8xf32>
    %307 = tpu.matmul %306, %293, %cst_109 {dimension_numbers = #tpu.dot_dimension_numbers<[1], [0], [0], [1], [0, 0, 1, 1], [], []>} : vector<8x8xbf16>, vector<8x8xbf16>, vector<8x8xf32> -> vector<8x8xf32>
    %308 = vector.extract_strided_slice %241 {offsets = [0, 24], sizes = [8, 8], strides = [1, 1]} : vector<8x96xf32> to vector<8x8xf32>
    %cst_110 = arith.constant 0.353553385 : f32
    %309 = vector.broadcast %cst_110 : f32 to vector<8x8xf32>
    %310 = arith.mulf %308, %309 : vector<8x8xf32>
    %311 = arith.truncf %310 : vector<8x8xf32> to vector<8x8xbf16>
    %312 = vector.extract_strided_slice %241 {offsets = [0, 56], sizes = [8, 8], strides = [1, 1]} : vector<8x96xf32> to vector<8x8xf32>
    %313 = arith.truncf %312 : vector<8x8xf32> to vector<8x8xbf16>
    %314 = vector.extract_strided_slice %241 {offsets = [0, 88], sizes = [8, 8], strides = [1, 1]} : vector<8x96xf32> to vector<8x8xf32>
    %315 = arith.truncf %314 : vector<8x8xf32> to vector<8x8xbf16>
    %cst_111 = arith.constant dense<0.000000e+00> : vector<8x8xf32>
    %316 = tpu.matmul %311, %313, %cst_111 {dimension_numbers = #tpu.dot_dimension_numbers<[1], [1], [0], [0], [0, 0, 1, 0], [], []>} : vector<8x8xbf16>, vector<8x8xbf16>, vector<8x8xf32> -> vector<8x8xf32>
    %317 = arith.addf %316, %35 : vector<8x8xf32>
    %cst_112 = arith.constant dense<0xFF800000> : vector<8xf32>
    %318 = vector.multi_reduction <maximumf>, %317, %cst_112 [1] : vector<8x8xf32> to vector<8xf32>
    %319 = vector.shape_cast %318 : vector<8xf32> to vector<8x1xf32>
    %320 = vector.broadcast %319 : vector<8x1xf32> to vector<8x8xf32>
    %321 = arith.subf %317, %320 : vector<8x8xf32>
    %322 = math.exp %321 : vector<8x8xf32>
    %cst_113 = arith.constant dense<0.000000e+00> : vector<8xf32>
    %323 = vector.multi_reduction <add>, %322, %cst_113 [1] : vector<8x8xf32> to vector<8xf32>
    %324 = vector.shape_cast %323 : vector<8xf32> to vector<8x1xf32>
    %325 = tpu.reciprocal %324 {approx = true} : vector<8x1xf32> -> vector<8x1xf32>
    %326 = vector.broadcast %325 : vector<8x1xf32> to vector<8x8xf32>
    %327 = arith.mulf %322, %326 : vector<8x8xf32>
    %328 = arith.truncf %327 : vector<8x8xf32> to vector<8x8xbf16>
    %cst_114 = arith.constant dense<0.000000e+00> : vector<8x8xf32>
    %329 = tpu.matmul %328, %315, %cst_114 {dimension_numbers = #tpu.dot_dimension_numbers<[1], [0], [0], [1], [0, 0, 1, 1], [], []>} : vector<8x8xbf16>, vector<8x8xbf16>, vector<8x8xf32> -> vector<8x8xf32>
    %330 = tpu.concatenate %263, %285, %307, %329 in 1 : vector<8x8xf32>, vector<8x8xf32>, vector<8x8xf32>, vector<8x8xf32> -> vector<8x32xf32>
    %331 = arith.truncf %330 : vector<8x32xf32> to vector<8x32xbf16>
    %c1_115 = arith.constant 1 : index
    %c0_116 = arith.constant 0 : index
    %c0_117 = arith.constant 0 : index
    %332 = vector.load %arg10[%c1_115, %c0_116, %c0_117] : memref<2x32x32xbf16, #tpu.memory_space<vmem>>, vector<1x32x32xbf16>
    %333 = vector.shape_cast %332 : vector<1x32x32xbf16> to vector<32x32xbf16>
    %cst_118 = arith.constant dense<0.000000e+00> : vector<8x32xf32>
    %334 = tpu.matmul %331, %333, %cst_118 {dimension_numbers = #tpu.dot_dimension_numbers<[1], [0], [0], [1], [0, 0, 1, 1], [], []>} : vector<8x32xbf16>, vector<32x32xbf16>, vector<8x32xf32> -> vector<8x32xf32>
    %c1_119 = arith.constant 1 : index
    %c0_120 = arith.constant 0 : index
    %335 = vector.load %arg11[%c1_119, %c0_120] : memref<2x32xf32, #tpu.memory_space<vmem>>, vector<1x32xf32>
    %336 = vector.broadcast %335 : vector<1x32xf32> to vector<8x32xf32>
    %337 = arith.addf %334, %336 : vector<8x32xf32>
    %338 = arith.addf %337, %210 : vector<8x32xf32>
    %c1_121 = arith.constant 1 : index
    %c0_122 = arith.constant 0 : index
    %339 = vector.load %arg12[%c1_121, %c0_122] : memref<2x32xf32, #tpu.memory_space<vmem>>, vector<1x32xf32>
    %c1_123 = arith.constant 1 : index
    %c0_124 = arith.constant 0 : index
    %340 = vector.load %arg13[%c1_123, %c0_124] : memref<2x32xf32, #tpu.memory_space<vmem>>, vector<1x32xf32>
    %cst_125 = arith.constant dense<0.000000e+00> : vector<8xf32>
    %341 = vector.multi_reduction <add>, %338, %cst_125 [1] : vector<8x32xf32> to vector<8xf32>
    %342 = vector.shape_cast %341 : vector<8xf32> to vector<8x1xf32>
    %cst_126 = arith.constant 3.200000e+01 : f32
    %343 = vector.broadcast %cst_126 : f32 to vector<8x1xf32>
    %344 = arith.divf %342, %343 : vector<8x1xf32>
    %345 = arith.mulf %338, %338 : vector<8x32xf32>
    %cst_127 = arith.constant dense<0.000000e+00> : vector<8xf32>
    %346 = vector.multi_reduction <add>, %345, %cst_127 [1] : vector<8x32xf32> to vector<8xf32>
    %347 = vector.shape_cast %346 : vector<8xf32> to vector<8x1xf32>
    %cst_128 = arith.constant 3.200000e+01 : f32
    %348 = vector.broadcast %cst_128 : f32 to vector<8x1xf32>
    %349 = arith.divf %347, %348 : vector<8x1xf32>
    %350 = arith.mulf %344, %344 : vector<8x1xf32>
    %351 = arith.subf %349, %350 : vector<8x1xf32>
    %352 = vector.broadcast %344 : vector<8x1xf32> to vector<8x32xf32>
    %353 = arith.subf %338, %352 : vector<8x32xf32>
    %cst_129 = arith.constant 9.99999974E-6 : f32
    %354 = vector.broadcast %cst_129 : f32 to vector<8x1xf32>
    %355 = arith.addf %351, %354 : vector<8x1xf32>
    %356 = math.rsqrt %355 : vector<8x1xf32>
    %357 = vector.broadcast %356 : vector<8x1xf32> to vector<8x32xf32>
    %358 = arith.mulf %353, %357 : vector<8x32xf32>
    %359 = vector.broadcast %339 : vector<1x32xf32> to vector<8x32xf32>
    %360 = arith.mulf %358, %359 : vector<8x32xf32>
    %361 = vector.broadcast %340 : vector<1x32xf32> to vector<8x32xf32>
    %362 = arith.addf %360, %361 : vector<8x32xf32>
    %363 = arith.truncf %362 : vector<8x32xf32> to vector<8x32xbf16>
    %c1_130 = arith.constant 1 : index
    %c0_131 = arith.constant 0 : index
    %c0_132 = arith.constant 0 : index
    %364 = vector.load %arg14[%c1_130, %c0_131, %c0_132] : memref<2x32x64xbf16, #tpu.memory_space<vmem>>, vector<1x32x64xbf16>
    %365 = vector.shape_cast %364 : vector<1x32x64xbf16> to vector<32x64xbf16>
    %cst_133 = arith.constant dense<0.000000e+00> : vector<8x64xf32>
    %366 = tpu.matmul %363, %365, %cst_133 {dimension_numbers = #tpu.dot_dimension_numbers<[1], [0], [0], [1], [0, 0, 1, 1], [], []>} : vector<8x32xbf16>, vector<32x64xbf16>, vector<8x64xf32> -> vector<8x64xf32>
    %c1_134 = arith.constant 1 : index
    %c0_135 = arith.constant 0 : index
    %367 = vector.load %arg15[%c1_134, %c0_135] : memref<2x64xf32, #tpu.memory_space<vmem>>, vector<1x64xf32>
    %368 = vector.broadcast %367 : vector<1x64xf32> to vector<8x64xf32>
    %369 = arith.addf %366, %368 : vector<8x64xf32>
    %cst_136 = arith.constant 1.702000e+00 : f32
    %370 = vector.broadcast %cst_136 : f32 to vector<8x64xf32>
    %371 = arith.mulf %370, %369 : vector<8x64xf32>
    %372 = arith.negf %371 : vector<8x64xf32>
    %373 = math.exp %372 : vector<8x64xf32>
    %cst_137 = arith.constant 1.000000e+00 : f32
    %374 = vector.broadcast %cst_137 : f32 to vector<8x64xf32>
    %375 = arith.addf %374, %373 : vector<8x64xf32>
    %376 = arith.divf %374, %375 : vector<8x64xf32>
    %377 = arith.mulf %369, %376 : vector<8x64xf32>
    %378 = arith.truncf %377 : vector<8x64xf32> to vector<8x64xbf16>
    %c1_138 = arith.constant 1 : index
    %c0_139 = arith.constant 0 : index
    %c0_140 = arith.constant 0 : index
    %379 = vector.load %arg16[%c1_138, %c0_139, %c0_140] : memref<2x64x32xbf16, #tpu.memory_space<vmem>>, vector<1x64x32xbf16>
    %380 = vector.shape_cast %379 : vector<1x64x32xbf16> to vector<64x32xbf16>
    %cst_141 = arith.constant dense<0.000000e+00> : vector<8x32xf32>
    %381 = tpu.matmul %378, %380, %cst_141 {dimension_numbers = #tpu.dot_dimension_numbers<[1], [0], [0], [1], [0, 0, 1, 1], [], []>} : vector<8x64xbf16>, vector<64x32xbf16>, vector<8x32xf32> -> vector<8x32xf32>
    %c1_142 = arith.constant 1 : index
    %c0_143 = arith.constant 0 : index
    %382 = vector.load %arg17[%c1_142, %c0_143] : memref<2x32xf32, #tpu.memory_space<vmem>>, vector<1x32xf32>
    %383 = vector.broadcast %382 : vector<1x32xf32> to vector<8x32xf32>
    %384 = arith.addf %381, %383 : vector<8x32xf32>
    %385 = arith.addf %384, %338 : vector<8x32xf32>
    %c0_144 = arith.constant 0 : index
    %c0_145 = arith.constant 0 : index
    %c0_146 = arith.constant 0 : index
    %386 = vector.load %arg18[%c0_144, %c0_145, %c0_146] : memref<1x8x32xf32, #tpu.memory_space<vmem>>, vector<1x8x32xf32>
    %387 = vector.shape_cast %386 : vector<1x8x32xf32> to vector<8x32xf32>
    %388 = vector.shape_cast %385 : vector<8x32xf32> to vector<1x8x32xf32>
    tpu.vector_store %arg18[%c0_144, %c0_145, %c0_146], %388 {strides = array<i32>} : memref<1x8x32xf32, #tpu.memory_space<vmem>>, vector<1x8x32xf32>,
    return
  }
  func.func @transform_0(%arg0: i32) -> (i32, i32, i32) {
    %c0_i32 = arith.constant 0 : i32
    %c0_i32_0 = arith.constant 0 : i32
    %c0_i32_1 = arith.constant 0 : i32
    return %arg0, %c0_i32, %c0_i32_0 : i32, i32, i32
  }
  func.func @transform_1(%arg0: i32) -> (i32, i32) {
    %c0_i32 = arith.constant 0 : i32
    %c0_i32_0 = arith.constant 0 : i32
    %c0_i32_1 = arith.constant 0 : i32
    return %c0_i32, %c0_i32_0 : i32, i32
  }
  func.func @transform_2(%arg0: i32) -> (i32, i32) {
    %c0_i32 = arith.constant 0 : i32
    %c0_i32_0 = arith.constant 0 : i32
    %c0_i32_1 = arith.constant 0 : i32
    return %c0_i32, %c0_i32_0 : i32, i32
  }
  func.func @transform_3(%arg0: i32) -> (i32, i32) {
    %c0_i32 = arith.constant 0 : i32
    %c0_i32_0 = arith.constant 0 : i32
    %c0_i32_1 = arith.constant 0 : i32
    return %c0_i32, %c0_i32_0 : i32, i32
  }
  func.func @transform_4(%arg0: i32) -> (i32, i32) {
    %c0_i32 = arith.constant 0 : i32
    %c0_i32_0 = arith.constant 0 : i32
    %c0_i32_1 = arith.constant 0 : i32
    return %c0_i32, %c0_i32_0 : i32, i32
  }
  func.func @transform_5(%arg0: i32) -> (i32, i32) {
    %c0_i32 = arith.constant 0 : i32
    %c0_i32_0 = arith.constant 0 : i32
    %c0_i32_1 = arith.constant 0 : i32
    return %c0_i32, %c0_i32_0 : i32, i32
  }
  func.func @transform_6(%arg0: i32) -> (i32, i32) {
    %c0_i32 = arith.constant 0 : i32
    %c0_i32_0 = arith.constant 0 : i32
    %c0_i32_1 = arith.constant 0 : i32
    return %c0_i32, %c0_i32_0 : i32, i32
  }
  func.func @transform_7(%arg0: i32) -> (i32, i32, i32) {
    %c0_i32 = arith.constant 0 : i32
    %c0_i32_0 = arith.constant 0 : i32
    %c0_i32_1 = arith.constant 0 : i32
    %c0_i32_2 = arith.constant 0 : i32
    return %c0_i32, %c0_i32_0, %c0_i32_1 : i32, i32, i32
  }
  func.func @transform_8(%arg0: i32) -> (i32, i32) {
    %c0_i32 = arith.constant 0 : i32
    %c0_i32_0 = arith.constant 0 : i32
    %c0_i32_1 = arith.constant 0 : i32
    return %c0_i32, %c0_i32_0 : i32, i32
  }
  func.func @transform_9(%arg0: i32) -> (i32, i32, i32) {
    %c0_i32 = arith.constant 0 : i32
    %c0_i32_0 = arith.constant 0 : i32
    %c0_i32_1 = arith.constant 0 : i32
    %c0_i32_2 = arith.constant 0 : i32
    return %c0_i32, %c0_i32_0, %c0_i32_1 : i32, i32, i32
  }
  func.func @transform_10(%arg0: i32) -> (i32, i32) {
    %c0_i32 = arith.constant 0 : i32
    %c0_i32_0 = arith.constant 0 : i32
    %c0_i32_1 = arith.constant 0 : i32
    return %c0_i32, %c0_i32_0 : i32, i32
  }
  func.func @transform_11(%arg0: i32) -> (i32, i32) {
    %c0_i32 = arith.constant 0 : i32
    %c0_i32_0 = arith.constant 0 : i32
    %c0_i32_1 = arith.constant 0 : i32
    return %c0_i32, %c0_i32_0 : i32, i32
  }
  func.func @transform_12(%arg0: i32) -> (i32, i32) {
    %c0_i32 = arith.constant 0 : i32
    %c0_i32_0 = arith.constant 0 : i32
    %c0_i32_1 = arith.constant 0 : i32
    return %c0_i32, %c0_i32_0 : i32, i32
  }
  func.func @transform_13(%arg0: i32) -> (i32, i32, i32) {
    %c0_i32 = arith.constant 0 : i32
    %c0_i32_0 = arith.constant 0 : i32
    %c0_i32_1 = arith.constant 0 : i32
    %c0_i32_2 = arith.constant 0 : i32
    return %c0_i32, %c0_i32_0, %c0_i32_1 : i32, i32, i32
  }
  func.func @transform_14(%arg0: i32) -> (i32, i32) {
    %c0_i32 = arith.constant 0 : i32
    %c0_i32_0 = arith.constant 0 : i32
    %c0_i32_1 = arith.constant 0 : i32
    return %c0_i32, %c0_i32_0 : i32, i32
  }
  func.func @transform_15(%arg0: i32) -> (i32, i32, i32) {
    %c0_i32 = arith.constant 0 : i32
    %c0_i32_0 = arith.constant 0 : i32
    %c0_i32_1 = arith.constant 0 : i32
    %c0_i32_2 = arith.constant 0 : i32
    return %c0_i32, %c0_i32_0, %c0_i32_1 : i32, i32, i32
  }
  func.func @transform_16(%arg0: i32) -> (i32, i32) {
    %c0_i32 = arith.constant 0 : i32
    %c0_i32_0 = arith.constant 0 : i32
    %c0_i32_1 = arith.constant 0 : i32
    return %c0_i32, %c0_i32_0 : i32, i32
  }
  func.func @transform_17(%arg0: i32) -> (i32, i32, i32) {
    %c0_i32 = arith.constant 0 : i32
    %c0_i32_0 = arith.constant 0 : i32
    %c0_i32_1 = arith.constant 0 : i32
    return %arg0, %c0_i32, %c0_i32_0 : i32, i32, i32
  }
}

</mosaic_0001>

<llo_original>
// kernel: clip_vision_tower_forward.1
$region0: #{clip_vision_tower_forward.1}
  #allocation0 [shape = 'u32[]', space=smem, size = 0x4, offset = 0x4, fixed_abs, tag = 'smem constant byte address 0x4 - core index']
  #allocation1 [shape = 'u32[144,128]{1,0:T(1,128)}', space=vmem, size = 0x12000, scoped, tag = 'internal scratch']
  %s0 = inlined_call_operand.vmem [shape: bf16[2,8,192], index: 0, kind: input, shape index: {}]
  %s1 = inlined_call_operand.vmem [shape: bf16[192,32], index: 1, kind: input, shape index: {}]
  %s2 = inlined_call_operand.vmem [shape: f32[8,32], index: 2, kind: input, shape index: {}]
  %s3 = inlined_call_operand.vmem [shape: f32[1,32], index: 3, kind: input, shape index: {}]
  %s4 = inlined_call_operand.vmem [shape: f32[1,32], index: 4, kind: input, shape index: {}]
  %s5 = inlined_call_operand.vmem [shape: f32[2,32], index: 5, kind: input, shape index: {}]
  %s6 = inlined_call_operand.vmem [shape: f32[2,32], index: 6, kind: input, shape index: {}]
  %s7 = inlined_call_operand.vmem [shape: bf16[2,32,96], index: 7, kind: input, shape index: {}]
  %s8 = inlined_call_operand.vmem [shape: f32[2,96], index: 8, kind: input, shape index: {}]
  %s9 = inlined_call_operand.vmem [shape: bf16[2,32,32], index: 9, kind: input, shape index: {}]
  %s10 = inlined_call_operand.vmem [shape: f32[2,32], index: 10, kind: input, shape index: {}]
  %s11 = inlined_call_operand.vmem [shape: f32[2,32], index: 11, kind: input, shape index: {}]
  %s12 = inlined_call_operand.vmem [shape: f32[2,32], index: 12, kind: input, shape index: {}]
  %s13 = inlined_call_operand.vmem [shape: bf16[2,32,64], index: 13, kind: input, shape index: {}]
  %s14 = inlined_call_operand.vmem [shape: f32[2,64], index: 14, kind: input, shape index: {}]
  %s15 = inlined_call_operand.vmem [shape: bf16[2,64,32], index: 15, kind: input, shape index: {}]
  %s16 = inlined_call_operand.vmem [shape: f32[2,32], index: 16, kind: input, shape index: {}]
  %s17 = inlined_call_operand.vmem [shape: f32[2,8,32], index: 17, kind: output, shape index: {}]
  %s18 = sld [smem:[#allocation0]]
  $region101: #{clip_vision_tower_forward.1} parent=0
    _
  %s20 = ssub.s32 1, %s18
  %s21 = scalar_select 0, %s20, %s18
  loop: start=0, step=1, limit=4
  $region2: #{clip_vision_tower_forward.1} parent=0 // loop_pre_header
    _
  $region3: #{clip_vision_tower_forward.1} parent=0 // loop_header
    %s23 = sphi 0, %s27
    %p24 = scmp.ge.s32.totalorder %s23, 4
    %s33 = sphi 0, %s35
    %s36 = sphi 0, %s33
    %s37 = sphi 0, %s36
    %s53 = sphi 0, %s37
    %s57 = sphi 0, %s57
    %s59 = sphi 0, %s57
    %s60 = sphi 0, %s59
    %s74 = sphi 0, %s60
    %s78 = sphi 0, %s78
    %s80 = sphi 0, %s78
    %s81 = sphi 0, %s80
    %s95 = sphi 0, %s81
    %s99 = sphi 0, %s99
    %s101 = sphi 0, %s99
    %s102 = sphi 0, %s101
    %s116 = sphi 0, %s102
    %s120 = sphi 0, %s120
    %s122 = sphi 0, %s120
    %s123 = sphi 0, %s122
    %s137 = sphi 0, %s123
    %s141 = sphi 0, %s141
    %s143 = sphi 0, %s141
    %s144 = sphi 0, %s143
    %s158 = sphi 0, %s144
    %s162 = sphi 0, %s162
    %s164 = sphi 0, %s162
    %s165 = sphi 0, %s164
    %s179 = sphi 0, %s165
    %s183 = sphi 0, %s183
    %s185 = sphi 0, %s183
    %s186 = sphi 0, %s185
    %s200 = sphi 0, %s186
    %s204 = sphi 0, %s204
    %s206 = sphi 0, %s204
    %s207 = sphi 0, %s206
    %s221 = sphi 0, %s207
    %s225 = sphi 0, %s225
    %s227 = sphi 0, %s225
    %s228 = sphi 0, %s227
    %s242 = sphi 0, %s228
    %s246 = sphi 0, %s246
    %s248 = sphi 0, %s246
    %s249 = sphi 0, %s248
    %s263 = sphi 0, %s249
    %s267 = sphi 0, %s267
    %s269 = sphi 0, %s267
    %s270 = sphi 0, %s269
    %s284 = sphi 0, %s270
    %s288 = sphi 0, %s288
    %s290 = sphi 0, %s288
    %s291 = sphi 0, %s290
    %s305 = sphi 0, %s291
    %s309 = sphi 0, %s309
    %s311 = sphi 0, %s309
    %s312 = sphi 0, %s311
    %s326 = sphi 0, %s312
    %s330 = sphi 0, %s330
    %s332 = sphi 0, %s330
    %s333 = sphi 0, %s332
    %s347 = sphi 0, %s333
    %s351 = sphi 0, %s351
    %s353 = sphi 0, %s351
    %s354 = sphi 0, %s353
    %s368 = sphi 0, %s354
    %s372 = sphi 0, %s372
    %s374 = sphi 0, %s372
    %s375 = sphi 0, %s374
    %s389 = sphi 0, %s375
    %s395 = sphi 0, %s397
    %s398 = sphi 0, %s395
    %s399 = sphi 0, %s398
    %s415 = sphi 0, %s399
  $region4: #{clip_vision_tower_forward.1} parent=0 // loop_header_branch
    %26 = sbr.rel (%p24) target = $region8
  $region5: #{clip_vision_tower_forward.1} parent=0 // loop_body
    %s28 = ssub.s32 %s23, 1
    %s29 = ssub.s32 %s23, 2
    %s30 = sadd.s32 %s23, 1
    %s31 = ssub.s32 %s23, %s30
    %p32 = scmp.eq.s32.totalorder %s31, 0
    %s34 = sadd.s32 %s33, 1
    %s35 = scalar_select %p32, %s33, %s34
    %p38 = pneg %p32
    %p39 = scmp.eq.s32.totalorder %s23, 1
    %p40 = por %p38, %p39
    %p41 = scmp.ne.s32.totalorder %s33, %s36
    %p42 = scmp.eq.s32.totalorder %s23, 0
    %p43 = por %p41, %p42
    %p44 = scmp.ne.s32.totalorder %s33, %s36
    %p45 = scmp.eq.s32.totalorder %s28, 1
    %p46 = por %p44, %p45
    %p47 = scmp.ne.s32.totalorder %s36, %s37
    %p48 = scmp.eq.s32.totalorder %s28, 0
    %p49 = por %p47, %p48
    %p50 = scmp.ne.s32.totalorder %s36, %s37
    %p51 = scmp.eq.s32.totalorder %s29, 1
    %p52 = por %p50, %p51
    %p54 = scmp.ne.s32.totalorder %s37, %s53
    %p55 = scmp.eq.s32.totalorder %s29, 0
    %p56 = por %p54, %p55
    %s58 = sadd.s32 %s57, 1
    %p61 = scmp.eq.s32.totalorder %s23, 1
    %p62 = scmp.ne.s32.totalorder %s57, %s59
    %p63 = scmp.eq.s32.totalorder %s23, 0
    %p64 = por %p62, %p63
    %p65 = scmp.ne.s32.totalorder %s57, %s59
    %p66 = scmp.eq.s32.totalorder %s28, 1
    %p67 = por %p65, %p66
    %p68 = scmp.ne.s32.totalorder %s59, %s60
    %p69 = scmp.eq.s32.totalorder %s28, 0
    %p70 = por %p68, %p69
    %p71 = scmp.ne.s32.totalorder %s59, %s60
    %p72 = scmp.eq.s32.totalorder %s29, 1
    %p73 = por %p71, %p72
    %p75 = scmp.ne.s32.totalorder %s60, %s74
    %p76 = scmp.eq.s32.totalorder %s29, 0
    %p77 = por %p75, %p76
    %s79 = sadd.s32 %s78, 1
    %p82 = scmp.eq.s32.totalorder %s23, 1
    %p83 = scmp.ne.s32.totalorder %s78, %s80
    %p84 = scmp.eq.s32.totalorder %s23, 0
    %p85 = por %p83, %p84
    %p86 = scmp.ne.s32.totalorder %s78, %s80
    %p87 = scmp.eq.s32.totalorder %s28, 1
    %p88 = por %p86, %p87
    %p89 = scmp.ne.s32.totalorder %s80, %s81
    %p90 = scmp.eq.s32.totalorder %s28, 0
    %p91 = por %p89, %p90
    %p92 = scmp.ne.s32.totalorder %s80, %s81
    %p93 = scmp.eq.s32.totalorder %s29, 1
    %p94 = por %p92, %p93
    %p96 = scmp.ne.s32.totalorder %s81, %s95
    %p97 = scmp.eq.s32.totalorder %s29, 0
    %p98 = por %p96, %p97
    %s100 = sadd.s32 %s99, 1
    %p103 = scmp.eq.s32.totalorder %s23, 1
    %p104 = scmp.ne.s32.totalorder %s99, %s101
    %p105 = scmp.eq.s32.totalorder %s23, 0
    %p106 = por %p104, %p105
    %p107 = scmp.ne.s32.totalorder %s99, %s101
    %p108 = scmp.eq.s32.totalorder %s28, 1
    %p109 = por %p107, %p108
    %p110 = scmp.ne.s32.totalorder %s101, %s102
    %p111 = scmp.eq.s32.totalorder %s28, 0
    %p112 = por %p110, %p111
    %p113 = scmp.ne.s32.totalorder %s101, %s102
    %p114 = scmp.eq.s32.totalorder %s29, 1
    %p115 = por %p113, %p114
    %p117 = scmp.ne.s32.totalorder %s102, %s116
    %p118 = scmp.eq.s32.totalorder %s29, 0
    %p119 = por %p117, %p118
    %s121 = sadd.s32 %s120, 1
    %p124 = scmp.eq.s32.totalorder %s23, 1
    %p125 = scmp.ne.s32.totalorder %s120, %s122
    %p126 = scmp.eq.s32.totalorder %s23, 0
    %p127 = por %p125, %p126
    %p128 = scmp.ne.s32.totalorder %s120, %s122
    %p129 = scmp.eq.s32.totalorder %s28, 1
    %p130 = por %p128, %p129
    %p131 = scmp.ne.s32.totalorder %s122, %s123
    %p132 = scmp.eq.s32.totalorder %s28, 0
    %p133 = por %p131, %p132
    %p134 = scmp.ne.s32.totalorder %s122, %s123
    %p135 = scmp.eq.s32.totalorder %s29, 1
    %p136 = por %p134, %p135
    %p138 = scmp.ne.s32.totalorder %s123, %s137
    %p139 = scmp.eq.s32.totalorder %s29, 0
    %p140 = por %p138, %p139
    %s142 = sadd.s32 %s141, 1
    %p145 = scmp.eq.s32.totalorder %s23, 1
    %p146 = scmp.ne.s32.totalorder %s141, %s143
    %p147 = scmp.eq.s32.totalorder %s23, 0
    %p148 = por %p146, %p147
    %p149 = scmp.ne.s32.totalorder %s141, %s143
    %p150 = scmp.eq.s32.totalorder %s28, 1
    %p151 = por %p149, %p150
    %p152 = scmp.ne.s32.totalorder %s143, %s144
    %p153 = scmp.eq.s32.totalorder %s28, 0
    %p154 = por %p152, %p153
    %p155 = scmp.ne.s32.totalorder %s143, %s144
    %p156 = scmp.eq.s32.totalorder %s29, 1
    %p157 = por %p155, %p156
    %p159 = scmp.ne.s32.totalorder %s144, %s158
    %p160 = scmp.eq.s32.totalorder %s29, 0
    %p161 = por %p159, %p160
    %s163 = sadd.s32 %s162, 1
    %p166 = scmp.eq.s32.totalorder %s23, 1
    %p167 = scmp.ne.s32.totalorder %s162, %s164
    %p168 = scmp.eq.s32.totalorder %s23, 0
    %p169 = por %p167, %p168
    %p170 = scmp.ne.s32.totalorder %s162, %s164
    %p171 = scmp.eq.s32.totalorder %s28, 1
    %p172 = por %p170, %p171
    %p173 = scmp.ne.s32.totalorder %s164, %s165
    %p174 = scmp.eq.s32.totalorder %s28, 0
    %p175 = por %p173, %p174
    %p176 = scmp.ne.s32.totalorder %s164, %s165
    %p177 = scmp.eq.s32.totalorder %s29, 1
    %p178 = por %p176, %p177
    %p180 = scmp.ne.s32.totalorder %s165, %s179
    %p181 = scmp.eq.s32.totalorder %s29, 0
    %p182 = por %p180, %p181
    %s184 = sadd.s32 %s183, 1
    %p187 = scmp.eq.s32.totalorder %s23, 1
    %p188 = scmp.ne.s32.totalorder %s183, %s185
    %p189 = scmp.eq.s32.totalorder %s23, 0
    %p190 = por %p188, %p189
    %p191 = scmp.ne.s32.totalorder %s183, %s185
    %p192 = scmp.eq.s32.totalorder %s28, 1
    %p193 = por %p191, %p192
    %p194 = scmp.ne.s32.totalorder %s185, %s186
    %p195 = scmp.eq.s32.totalorder %s28, 0
    %p196 = por %p194, %p195
    %p197 = scmp.ne.s32.totalorder %s185, %s186
    %p198 = scmp.eq.s32.totalorder %s29, 1
    %p199 = por %p197, %p198
    %p201 = scmp.ne.s32.totalorder %s186, %s200
    %p202 = scmp.eq.s32.totalorder %s29, 0
    %p203 = por %p201, %p202
    %s205 = sadd.s32 %s204, 1
    %p208 = scmp.eq.s32.totalorder %s23, 1
    %p209 = scmp.ne.s32.totalorder %s204, %s206
    %p210 = scmp.eq.s32.totalorder %s23, 0
    %p211 = por %p209, %p210
    %p212 = scmp.ne.s32.totalorder %s204, %s206
    %p213 = scmp.eq.s32.totalorder %s28, 1
    %p214 = por %p212, %p213
    %p215 = scmp.ne.s32.totalorder %s206, %s207
    %p216 = scmp.eq.s32.totalorder %s28, 0
    %p217 = por %p215, %p216
    %p218 = scmp.ne.s32.totalorder %s206, %s207
    %p219 = scmp.eq.s32.totalorder %s29, 1
    %p220 = por %p218, %p219
    %p222 = scmp.ne.s32.totalorder %s207, %s221
    %p223 = scmp.eq.s32.totalorder %s29, 0
    %p224 = por %p222, %p223
    %s226 = sadd.s32 %s225, 1
    %p229 = scmp.eq.s32.totalorder %s23, 1
    %p230 = scmp.ne.s32.totalorder %s225, %s227
    %p231 = scmp.eq.s32.totalorder %s23, 0
    %p232 = por %p230, %p231
    %p233 = scmp.ne.s32.totalorder %s225, %s227
    %p234 = scmp.eq.s32.totalorder %s28, 1
    %p235 = por %p233, %p234
    %p236 = scmp.ne.s32.totalorder %s227, %s228
    %p237 = scmp.eq.s32.totalorder %s28, 0
    %p238 = por %p236, %p237
    %p239 = scmp.ne.s32.totalorder %s227, %s228
    %p240 = scmp.eq.s32.totalorder %s29, 1
    %p241 = por %p239, %p240
    %p243 = scmp.ne.s32.totalorder %s228, %s242
    %p244 = scmp.eq.s32.totalorder %s29, 0
    %p245 = por %p243, %p244
    %s247 = sadd.s32 %s246, 1
    %p250 = scmp.eq.s32.totalorder %s23, 1
    %p251 = scmp.ne.s32.totalorder %s246, %s248
    %p252 = scmp.eq.s32.totalorder %s23, 0
    %p253 = por %p251, %p252
    %p254 = scmp.ne.s32.totalorder %s246, %s248
    %p255 = scmp.eq.s32.totalorder %s28, 1
    %p256 = por %p254, %p255
    %p257 = scmp.ne.s32.totalorder %s248, %s249
    %p258 = scmp.eq.s32.totalorder %s28, 0
    %p259 = por %p257, %p258
    %p260 = scmp.ne.s32.totalorder %s248, %s249
    %p261 = scmp.eq.s32.totalorder %s29, 1
    %p262 = por %p260, %p261
    %p264 = scmp.ne.s32.totalorder %s249, %s263
    %p265 = scmp.eq.s32.totalorder %s29, 0
    %p266 = por %p264, %p265
    %s268 = sadd.s32 %s267, 1
    %p271 = scmp.eq.s32.totalorder %s23, 1
    %p272 = scmp.ne.s32.totalorder %s267, %s269
    %p273 = scmp.eq.s32.totalorder %s23, 0
    %p274 = por %p272, %p273
    %p275 = scmp.ne.s32.totalorder %s267, %s269
    %p276 = scmp.eq.s32.totalorder %s28, 1
    %p277 = por %p275, %p276
    %p278 = scmp.ne.s32.totalorder %s269, %s270
    %p279 = scmp.eq.s32.totalorder %s28, 0
    %p280 = por %p278, %p279
    %p281 = scmp.ne.s32.totalorder %s269, %s270
    %p282 = scmp.eq.s32.totalorder %s29, 1
    %p283 = por %p281, %p282
    %p285 = scmp.ne.s32.totalorder %s270, %s284
    %p286 = scmp.eq.s32.totalorder %s29, 0
    %p287 = por %p285, %p286
    %s289 = sadd.s32 %s288, 1
    %p292 = scmp.eq.s32.totalorder %s23, 1
    %p293 = scmp.ne.s32.totalorder %s288, %s290
    %p294 = scmp.eq.s32.totalorder %s23, 0
    %p295 = por %p293, %p294
    %p296 = scmp.ne.s32.totalorder %s288, %s290
    %p297 = scmp.eq.s32.totalorder %s28, 1
    %p298 = por %p296, %p297
    %p299 = scmp.ne.s32.totalorder %s290, %s291
    %p300 = scmp.eq.s32.totalorder %s28, 0
    %p301 = por %p299, %p300
    %p302 = scmp.ne.s32.totalorder %s290, %s291
    %p303 = scmp.eq.s32.totalorder %s29, 1
    %p304 = por %p302, %p303
    %p306 = scmp.ne.s32.totalorder %s291, %s305
    %p307 = scmp.eq.s32.totalorder %s29, 0
    %p308 = por %p306, %p307
    %s310 = sadd.s32 %s309, 1
    %p313 = scmp.eq.s32.totalorder %s23, 1
    %p314 = scmp.ne.s32.totalorder %s309, %s311
    %p315 = scmp.eq.s32.totalorder %s23, 0
    %p316 = por %p314, %p315
    %p317 = scmp.ne.s32.totalorder %s309, %s311
    %p318 = scmp.eq.s32.totalorder %s28, 1
    %p319 = por %p317, %p318
    %p320 = scmp.ne.s32.totalorder %s311, %s312
    %p321 = scmp.eq.s32.totalorder %s28, 0
    %p322 = por %p320, %p321
    %p323 = scmp.ne.s32.totalorder %s311, %s312
    %p324 = scmp.eq.s32.totalorder %s29, 1
    %p325 = por %p323, %p324
    %p327 = scmp.ne.s32.totalorder %s312, %s326
    %p328 = scmp.eq.s32.totalorder %s29, 0
    %p329 = por %p327, %p328
    %s331 = sadd.s32 %s330, 1
    %p334 = scmp.eq.s32.totalorder %s23, 1
    %p335 = scmp.ne.s32.totalorder %s330, %s332
    %p336 = scmp.eq.s32.totalorder %s23, 0
    %p337 = por %p335, %p336
    %p338 = scmp.ne.s32.totalorder %s330, %s332
    %p339 = scmp.eq.s32.totalorder %s28, 1
    %p340 = por %p338, %p339
    %p341 = scmp.ne.s32.totalorder %s332, %s333
    %p342 = scmp.eq.s32.totalorder %s28, 0
    %p343 = por %p341, %p342
    %p344 = scmp.ne.s32.totalorder %s332, %s333
    %p345 = scmp.eq.s32.totalorder %s29, 1
    %p346 = por %p344, %p345
    %p348 = scmp.ne.s32.totalorder %s333, %s347
    %p349 = scmp.eq.s32.totalorder %s29, 0
    %p350 = por %p348, %p349
    %s352 = sadd.s32 %s351, 1
    %p355 = scmp.eq.s32.totalorder %s23, 1
    %p356 = scmp.ne.s32.totalorder %s351, %s353
    %p357 = scmp.eq.s32.totalorder %s23, 0
    %p358 = por %p356, %p357
    %p359 = scmp.ne.s32.totalorder %s351, %s353
    %p360 = scmp.eq.s32.totalorder %s28, 1
    %p361 = por %p359, %p360
    %p362 = scmp.ne.s32.totalorder %s353, %s354
    %p363 = scmp.eq.s32.totalorder %s28, 0
    %p364 = por %p362, %p363
    %p365 = scmp.ne.s32.totalorder %s353, %s354
    %p366 = scmp.eq.s32.totalorder %s29, 1
    %p367 = por %p365, %p366
    %p369 = scmp.ne.s32.totalorder %s354, %s368
    %p370 = scmp.eq.s32.totalorder %s29, 0
    %p371 = por %p369, %p370
    %s373 = sadd.s32 %s372, 1
    %p376 = scmp.eq.s32.totalorder %s23, 1
    %p377 = scmp.ne.s32.totalorder %s372, %s374
    %p378 = scmp.eq.s32.totalorder %s23, 0
    %p379 = por %p377, %p378
    %p380 = scmp.ne.s32.totalorder %s372, %s374
    %p381 = scmp.eq.s32.totalorder %s28, 1
    %p382 = por %p380, %p381
    %p383 = scmp.ne.s32.totalorder %s374, %s375
    %p384 = scmp.eq.s32.totalorder %s28, 0
    %p385 = por %p383, %p384
    %p386 = scmp.ne.s32.totalorder %s374, %s375
    %p387 = scmp.eq.s32.totalorder %s29, 1
    %p388 = por %p386, %p387
    %p390 = scmp.ne.s32.totalorder %s375, %s389
    %p391 = scmp.eq.s32.totalorder %s29, 0
    %p392 = por %p390, %p391
    %s393 = ssub.s32 %s23, %s30
    %p394 = scmp.eq.s32.totalorder %s393, 0
    %s396 = sadd.s32 %s395, 1
    %s397 = scalar_select %p394, %s395, %s396
    %p400 = pneg %p394
    %p401 = scmp.eq.s32.totalorder %s23, 1
    %p402 = por %p400, %p401
    %p403 = scmp.ne.s32.totalorder %s395, %s398
    %p404 = scmp.eq.s32.totalorder %s23, 0
    %p405 = por %p403, %p404
    %p406 = scmp.ne.s32.totalorder %s395, %s398
    %p407 = scmp.eq.s32.totalorder %s28, 1
    %p408 = por %p406, %p407
    %p409 = scmp.ne.s32.totalorder %s398, %s399
    %p410 = scmp.eq.s32.totalorder %s28, 0
    %p411 = por %p409, %p410
    %p412 = scmp.ne.s32.totalorder %s398, %s399
    %p413 = scmp.eq.s32.totalorder %s29, 1
    %p414 = por %p412, %p413
    %p416 = scmp.ne.s32.totalorder %s399, %s415
    %p417 = scmp.eq.s32.totalorder %s29, 0
    %p418 = por %p416, %p417
    %p419 = scmp.le.s32.totalorder 1, %s23
    %p420 = scmp.lt.s32.totalorder %s23, 3
    %p421 = pnand %p419, %p420
    %p422 = pneg %p421
    // Predicated region
    $region9: #{clip_vision_tower_forward.1} parent=5 // pred_check
      _
    $region10: #{clip_vision_tower_forward.1} parent=5 // pred_check_branch
      %424 = sbr.rel (%p421) target = $region12
    $region11: #{clip_vision_tower_forward.1} parent=5 // pred_region
      %s425 = ssub.s32 %s23, 1
      // Predicated region
      $region13: #{clip_vision_tower_forward.1} parent=11 // pred_check
        %p426 = pneg %p70
      $region14: #{clip_vision_tower_forward.1} parent=11 // pred_check_branch
        %428 = sbr.rel (%p426) target = $region16
      $region15: #{clip_vision_tower_forward.1} parent=11 // pred_region
        _
      $region16: #{clip_vision_tower_forward.1} parent=11 // pred_fallthru
        _
      // Predicated region
      $region17: #{clip_vision_tower_forward.1} parent=11 // pred_check
        %p429 = pneg %p91
      $region18: #{clip_vision_tower_forward.1} parent=11 // pred_check_branch
        %431 = sbr.rel (%p429) target = $region20
      $region19: #{clip_vision_tower_forward.1} parent=11 // pred_region
        _
      $region20: #{clip_vision_tower_forward.1} parent=11 // pred_fallthru
        _
      // Predicated region
      $region21: #{clip_vision_tower_forward.1} parent=11 // pred_check
        %p432 = pneg %p112
      $region22: #{clip_vision_tower_forward.1} parent=11 // pred_check_branch
        %434 = sbr.rel (%p432) target = $region24
      $region23: #{clip_vision_tower_forward.1} parent=11 // pred_region
        _
      $region24: #{clip_vision_tower_forward.1} parent=11 // pred_fallthru
        _
      // Predicated region
      $region25: #{clip_vision_tower_forward.1} parent=11 // pred_check
        %p435 = pneg %p133
      $region26: #{clip_vision_tower_forward.1} parent=11 // pred_check_branch
        %437 = sbr.rel (%p435) target = $region28
      $region27: #{clip_vision_tower_forward.1} parent=11 // pred_region
        _
      $region28: #{clip_vision_tower_forward.1} parent=11 // pred_fallthru
        _
      // Predicated region
      $region29: #{clip_vision_tower_forward.1} parent=11 // pred_check
        %p438 = pneg %p154
      $region30: #{clip_vision_tower_forward.1} parent=11 // pred_check_branch
        %440 = sbr.rel (%p438) target = $region32
      $region31: #{clip_vision_tower_forward.1} parent=11 // pred_region
        _
      $region32: #{clip_vision_tower_forward.1} parent=11 // pred_fallthru
        _
      // Predicated region
      $region33: #{clip_vision_tower_forward.1} parent=11 // pred_check
        %p441 = pneg %p175
      $region34: #{clip_vision_tower_forward.1} parent=11 // pred_check_branch
        %443 = sbr.rel (%p441) target = $region36
      $region35: #{clip_vision_tower_forward.1} parent=11 // pred_region
        _
      $region36: #{clip_vision_tower_forward.1} parent=11 // pred_fallthru
        _
      // Predicated region
      $region37: #{clip_vision_tower_forward.1} parent=11 // pred_check
        %p444 = pneg %p196
      $region38: #{clip_vision_tower_forward.1} parent=11 // pred_check_branch
        %446 = sbr.rel (%p444) target = $region40
      $region39: #{clip_vision_tower_forward.1} parent=11 // pred_region
        _
      $region40: #{clip_vision_tower_forward.1} parent=11 // pred_fallthru
        _
      // Predicated region
      $region41: #{clip_vision_tower_forward.1} parent=11 // pred_check
        %p447 = pneg %p217
      $region42: #{clip_vision_tower_forward.1} parent=11 // pred_check_branch
        %449 = sbr.rel (%p447) target = $region44
      $region43: #{clip_vision_tower_forward.1} parent=11 // pred_region
        _
      $region44: #{clip_vision_tower_forward.1} parent=11 // pred_fallthru
        _
      // Predicated region
      $region45: #{clip_vision_tower_forward.1} parent=11 // pred_check
        %p450 = pneg %p238
      $region46: #{clip_vision_tower_forward.1} parent=11 // pred_check_branch
        %452 = sbr.rel (%p450) target = $region48
      $region47: #{clip_vision_tower_forward.1} parent=11 // pred_region
        _
      $region48: #{clip_vision_tower_forward.1} parent=11 // pred_fallthru
        _
      // Predicated region
      $region49: #{clip_vision_tower_forward.1} parent=11 // pred_check
        %p453 = pneg %p259
      $region50: #{clip_vision_tower_forward.1} parent=11 // pred_check_branch
        %455 = sbr.rel (%p453) target = $region52
      $region51: #{clip_vision_tower_forward.1} parent=11 // pred_region
        _
      $region52: #{clip_vision_tower_forward.1} parent=11 // pred_fallthru
        _
      // Predicated region
      $region53: #{clip_vision_tower_forward.1} parent=11 // pred_check
        %p456 = pneg %p280
      $region54: #{clip_vision_tower_forward.1} parent=11 // pred_check_branch
        %458 = sbr.rel (%p456) target = $region56
      $region55: #{clip_vision_tower_forward.1} parent=11 // pred_region
        _
      $region56: #{clip_vision_tower_forward.1} parent=11 // pred_fallthru
        _
      // Predicated region
      $region57: #{clip_vision_tower_forward.1} parent=11 // pred_check
        %p459 = pneg %p301
      $region58: #{clip_vision_tower_forward.1} parent=11 // pred_check_branch
        %461 = sbr.rel (%p459) target = $region60
      $region59: #{clip_vision_tower_forward.1} parent=11 // pred_region
        _
      $region60: #{clip_vision_tower_forward.1} parent=11 // pred_fallthru
        _
      // Predicated region
      $region61: #{clip_vision_tower_forward.1} parent=11 // pred_check
        %p462 = pneg %p322
      $region62: #{clip_vision_tower_forward.1} parent=11 // pred_check_branch
        %464 = sbr.rel (%p462) target = $region64
      $region63: #{clip_vision_tower_forward.1} parent=11 // pred_region
        _
      $region64: #{clip_vision_tower_forward.1} parent=11 // pred_fallthru
        _
      // Predicated region
      $region65: #{clip_vision_tower_forward.1} parent=11 // pred_check
        %p465 = pneg %p343
      $region66: #{clip_vision_tower_forward.1} parent=11 // pred_check_branch
        %467 = sbr.rel (%p465) target = $region68
      $region67: #{clip_vision_tower_forward.1} parent=11 // pred_region
        _
      $region68: #{clip_vision_tower_forward.1} parent=11 // pred_fallthru
        _
      // Predicated region
      $region69: #{clip_vision_tower_forward.1} parent=11 // pred_check
        %p468 = pneg %p364
      $region70: #{clip_vision_tower_forward.1} parent=11 // pred_check_branch
        %470 = sbr.rel (%p468) target = $region72
      $region71: #{clip_vision_tower_forward.1} parent=11 // pred_region
        _
      $region72: #{clip_vision_tower_forward.1} parent=11 // pred_fallthru
        _
      // Predicated region
      $region73: #{clip_vision_tower_forward.1} parent=11 // pred_check
        %p471 = pneg %p385
      $region74: #{clip_vision_tower_forward.1} parent=11 // pred_check_branch
        %473 = sbr.rel (%p471) target = $region76
      $region75: #{clip_vision_tower_forward.1} parent=11 // pred_region
        _
      $region76: #{clip_vision_tower_forward.1} parent=11 // pred_fallthru
        _
    $region12: #{clip_vision_tower_forward.1} parent=5 // pred_fallthru
      _
    %p474 = scmp.lt.s32.totalorder %s23, 2
    // Predicated region
    $region77: #{clip_vision_tower_forward.1} parent=5 // pred_check
      %p475 = pneg %p474
    $region78: #{clip_vision_tower_forward.1} parent=5 // pred_check_branch
      %477 = sbr.rel (%p475) target = $region80
    $region79: #{clip_vision_tower_forward.1} parent=5 // pred_region
      // Predicated region
      $region81: #{clip_vision_tower_forward.1} parent=79 // pred_check
        %p478 = pneg %p43
      $region82: #{clip_vision_tower_forward.1} parent=79 // pred_check_branch
        %480 = sbr.rel (%p478) target = $region84
      $region83: #{clip_vision_tower_forward.1} parent=79 // pred_region
        %p481 = scmp.lt.s32.totalorder %s23, 1
        %s482 = scalar_select %p481, %s23, 1
        %s483 = smul.addr %s482, 2
        %s484 = smul.addr %s483, 4
        %s485 = scalar_lea.vmem %s0, %s484
      $region84: #{clip_vision_tower_forward.1} parent=79 // pred_fallthru
        _
    $region80: #{clip_vision_tower_forward.1} parent=5 // pred_fallthru
      _
    %p486 = scmp.le.s32.totalorder 1, %s23
    %p487 = scmp.lt.s32.totalorder %s23, 3
    %p488 = pnand %p486, %p487
    %p489 = pneg %p488
    // Predicated region
    $region85: #{clip_vision_tower_forward.1} parent=5 // pred_check
      _
    $region86: #{clip_vision_tower_forward.1} parent=5 // pred_check_branch
      %491 = sbr.rel (%p488) target = $region88
    $region87: #{clip_vision_tower_forward.1} parent=5 // pred_region
      %s492 = ssub.s32 %s23, 1
      %p493 = scmp.lt.s32.totalorder %s28, 1
      %s494 = scalar_select %p493, %s28, 1
      %s495 = smul.addr %s494, 2
      %s496 = smul.addr %s495, 4
      %s497 = scalar_lea.vmem %s0, %s496
      %p498 = pneg %p49
      %p499 = pneg %p46
      %p500 = pneg %p70
      %p501 = pneg %p67
      %p502 = pneg %p91
      %p503 = pneg %p88
      %p504 = pneg %p112
      %p505 = pneg %p109
      %p506 = pneg %p133
      %p507 = pneg %p130
      %p508 = pneg %p154
      %p509 = pneg %p151
      %p510 = pneg %p175
      %p511 = pneg %p172
      %p512 = pneg %p196
      %p513 = pneg %p193
      %p514 = pneg %p217
      %p515 = pneg %p214
      %p516 = pneg %p238
      %p517 = pneg %p235
      %p518 = pneg %p259
      %p519 = pneg %p256
      %p520 = pneg %p280
      %p521 = pneg %p277
      %p522 = pneg %p301
      %p523 = pneg %p298
      %p524 = pneg %p322
      %p525 = pneg %p319
      %p526 = pneg %p343
      %p527 = pneg %p340
      %p528 = pneg %p364
      %p529 = pneg %p361
      %p530 = pneg %p385
      %p531 = pneg %p382
      %p532 = pneg %p411
      %p533 = pneg %p408
      %p534 = scmp.lt.s32.totalorder %s28, 1
      %s535 = scalar_select %p534, %s28, 1
      %s536 = smul.addr %s535, 8
      %s537 = scalar_lea.vmem %s17, %s536
      %p538 = scmp.lt.s32.totalorder %s28, 1
      %s539 = scalar_select %p538, %s28, 1
      %s540 = smul.addr %s539, 2
      %s541 = smul.addr %s540, 4
      %s542 = scalar_lea.vmem %s0, %s541
      %p543 = scmp.lt.s32.totalorder %s28, 1
      %s544 = scalar_select %p543, %s28, 1
      %s545 = smul.addr %s544, 8
      %s546 = scalar_lea.vmem %s17, %s545
      %v548 = vld [vmem:[%s542] sm:$0xff]
      %v549 = vld [vmem:[%s1] sm:$0xf]
      %v550 = vld [vmem:[%s1 + $0x4] sm:$0xf]
      %v551 = vld [vmem:[%s1 + $0x8] sm:$0xf]
      %v552 = vld [vmem:[%s1 + $0xc] sm:$0xf]
      %v553 = vld [vmem:[%s1 + $0x10] sm:$0xf]
      %v554 = vld [vmem:[%s1 + $0x14] sm:$0xf]
      %v555 = vld [vmem:[%s1 + $0x18] sm:$0xf]
      %v556 = vld [vmem:[%s1 + $0x1c] sm:$0xf]
      %v557 = vld [vmem:[%s1 + $0x20] sm:$0xf]
      %v558 = vld [vmem:[%s1 + $0x24] sm:$0xf]
      %v559 = vld [vmem:[%s1 + $0x28] sm:$0xf]
      %v560 = vld [vmem:[%s1 + $0x2c] sm:$0xf]
      %v561 = vld [vmem:[%s1 + $0x30] sm:$0xf]
      %v562 = vld [vmem:[%s1 + $0x34] sm:$0xf]
      %v563 = vld [vmem:[%s1 + $0x38] sm:$0xf]
      %v564 = vld [vmem:[%s1 + $0x3c] sm:$0xf]
      %v565 = vld [vmem:[%s1 + $0x40] sm:$0xf]
      %v566 = vld [vmem:[%s1 + $0x44] sm:$0xf]
      %v567 = vld [vmem:[%s1 + $0x48] sm:$0xf]
      %v568 = vld [vmem:[%s1 + $0x4c] sm:$0xf]
      %v569 = vld [vmem:[%s1 + $0x50] sm:$0xf]
      %v570 = vld [vmem:[%s1 + $0x54] sm:$0xf]
      %v571 = vld [vmem:[%s1 + $0x58] sm:$0xf]
      %v572 = vld [vmem:[%s1 + $0x5c] sm:$0xf]
      %v573 = vld [vmem:[%s2] sm:$0xff]
      %v575 = vunpack.c.l.b16 %v548
      %v576 = vunpack.c.h.b16 %v548
      %v577 = vpack.c.b16 %v575, %v575
      %v578 = vpack.c.b16 %v576, %v576
      %v604 = vunpack.c.l.b16 %v549
      %v605 = vunpack.c.l.b16 %v550
      %v606 = vunpack.c.l.b16 %v551
      %v607 = vunpack.c.l.b16 %v552
      %v608 = vunpack.c.l.b16 %v553
      %v609 = vunpack.c.l.b16 %v554
      %v610 = vunpack.c.l.b16 %v555
      %v611 = vunpack.c.l.b16 %v556
      %v612 = vunpack.c.l.b16 %v557
      %v613 = vunpack.c.l.b16 %v558
      %v614 = vunpack.c.l.b16 %v559
      %v615 = vunpack.c.l.b16 %v560
      %v616 = vunpack.c.l.b16 %v561
      %v617 = vunpack.c.l.b16 %v562
      %v618 = vunpack.c.l.b16 %v563
      %v619 = vunpack.c.l.b16 %v564
      %v620 = vunpack.c.l.b16 %v565
      %v621 = vunpack.c.l.b16 %v566
      %v622 = vunpack.c.l.b16 %v567
      %v623 = vunpack.c.l.b16 %v568
      %v624 = vunpack.c.l.b16 %v569
      %v625 = vunpack.c.l.b16 %v570
      %v626 = vunpack.c.l.b16 %v571
      %v627 = vunpack.c.l.b16 %v572
      %v628 = vpack.c.b16 %v605, %v604
      %v629 = vpack.c.b16 %v607, %v606
      %v630 = vpack.c.b16 %v609, %v608
      %v631 = vpack.c.b16 %v611, %v610
      %v632 = vpack.c.b16 %v613, %v612
      %v633 = vpack.c.b16 %v615, %v614
      %v634 = vpack.c.b16 %v617, %v616
      %v635 = vpack.c.b16 %v619, %v618
      %v636 = vpack.c.b16 %v621, %v620
      %v637 = vpack.c.b16 %v623, %v622
      %v638 = vpack.c.b16 %v625, %v624
      %v639 = vpack.c.b16 %v627, %v626
      %vm652 = vcmask 523264
      %v654 = vsel %vm652, %v578, 0
      %656 = vmatprep.subr.bf16.mxu0 0
      %657 = vmatpush1.bf16.msra.mxu0 %v635
      %658 = vmatprep.subr.bf16.mxu0 0
      %659 = vmatpush1.bf16.msra.mxu0 %v634
      %660 = vmatprep.subr.bf16.mxu0 0
      %661 = vmatpush1.bf16.msra.mxu0 %v633
      %662 = vmatprep.subr.bf16.mxu0 0
      %663 = vmatpush1.bf16.msra.mxu0 %v632
      %664 = vmatprep.subr.bf16.mxu0 0
      %665 = vmatpush1.bf16.msra.mxu0 %v631
      %666 = vmatprep.subr.bf16.mxu0 0
      %667 = vmatpush1.bf16.msra.mxu0 %v630
      %668 = vmatprep.subr.bf16.mxu0 0
      %669 = vmatpush1.bf16.msra.mxu0 %v629
      %670 = vmatprep.subr.bf16.mxu0 0
      %671 = vmatpush1.bf16.msra.mxu0 %v628
      %672 = vmatprep.subr.bf16.mxu0 0
      %673 = vmatpush2.bf16.msra.mxu0 0
      %674 = vmatprep.subr.bf16.mxu0 0
      %675 = vmatpush2.bf16.msra.mxu0 0
      %676 = vmatprep.subr.bf16.mxu0 0
      %677 = vmatpush2.bf16.msra.mxu0 0
      %678 = vmatprep.subr.bf16.mxu0 0
      %679 = vmatpush2.bf16.msra.mxu0 0
      %680 = vmatprep.subr.bf16.mxu0 0
      %681 = vmatpush2.bf16.msra.mxu0 %v639
      %682 = vmatprep.subr.bf16.mxu0 0
      %683 = vmatpush2.bf16.msra.mxu0 %v638
      %684 = vmatprep.subr.bf16.mxu0 0
      %685 = vmatpush2.bf16.msra.mxu0 %v637
      %686 = vmatprep.subr.bf16.mxu0 0
      %687 = vmatpush2.bf16.msra.mxu0 %v636
      %688 = vmatprep.mubr.bf16.mxu0 %v654
      %689 = vmatmul.mubr.bf16.gmra.mxu0 %v577
      %v690 = vpop.f32.mrf.mxu0
      %v691 = vadd.f32 %v573, %v690
      %v692 = vpop.f32.mrf.mxu0
      %v693 = vpop.f32.mrf.mxu0
      %v694 = vpop.f32.mrf.mxu0
      %695 = vdwg.mxu0
      %v696 = vld [vmem:[%s3] sm:$0x1]
      %v697 = vld [vmem:[%s4] sm:$0x1]
      %vm698 = vcmask 261120
      %v699 = vsel %vm698, %v691, 0.0
      %700 = vadd.xlane.f32.xlu0 %v699
      %v701 = vpop.xlane.xlu0 %700
      %v702 = vrcp.pop 32.0
      %v703 = vmul.f32 %v701, %v702
      %v704 = vmul.f32 %v691, %v691
      %v705 = vsel %vm698, %v704, 0.0
      %706 = vadd.xlane.f32.xlu0 %v705
      %v707 = vpop.xlane.xlu0 %706
      %v708 = vmul.f32 %v707, %v702
      %v709 = vmul.f32 %v703, %v703
      %v710 = vsub.f32 %v708, %v709
      %v711 = vsub.f32 %v691, %v703
      %v712 = vadd.f32 %v710, 1e-05
      %v713 = vrsqrt.pop %v712
      %v714 = vmul.f32 %v711, %v713
      %v716 = vlaneseq
      %v717 = vshrl.u32 %v716, 7
      %v718 = vsub.s32 0, %v717
      %v719 = vrot.slane %v696, %v718
      %v721 = vmul.f32 %v714, %v719
      %v723 = vlaneseq
      %v724 = vshrl.u32 %v723, 7
      %v725 = vsub.s32 0, %v724
      %v726 = vrot.slane %v697, %v725
      %v728 = vadd.f32 %v721, %v726
      %v729 = vlaneseq
      %v730 = vand.u32 %v729, 127
      %vm731 = vcmp.lt.s32.totalorder %v730, 5
      %v732 = vsel %vm731, 0.0, -1e+09
      %v733 = vld [vmem:[%s5] sm:$0x1]
      %v734 = vld [vmem:[%s6] sm:$0x1]
      %v735 = vsel %vm698, %v728, 0.0
      %736 = vadd.xlane.f32.xlu0 %v735
      %v737 = vpop.xlane.xlu0 %736
      %v738 = vmul.f32 %v737, %v702
      %v739 = vmul.f32 %v728, %v728
      %v740 = vsel %vm698, %v739, 0.0
      %741 = vadd.xlane.f32.xlu0 %v740
      %v742 = vpop.xlane.xlu0 %741
      %v743 = vmul.f32 %v742, %v702
      %v744 = vmul.f32 %v738, %v738
      %v745 = vsub.f32 %v743, %v744
      %v746 = vsub.f32 %v728, %v738
      %v747 = vadd.f32 %v745, 1e-05
      %v748 = vrsqrt.pop %v747
      %v749 = vmul.f32 %v746, %v748
      %v750 = vlaneseq
      %v751 = vshrl.u32 %v750, 7
      %v752 = vsub.s32 0, %v751
      %v753 = vrot.slane %v733, %v752
      %v754 = vmul.f32 %v749, %v753
      %v755 = vlaneseq
      %v756 = vshrl.u32 %v755, 7
      %v757 = vsub.s32 0, %v756
      %v758 = vrot.slane %v734, %v757
      %v759 = vadd.f32 %v754, %v758
      %v760 = vpack.c.bf16 %v759, %v759
      %v761 = vld [vmem:[%s7] sm:$0xf]
      %v762 = vld [vmem:[%s7 + $0x4] sm:$0xf]
      %v763 = vld [vmem:[%s7 + $0x8] sm:$0xf]
      %v764 = vld [vmem:[%s7 + $0xc] sm:$0xf]
      %v765 = vld [vmem:[%s8] sm:$0x1]
      %v766 = vlaneseq
      %v767 = vshrl.u32 %v766, 7
      %v768 = vsub.s32 0, %v767
      %v769 = vrot.slane %v765, %v768
      %v774 = vunpack.c.l.b16 %v761
      %v775 = vunpack.c.l.b16 %v762
      %v776 = vunpack.c.l.b16 %v763
      %v777 = vunpack.c.l.b16 %v764
      %v778 = vpack.c.b16 %v775, %v774
      %v779 = vpack.c.b16 %v777, %v776
      %v783 = vsel %vm698, %v760, 0
      %785 = vmatprep.subr.bf16.mxu0 0
      %786 = vmatpush1.bf16.msra.mxu0 0
      %787 = vmatprep.subr.bf16.mxu0 0
      %788 = vmatpush1.bf16.msra.mxu0 0
      %789 = vmatprep.subr.bf16.mxu0 0
      %790 = vmatpush1.bf16.msra.mxu0 0
      %791 = vmatprep.subr.bf16.mxu0 0
      %792 = vmatpush1.bf16.msra.mxu0 0
      %793 = vmatprep.subr.bf16.mxu0 0
      %794 = vmatpush1.bf16.msra.mxu0 0
      %795 = vmatprep.subr.bf16.mxu0 0
      %796 = vmatpush1.bf16.msra.mxu0 0
      %797 = vmatprep.subr.bf16.mxu0 0
      %798 = vmatpush1.bf16.msra.mxu0 %v779
      %799 = vmatprep.subr.bf16.mxu0 0
      %800 = vmatpush1.bf16.msra.mxu0 %v778
      %801 = vmatprep.subr.bf16.mxu0 0
      %802 = vmatpush2.bf16.msra.mxu0 0
      %803 = vmatprep.subr.bf16.mxu0 0
      %804 = vmatpush2.bf16.msra.mxu0 0
      %805 = vmatprep.subr.bf16.mxu0 0
      %806 = vmatpush2.bf16.msra.mxu0 0
      %807 = vmatprep.subr.bf16.mxu0 0
      %808 = vmatpush2.bf16.msra.mxu0 0
      %809 = vmatprep.subr.bf16.mxu0 0
      %810 = vmatpush2.bf16.msra.mxu0 0
      %811 = vmatprep.subr.bf16.mxu0 0
      %812 = vmatpush2.bf16.msra.mxu0 0
      %813 = vmatprep.subr.bf16.mxu0 0
      %814 = vmatpush2.bf16.msra.mxu0 0
      %815 = vmatprep.subr.bf16.mxu0 0
      %816 = vmatpush2.bf16.msra.mxu0 0
      %817 = vmatprep.mubr.bf16.mxu0 0
      %818 = vmatmul.mubr.bf16.gmra.mxu0 %v783
      %v819 = vpop.f32.mrf.mxu0
      %v820 = vadd.f32 %v769, %v819
      %v821 = vpop.f32.mrf.mxu0
      %v822 = vpop.f32.mrf.mxu0
      %v823 = vpop.f32.mrf.mxu0
      %824 = vdwg.mxu0
      %v825 = vmul.f32 %v820, 0.35355338
      %v826 = vpack.c.bf16 %v825, %v825
      %v827 = vpack.c.bf16 %v820, %v820
      %829 = vrot.lane.b32.xlu0 %v827, 96
      %v830 = vpop.permute.xlu0 %829
      %vm831 = vcmask 64512
      %v833 = vsel %vm831, %v826, 0
      %v836 = vsel %vm831, %v830, 0
      %838 = vmatprep.subr.bf16.mxu0 0
      %839 = vmatpush1.bf16.xpose.msra.mxu0 0
      %840 = vmatprep.subr.bf16.mxu0 0
      %841 = vmatpush1.bf16.xpose.msra.mxu0 0
      %842 = vmatprep.subr.bf16.mxu0 0
      %843 = vmatpush1.bf16.xpose.msra.mxu0 0
      %844 = vmatprep.subr.bf16.mxu0 0
      %845 = vmatpush1.bf16.xpose.msra.mxu0 0
      %846 = vmatprep.subr.bf16.mxu0 0
      %847 = vmatpush1.bf16.xpose.msra.mxu0 0
      %848 = vmatprep.subr.bf16.mxu0 0
      %849 = vmatpush1.bf16.xpose.msra.mxu0 0
      %850 = vmatprep.subr.bf16.mxu0 0
      %851 = vmatpush1.bf16.xpose.msra.mxu0 0
      %852 = vmatprep.subr.bf16.mxu0 0
      %853 = vmatpush1.bf16.xpose.msra.mxu0 %v836
      %854 = vmatprep.subr.bf16.mxu0 0
      %855 = vmatpush2.bf16.xpose.msra.mxu0 0
      %856 = vmatprep.subr.bf16.mxu0 0
      %857 = vmatpush2.bf16.xpose.msra.mxu0 0
      %858 = vmatprep.subr.bf16.mxu0 0
      %859 = vmatpush2.bf16.xpose.msra.mxu0 0
      %860 = vmatprep.subr.bf16.mxu0 0
      %861 = vmatpush2.bf16.xpose.msra.mxu0 0
      %862 = vmatprep.subr.bf16.mxu0 0
      %863 = vmatpush2.bf16.xpose.msra.mxu0 0
      %864 = vmatprep.subr.bf16.mxu0 0
      %865 = vmatpush2.bf16.xpose.msra.mxu0 0
      %866 = vmatprep.subr.bf16.mxu0 0
      %867 = vmatpush2.bf16.xpose.msra.mxu0 0
      %868 = vmatprep.subr.bf16.mxu0 0
      %869 = vmatpush2.bf16.xpose.msra.mxu0 0
      %870 = vmatprep.mubr.bf16.mxu0 0
      %871 = vmatmul.mubr.bf16.gmra.mxu0 %v833
      %v872 = vpop.f32.mrf.mxu0
      %v873 = vadd.f32 %v732, %v872
      %v874 = vpop.f32.mrf.mxu0
      %v875 = vpop.f32.mrf.mxu0
      %v876 = vpop.f32.mrf.mxu0
      %877 = vdwg.mxu0
      %v878 = vsel %vm831, %v873, -inf
      %879 = vmax.xlane.f32.xlu0 %v878
      %v880 = vpop.xlane.xlu0 %879
      %v881 = vsub.f32 %v873, %v880
      %v882 = vmul.f32 %v881, 1.442695
      %v883 = vpow.pop %v882
      %v884 = vsel %vm831, %v883, 0.0
      %885 = vadd.xlane.f32.xlu0 %v884
      %v886 = vpop.xlane.xlu0 %885
      %v887 = vrcp.pop %v886
      %v888 = vmul.f32 %v883, %v887
      %v889 = vpack.c.bf16 %v888, %v888
      %890 = vrot.lane.b32.xlu0 %v827, 64
      %v891 = vpop.permute.xlu0 %890
      %v893 = vsel %vm831, %v889, 0
      %vm895 = vcmask 1043456
      %v897 = vsel %vm895, %v891, 0
      %899 = vmatprep.subr.bf16.mxu0 0
      %900 = vmatpush1.bf16.msra.mxu0 0
      %901 = vmatprep.subr.bf16.mxu0 0
      %902 = vmatpush1.bf16.msra.mxu0 0
      %903 = vmatprep.subr.bf16.mxu0 0
      %904 = vmatpush1.bf16.msra.mxu0 0
      %905 = vmatprep.subr.bf16.mxu0 0
      %906 = vmatpush1.bf16.msra.mxu0 0
      %907 = vmatprep.subr.bf16.mxu0 0
      %908 = vmatpush1.bf16.msra.mxu0 0
      %909 = vmatprep.subr.bf16.mxu0 0
      %910 = vmatpush1.bf16.msra.mxu0 0
      %911 = vmatprep.subr.bf16.mxu0 0
      %912 = vmatpush1.bf16.msra.mxu0 0
      %913 = vmatprep.subr.bf16.mxu0 0
      %914 = vmatpush1.bf16.msra.mxu0 %v897
      %915 = vmatprep.subr.bf16.mxu0 0
      %916 = vmatpush2.bf16.msra.mxu0 0
      %917 = vmatprep.subr.bf16.mxu0 0
      %918 = vmatpush2.bf16.msra.mxu0 0
      %919 = vmatprep.subr.bf16.mxu0 0
      %920 = vmatpush2.bf16.msra.mxu0 0
      %921 = vmatprep.subr.bf16.mxu0 0
      %922 = vmatpush2.bf16.msra.mxu0 0
      %923 = vmatprep.subr.bf16.mxu0 0
      %924 = vmatpush2.bf16.msra.mxu0 0
      %925 = vmatprep.subr.bf16.mxu0 0
      %926 = vmatpush2.bf16.msra.mxu0 0
      %927 = vmatprep.subr.bf16.mxu0 0
      %928 = vmatpush2.bf16.msra.mxu0 0
      %929 = vmatprep.subr.bf16.mxu0 0
      %930 = vmatpush2.bf16.msra.mxu0 0
      %931 = vmatprep.mubr.bf16.mxu0 0
      %932 = vmatmul.mubr.bf16.gmra.mxu0 %v893
      %v933 = vpop.f32.mrf.mxu0
      %v934 = vadd.f32 0.0, %v933
      %v935 = vpop.f32.mrf.mxu0
      %v936 = vpop.f32.mrf.mxu0
      %v937 = vpop.f32.mrf.mxu0
      %938 = vdwg.mxu0
      %940 = vrot.lane.b32.xlu0 %v826, 120
      %v941 = vpop.permute.xlu0 %940
      %942 = vrot.lane.b32.xlu0 %v827, 88
      %v943 = vpop.permute.xlu0 %942
      %v945 = vsel %vm831, %v941, 0
      %v948 = vsel %vm831, %v943, 0
      %950 = vmatprep.subr.bf16.mxu0 0
      %951 = vmatpush1.bf16.xpose.msra.mxu0 0
      %952 = vmatprep.subr.bf16.mxu0 0
      %953 = vmatpush1.bf16.xpose.msra.mxu0 0
      %954 = vmatprep.subr.bf16.mxu0 0
      %955 = vmatpush1.bf16.xpose.msra.mxu0 0
      %956 = vmatprep.subr.bf16.mxu0 0
      %957 = vmatpush1.bf16.xpose.msra.mxu0 0
      %958 = vmatprep.subr.bf16.mxu0 0
      %959 = vmatpush1.bf16.xpose.msra.mxu0 0
      %960 = vmatprep.subr.bf16.mxu0 0
      %961 = vmatpush1.bf16.xpose.msra.mxu0 0
      %962 = vmatprep.subr.bf16.mxu0 0
      %963 = vmatpush1.bf16.xpose.msra.mxu0 0
      %964 = vmatprep.subr.bf16.mxu0 0
      %965 = vmatpush1.bf16.xpose.msra.mxu0 %v948
      %966 = vmatprep.subr.bf16.mxu0 0
      %967 = vmatpush2.bf16.xpose.msra.mxu0 0
      %968 = vmatprep.subr.bf16.mxu0 0
      %969 = vmatpush2.bf16.xpose.msra.mxu0 0
      %970 = vmatprep.subr.bf16.mxu0 0
      %971 = vmatpush2.bf16.xpose.msra.mxu0 0
      %972 = vmatprep.subr.bf16.mxu0 0
      %973 = vmatpush2.bf16.xpose.msra.mxu0 0
      %974 = vmatprep.subr.bf16.mxu0 0
      %975 = vmatpush2.bf16.xpose.msra.mxu0 0
      %976 = vmatprep.subr.bf16.mxu0 0
      %977 = vmatpush2.bf16.xpose.msra.mxu0 0
      %978 = vmatprep.subr.bf16.mxu0 0
      %979 = vmatpush2.bf16.xpose.msra.mxu0 0
      %980 = vmatprep.subr.bf16.mxu0 0
      %981 = vmatpush2.bf16.xpose.msra.mxu0 0
      %982 = vmatprep.mubr.bf16.mxu0 0
      %983 = vmatmul.mubr.bf16.gmra.mxu0 %v945
      %v984 = vpop.f32.mrf.mxu0
      %v985 = vadd.f32 %v732, %v984
      %v986 = vpop.f32.mrf.mxu0
      %v987 = vpop.f32.mrf.mxu0
      %v988 = vpop.f32.mrf.mxu0
      %989 = vdwg.mxu0
      %v990 = vsel %vm831, %v985, -inf
      %991 = vmax.xlane.f32.xlu0 %v990
      %v992 = vpop.xlane.xlu0 %991
      %v993 = vsub.f32 %v985, %v992
      %v994 = vmul.f32 %v993, 1.442695
      %v995 = vpow.pop %v994
      %v996 = vsel %vm831, %v995, 0.0
      %997 = vadd.xlane.f32.xlu0 %v996
      %v998 = vpop.xlane.xlu0 %997
      %v999 = vrcp.pop %v998
      %v1000 = vmul.f32 %v995, %v999
      %v1001 = vpack.c.bf16 %v1000, %v1000
      %1002 = vrot.lane.b32.xlu0 %v827, 56
      %v1003 = vpop.permute.xlu0 %1002
      %v1005 = vsel %vm831, %v1001, 0
      %v1008 = vsel %vm895, %v1003, 0
      %1010 = vmatprep.subr.bf16.mxu0 0
      %1011 = vmatpush1.bf16.msra.mxu0 0
      %1012 = vmatprep.subr.bf16.mxu0 0
      %1013 = vmatpush1.bf16.msra.mxu0 0
      %1014 = vmatprep.subr.bf16.mxu0 0
      %1015 = vmatpush1.bf16.msra.mxu0 0
      %1016 = vmatprep.subr.bf16.mxu0 0
      %1017 = vmatpush1.bf16.msra.mxu0 0
      %1018 = vmatprep.subr.bf16.mxu0 0
      %1019 = vmatpush1.bf16.msra.mxu0 0
      %1020 = vmatprep.subr.bf16.mxu0 0
      %1021 = vmatpush1.bf16.msra.mxu0 0
      %1022 = vmatprep.subr.bf16.mxu0 0
      %1023 = vmatpush1.bf16.msra.mxu0 0
      %1024 = vmatprep.subr.bf16.mxu0 0
      %1025 = vmatpush1.bf16.msra.mxu0 %v1008
      %1026 = vmatprep.subr.bf16.mxu0 0
      %1027 = vmatpush2.bf16.msra.mxu0 0
      %1028 = vmatprep.subr.bf16.mxu0 0
      %1029 = vmatpush2.bf16.msra.mxu0 0
      %1030 = vmatprep.subr.bf16.mxu0 0
      %1031 = vmatpush2.bf16.msra.mxu0 0
      %1032 = vmatprep.subr.bf16.mxu0 0
      %1033 = vmatpush2.bf16.msra.mxu0 0
      %1034 = vmatprep.subr.bf16.mxu0 0
      %1035 = vmatpush2.bf16.msra.mxu0 0
      %1036 = vmatprep.subr.bf16.mxu0 0
      %1037 = vmatpush2.bf16.msra.mxu0 0
      %1038 = vmatprep.subr.bf16.mxu0 0
      %1039 = vmatpush2.bf16.msra.mxu0 0
      %1040 = vmatprep.subr.bf16.mxu0 0
      %1041 = vmatpush2.bf16.msra.mxu0 0
      %1042 = vmatprep.mubr.bf16.mxu0 0
      %1043 = vmatmul.mubr.bf16.gmra.mxu0 %v1005
      %v1044 = vpop.f32.mrf.mxu0
      %v1045 = vadd.f32 0.0, %v1044
      %v1046 = vpop.f32.mrf.mxu0
      %v1047 = vpop.f32.mrf.mxu0
      %v1048 = vpop.f32.mrf.mxu0
      %1049 = vdwg.mxu0
      %1050 = vrot.lane.b32.xlu0 %v826, 112
      %v1051 = vpop.permute.xlu0 %1050
      %1052 = vrot.lane.b32.xlu0 %v827, 80
      %v1053 = vpop.permute.xlu0 %1052
      %v1055 = vsel %vm831, %v1051, 0
      %v1058 = vsel %vm831, %v1053, 0
      %1060 = vmatprep.subr.bf16.mxu0 0
      %1061 = vmatpush1.bf16.xpose.msra.mxu0 0
      %1062 = vmatprep.subr.bf16.mxu0 0
      %1063 = vmatpush1.bf16.xpose.msra.mxu0 0
      %1064 = vmatprep.subr.bf16.mxu0 0
      %1065 = vmatpush1.bf16.xpose.msra.mxu0 0
      %1066 = vmatprep.subr.bf16.mxu0 0
      %1067 = vmatpush1.bf16.xpose.msra.mxu0 0
      %1068 = vmatprep.subr.bf16.mxu0 0
      %1069 = vmatpush1.bf16.xpose.msra.mxu0 0
      %1070 = vmatprep.subr.bf16.mxu0 0
      %1071 = vmatpush1.bf16.xpose.msra.mxu0 0
      %1072 = vmatprep.subr.bf16.mxu0 0
      %1073 = vmatpush1.bf16.xpose.msra.mxu0 0
      %1074 = vmatprep.subr.bf16.mxu0 0
      %1075 = vmatpush1.bf16.xpose.msra.mxu0 %v1058
      %1076 = vmatprep.subr.bf16.mxu0 0
      %1077 = vmatpush2.bf16.xpose.msra.mxu0 0
      %1078 = vmatprep.subr.bf16.mxu0 0
      %1079 = vmatpush2.bf16.xpose.msra.mxu0 0
      %1080 = vmatprep.subr.bf16.mxu0 0
      %1081 = vmatpush2.bf16.xpose.msra.mxu0 0
      %1082 = vmatprep.subr.bf16.mxu0 0
      %1083 = vmatpush2.bf16.xpose.msra.mxu0 0
      %1084 = vmatprep.subr.bf16.mxu0 0
      %1085 = vmatpush2.bf16.xpose.msra.mxu0 0
      %1086 = vmatprep.subr.bf16.mxu0 0
      %1087 = vmatpush2.bf16.xpose.msra.mxu0 0
      %1088 = vmatprep.subr.bf16.mxu0 0
      %1089 = vmatpush2.bf16.xpose.msra.mxu0 0
      %1090 = vmatprep.subr.bf16.mxu0 0
      %1091 = vmatpush2.bf16.xpose.msra.mxu0 0
      %1092 = vmatprep.mubr.bf16.mxu0 0
      %1093 = vmatmul.mubr.bf16.gmra.mxu0 %v1055
      %v1094 = vpop.f32.mrf.mxu0
      %v1095 = vadd.f32 %v732, %v1094
      %v1096 = vpop.f32.mrf.mxu0
      %v1097 = vpop.f32.mrf.mxu0
      %v1098 = vpop.f32.mrf.mxu0
      %1099 = vdwg.mxu0
      %v1100 = vsel %vm831, %v1095, -inf
      %1101 = vmax.xlane.f32.xlu0 %v1100
      %v1102 = vpop.xlane.xlu0 %1101
      %v1103 = vsub.f32 %v1095, %v1102
      %v1104 = vmul.f32 %v1103, 1.442695
      %v1105 = vpow.pop %v1104
      %v1106 = vsel %vm831, %v1105, 0.0
      %1107 = vadd.xlane.f32.xlu0 %v1106
      %v1108 = vpop.xlane.xlu0 %1107
      %v1109 = vrcp.pop %v1108
      %v1110 = vmul.f32 %v1105, %v1109
      %v1111 = vpack.c.bf16 %v1110, %v1110
      %1112 = vrot.lane.b32.xlu0 %v827, 48
      %v1113 = vpop.permute.xlu0 %1112
      %v1115 = vsel %vm831, %v1111, 0
      %v1118 = vsel %vm895, %v1113, 0
      %1120 = vmatprep.subr.bf16.mxu0 0
      %1121 = vmatpush1.bf16.msra.mxu0 0
      %1122 = vmatprep.subr.bf16.mxu0 0
      %1123 = vmatpush1.bf16.msra.mxu0 0
      %1124 = vmatprep.subr.bf16.mxu0 0
      %1125 = vmatpush1.bf16.msra.mxu0 0
      %1126 = vmatprep.subr.bf16.mxu0 0
      %1127 = vmatpush1.bf16.msra.mxu0 0
      %1128 = vmatprep.subr.bf16.mxu0 0
      %1129 = vmatpush1.bf16.msra.mxu0 0
      %1130 = vmatprep.subr.bf16.mxu0 0
      %1131 = vmatpush1.bf16.msra.mxu0 0
      %1132 = vmatprep.subr.bf16.mxu0 0
      %1133 = vmatpush1.bf16.msra.mxu0 0
      %1134 = vmatprep.subr.bf16.mxu0 0
      %1135 = vmatpush1.bf16.msra.mxu0 %v1118
      %1136 = vmatprep.subr.bf16.mxu0 0
      %1137 = vmatpush2.bf16.msra.mxu0 0
      %1138 = vmatprep.subr.bf16.mxu0 0
      %1139 = vmatpush2.bf16.msra.mxu0 0
      %1140 = vmatprep.subr.bf16.mxu0 0
      %1141 = vmatpush2.bf16.msra.mxu0 0
      %1142 = vmatprep.subr.bf16.mxu0 0
      %1143 = vmatpush2.bf16.msra.mxu0 0
      %1144 = vmatprep.subr.bf16.mxu0 0
      %1145 = vmatpush2.bf16.msra.mxu0 0
      %1146 = vmatprep.subr.bf16.mxu0 0
      %1147 = vmatpush2.bf16.msra.mxu0 0
      %1148 = vmatprep.subr.bf16.mxu0 0
      %1149 = vmatpush2.bf16.msra.mxu0 0
      %1150 = vmatprep.subr.bf16.mxu0 0
      %1151 = vmatpush2.bf16.msra.mxu0 0
      %1152 = vmatprep.mubr.bf16.mxu0 0
      %1153 = vmatmul.mubr.bf16.gmra.mxu0 %v1115
      %v1154 = vpop.f32.mrf.mxu0
      %v1155 = vadd.f32 0.0, %v1154
      %v1156 = vpop.f32.mrf.mxu0
      %v1157 = vpop.f32.mrf.mxu0
      %v1158 = vpop.f32.mrf.mxu0
      %1159 = vdwg.mxu0
      %1160 = vrot.lane.b32.xlu0 %v826, 104
      %v1161 = vpop.permute.xlu0 %1160
      %1162 = vrot.lane.b32.xlu0 %v827, 72
      %v1163 = vpop.permute.xlu0 %1162
      %v1165 = vsel %vm831, %v1161, 0
      %v1168 = vsel %vm831, %v1163, 0
      %1170 = vmatprep.subr.bf16.mxu0 0
      %1171 = vmatpush1.bf16.xpose.msra.mxu0 0
      %1172 = vmatprep.subr.bf16.mxu0 0
      %1173 = vmatpush1.bf16.xpose.msra.mxu0 0
      %1174 = vmatprep.subr.bf16.mxu0 0
      %1175 = vmatpush1.bf16.xpose.msra.mxu0 0
      %1176 = vmatprep.subr.bf16.mxu0 0
      %1177 = vmatpush1.bf16.xpose.msra.mxu0 0
      %1178 = vmatprep.subr.bf16.mxu0 0
      %1179 = vmatpush1.bf16.xpose.msra.mxu0 0
      %1180 = vmatprep.subr.bf16.mxu0 0
      %1181 = vmatpush1.bf16.xpose.msra.mxu0 0
      %1182 = vmatprep.subr.bf16.mxu0 0
      %1183 = vmatpush1.bf16.xpose.msra.mxu0 0
      %1184 = vmatprep.subr.bf16.mxu0 0
      %1185 = vmatpush1.bf16.xpose.msra.mxu0 %v1168
      %1186 = vmatprep.subr.bf16.mxu0 0
      %1187 = vmatpush2.bf16.xpose.msra.mxu0 0
      %1188 = vmatprep.subr.bf16.mxu0 0
      %1189 = vmatpush2.bf16.xpose.msra.mxu0 0
      %1190 = vmatprep.subr.bf16.mxu0 0
      %1191 = vmatpush2.bf16.xpose.msra.mxu0 0
      %1192 = vmatprep.subr.bf16.mxu0 0
      %1193 = vmatpush2.bf16.xpose.msra.mxu0 0
      %1194 = vmatprep.subr.bf16.mxu0 0
      %1195 = vmatpush2.bf16.xpose.msra.mxu0 0
      %1196 = vmatprep.subr.bf16.mxu0 0
      %1197 = vmatpush2.bf16.xpose.msra.mxu0 0
      %1198 = vmatprep.subr.bf16.mxu0 0
      %1199 = vmatpush2.bf16.xpose.msra.mxu0 0
      %1200 = vmatprep.subr.bf16.mxu0 0
      %1201 = vmatpush2.bf16.xpose.msra.mxu0 0
      %1202 = vmatprep.mubr.bf16.mxu0 0
      %1203 = vmatmul.mubr.bf16.gmra.mxu0 %v1165
      %v1204 = vpop.f32.mrf.mxu0
      %v1205 = vadd.f32 %v732, %v1204
      %v1206 = vpop.f32.mrf.mxu0
      %v1207 = vpop.f32.mrf.mxu0
      %v1208 = vpop.f32.mrf.mxu0
      %1209 = vdwg.mxu0
      %v1210 = vsel %vm831, %v1205, -inf
      %1211 = vmax.xlane.f32.xlu0 %v1210
      %v1212 = vpop.xlane.xlu0 %1211
      %v1213 = vsub.f32 %v1205, %v1212
      %v1214 = vmul.f32 %v1213, 1.442695
      %v1215 = vpow.pop %v1214
      %v1216 = vsel %vm831, %v1215, 0.0
      %1217 = vadd.xlane.f32.xlu0 %v1216
      %v1218 = vpop.xlane.xlu0 %1217
      %v1219 = vrcp.pop %v1218
      %v1220 = vmul.f32 %v1215, %v1219
      %v1221 = vpack.c.bf16 %v1220, %v1220
      %1222 = vrot.lane.b32.xlu0 %v827, 40
      %v1223 = vpop.permute.xlu0 %1222
      %v1225 = vsel %vm831, %v1221, 0
      %v1228 = vsel %vm895, %v1223, 0
      %1230 = vmatprep.subr.bf16.mxu0 0
      %1231 = vmatpush1.bf16.msra.mxu0 0
      %1232 = vmatprep.subr.bf16.mxu0 0
      %1233 = vmatpush1.bf16.msra.mxu0 0
      %1234 = vmatprep.subr.bf16.mxu0 0
      %1235 = vmatpush1.bf16.msra.mxu0 0
      %1236 = vmatprep.subr.bf16.mxu0 0
      %1237 = vmatpush1.bf16.msra.mxu0 0
      %1238 = vmatprep.subr.bf16.mxu0 0
      %1239 = vmatpush1.bf16.msra.mxu0 0
      %1240 = vmatprep.subr.bf16.mxu0 0
      %1241 = vmatpush1.bf16.msra.mxu0 0
      %1242 = vmatprep.subr.bf16.mxu0 0
      %1243 = vmatpush1.bf16.msra.mxu0 0
      %1244 = vmatprep.subr.bf16.mxu0 0
      %1245 = vmatpush1.bf16.msra.mxu0 %v1228
      %1246 = vmatprep.subr.bf16.mxu0 0
      %1247 = vmatpush2.bf16.msra.mxu0 0
      %1248 = vmatprep.subr.bf16.mxu0 0
      %1249 = vmatpush2.bf16.msra.mxu0 0
      %1250 = vmatprep.subr.bf16.mxu0 0
      %1251 = vmatpush2.bf16.msra.mxu0 0
      %1252 = vmatprep.subr.bf16.mxu0 0
      %1253 = vmatpush2.bf16.msra.mxu0 0
      %1254 = vmatprep.subr.bf16.mxu0 0
      %1255 = vmatpush2.bf16.msra.mxu0 0
      %1256 = vmatprep.subr.bf16.mxu0 0
      %1257 = vmatpush2.bf16.msra.mxu0 0
      %1258 = vmatprep.subr.bf16.mxu0 0
      %1259 = vmatpush2.bf16.msra.mxu0 0
      %1260 = vmatprep.subr.bf16.mxu0 0
      %1261 = vmatpush2.bf16.msra.mxu0 0
      %1262 = vmatprep.mubr.bf16.mxu0 0
      %1263 = vmatmul.mubr.bf16.gmra.mxu0 %v1225
      %v1264 = vpop.f32.mrf.mxu0
      %v1265 = vadd.f32 0.0, %v1264
      %v1266 = vpop.f32.mrf.mxu0
      %v1267 = vpop.f32.mrf.mxu0
      %v1268 = vpop.f32.mrf.mxu0
      %1269 = vdwg.mxu0
      %1271 = vrot.lane.b32.xlu0 %v1045, 8
      %v1272 = vpop.permute.xlu0 %1271
      %1275 = vrot.lane.b32.xlu0 %v1155, 16
      %v1276 = vpop.permute.xlu0 %1275
      %1279 = vrot.lane.b32.xlu0 %v1265, 24
      %v1280 = vpop.permute.xlu0 %1279
      %v1282 = vsel %vm831, %v934, %v1272
      %vm1283 = vcmask 130048
      %v1284 = vsel %vm1283, %v1282, %v1276
      %vm1285 = vcmask 195584
      %v1286 = vsel %vm1285, %v1284, %v1280
      %v1287 = vpack.c.bf16 %v1286, %v1286
      %v1288 = vld [vmem:[%s9] sm:$0xf]
      %v1289 = vld [vmem:[%s9 + $0x4] sm:$0xf]
      %v1290 = vld [vmem:[%s9 + $0x8] sm:$0xf]
      %v1291 = vld [vmem:[%s9 + $0xc] sm:$0xf]
      %v1292 = vld [vmem:[%s10] sm:$0x1]
      %v1293 = vlaneseq
      %v1294 = vshrl.u32 %v1293, 7
      %v1295 = vsub.s32 0, %v1294
      %v1296 = vrot.slane %v1292, %v1295
      %v1301 = vunpack.c.l.b16 %v1288
      %v1302 = vunpack.c.l.b16 %v1289
      %v1303 = vunpack.c.l.b16 %v1290
      %v1304 = vunpack.c.l.b16 %v1291
      %v1305 = vpack.c.b16 %v1302, %v1301
      %v1306 = vpack.c.b16 %v1304, %v1303
      %v1310 = vsel %vm698, %v1287, 0
      %1312 = vmatprep.subr.bf16.mxu0 0
      %1313 = vmatpush1.bf16.msra.mxu0 0
      %1314 = vmatprep.subr.bf16.mxu0 0
      %1315 = vmatpush1.bf16.msra.mxu0 0
      %1316 = vmatprep.subr.bf16.mxu0 0
      %1317 = vmatpush1.bf16.msra.mxu0 0
      %1318 = vmatprep.subr.bf16.mxu0 0
      %1319 = vmatpush1.bf16.msra.mxu0 0
      %1320 = vmatprep.subr.bf16.mxu0 0
      %1321 = vmatpush1.bf16.msra.mxu0 0
      %1322 = vmatprep.subr.bf16.mxu0 0
      %1323 = vmatpush1.bf16.msra.mxu0 0
      %1324 = vmatprep.subr.bf16.mxu0 0
      %1325 = vmatpush1.bf16.msra.mxu0 %v1306
      %1326 = vmatprep.subr.bf16.mxu0 0
      %1327 = vmatpush1.bf16.msra.mxu0 %v1305
      %1328 = vmatprep.subr.bf16.mxu0 0
      %1329 = vmatpush2.bf16.msra.mxu0 0
      %1330 = vmatprep.subr.bf16.mxu0 0
      %1331 = vmatpush2.bf16.msra.mxu0 0
      %1332 = vmatprep.subr.bf16.mxu0 0
      %1333 = vmatpush2.bf16.msra.mxu0 0
      %1334 = vmatprep.subr.bf16.mxu0 0
      %1335 = vmatpush2.bf16.msra.mxu0 0
      %1336 = vmatprep.subr.bf16.mxu0 0
      %1337 = vmatpush2.bf16.msra.mxu0 0
      %1338 = vmatprep.subr.bf16.mxu0 0
      %1339 = vmatpush2.bf16.msra.mxu0 0
      %1340 = vmatprep.subr.bf16.mxu0 0
      %1341 = vmatpush2.bf16.msra.mxu0 0
      %1342 = vmatprep.subr.bf16.mxu0 0
      %1343 = vmatpush2.bf16.msra.mxu0 0
      %1344 = vmatprep.mubr.bf16.mxu0 0
      %1345 = vmatmul.mubr.bf16.gmra.mxu0 %v1310
      %v1346 = vpop.f32.mrf.mxu0
      %v1347 = vadd.f32 %v1296, %v1346
      %v1348 = vpop.f32.mrf.mxu0
      %v1349 = vpop.f32.mrf.mxu0
      %v1350 = vpop.f32.mrf.mxu0
      %1351 = vdwg.mxu0
      %v1352 = vadd.f32 %v1347, %v728
      %v1353 = vld [vmem:[%s11] sm:$0x1]
      %v1354 = vld [vmem:[%s12] sm:$0x1]
      %v1355 = vsel %vm698, %v1352, 0.0
      %1356 = vadd.xlane.f32.xlu0 %v1355
      %v1357 = vpop.xlane.xlu0 %1356
      %v1358 = vmul.f32 %v1357, %v702
      %v1359 = vmul.f32 %v1352, %v1352
      %v1360 = vsel %vm698, %v1359, 0.0
      %1361 = vadd.xlane.f32.xlu0 %v1360
      %v1362 = vpop.xlane.xlu0 %1361
      %v1363 = vmul.f32 %v1362, %v702
      %v1364 = vmul.f32 %v1358, %v1358
      %v1365 = vsub.f32 %v1363, %v1364
      %v1366 = vsub.f32 %v1352, %v1358
      %v1367 = vadd.f32 %v1365, 1e-05
      %v1368 = vrsqrt.pop %v1367
      %v1369 = vmul.f32 %v1366, %v1368
      %v1370 = vlaneseq
      %v1371 = vshrl.u32 %v1370, 7
      %v1372 = vsub.s32 0, %v1371
      %v1373 = vrot.slane %v1353, %v1372
      %v1374 = vmul.f32 %v1369, %v1373
      %v1375 = vlaneseq
      %v1376 = vshrl.u32 %v1375, 7
      %v1377 = vsub.s32 0, %v1376
      %v1378 = vrot.slane %v1354, %v1377
      %v1379 = vadd.f32 %v1374, %v1378
      %v1380 = vpack.c.bf16 %v1379, %v1379
      %v1381 = vld [vmem:[%s13] sm:$0xf]
      %v1382 = vld [vmem:[%s13 + $0x4] sm:$0xf]
      %v1383 = vld [vmem:[%s13 + $0x8] sm:$0xf]
      %v1384 = vld [vmem:[%s13 + $0xc] sm:$0xf]
      %v1385 = vld [vmem:[%s14] sm:$0x1]
      %v1386 = vlaneseq
      %v1387 = vshrl.u32 %v1386, 7
      %v1388 = vsub.s32 0, %v1387
      %v1389 = vrot.slane %v1385, %v1388
      %v1394 = vunpack.c.l.b16 %v1381
      %v1395 = vunpack.c.l.b16 %v1382
      %v1396 = vunpack.c.l.b16 %v1383
      %v1397 = vunpack.c.l.b16 %v1384
      %v1398 = vpack.c.b16 %v1395, %v1394
      %v1399 = vpack.c.b16 %v1397, %v1396
      %v1403 = vsel %vm698, %v1380, 0
      %1405 = vmatprep.subr.bf16.mxu0 0
      %1406 = vmatpush1.bf16.msra.mxu0 0
      %1407 = vmatprep.subr.bf16.mxu0 0
      %1408 = vmatpush1.bf16.msra.mxu0 0
      %1409 = vmatprep.subr.bf16.mxu0 0
      %1410 = vmatpush1.bf16.msra.mxu0 0
      %1411 = vmatprep.subr.bf16.mxu0 0
      %1412 = vmatpush1.bf16.msra.mxu0 0
      %1413 = vmatprep.subr.bf16.mxu0 0
      %1414 = vmatpush1.bf16.msra.mxu0 0
      %1415 = vmatprep.subr.bf16.mxu0 0
      %1416 = vmatpush1.bf16.msra.mxu0 0
      %1417 = vmatprep.subr.bf16.mxu0 0
      %1418 = vmatpush1.bf16.msra.mxu0 %v1399
      %1419 = vmatprep.subr.bf16.mxu0 0
      %1420 = vmatpush1.bf16.msra.mxu0 %v1398
      %1421 = vmatprep.subr.bf16.mxu0 0
      %1422 = vmatpush2.bf16.msra.mxu0 0
      %1423 = vmatprep.subr.bf16.mxu0 0
      %1424 = vmatpush2.bf16.msra.mxu0 0
      %1425 = vmatprep.subr.bf16.mxu0 0
      %1426 = vmatpush2.bf16.msra.mxu0 0
      %1427 = vmatprep.subr.bf16.mxu0 0
      %1428 = vmatpush2.bf16.msra.mxu0 0
      %1429 = vmatprep.subr.bf16.mxu0 0
      %1430 = vmatpush2.bf16.msra.mxu0 0
      %1431 = vmatprep.subr.bf16.mxu0 0
      %1432 = vmatpush2.bf16.msra.mxu0 0
      %1433 = vmatprep.subr.bf16.mxu0 0
      %1434 = vmatpush2.bf16.msra.mxu0 0
      %1435 = vmatprep.subr.bf16.mxu0 0
      %1436 = vmatpush2.bf16.msra.mxu0 0
      %1437 = vmatprep.mubr.bf16.mxu0 0
      %1438 = vmatmul.mubr.bf16.gmra.mxu0 %v1403
      %v1439 = vpop.f32.mrf.mxu0
      %v1440 = vadd.f32 %v1389, %v1439
      %v1441 = vpop.f32.mrf.mxu0
      %v1442 = vpop.f32.mrf.mxu0
      %v1443 = vpop.f32.mrf.mxu0
      %1444 = vdwg.mxu0
      %v1445 = vmul.f32 %v1440, 1.702
      %v1446 = vxor.u32 %v1445, 2147483648
      %v1447 = vmul.f32 %v1446, 1.442695
      %v1448 = vpow.pop %v1447
      %v1449 = vadd.f32 %v1448, 1.0
      %v1450 = vrcp.pop %v1449
      %v1451 = vmul.f32 1.0, %v1450
      %v1452 = vmul.f32 %v1440, %v1451
      %v1453 = vpack.c.bf16 %v1452, %v1452
      %v1454 = vld [vmem:[%s15] sm:$0xf]
      %v1455 = vld [vmem:[%s15 + $0x4] sm:$0xf]
      %v1456 = vld [vmem:[%s15 + $0x8] sm:$0xf]
      %v1457 = vld [vmem:[%s15 + $0xc] sm:$0xf]
      %v1458 = vld [vmem:[%s15 + $0x10] sm:$0xf]
      %v1459 = vld [vmem:[%s15 + $0x14] sm:$0xf]
      %v1460 = vld [vmem:[%s15 + $0x18] sm:$0xf]
      %v1461 = vld [vmem:[%s15 + $0x1c] sm:$0xf]
      %v1462 = vld [vmem:[%s16] sm:$0x1]
      %v1463 = vlaneseq
      %v1464 = vshrl.u32 %v1463, 7
      %v1465 = vsub.s32 0, %v1464
      %v1466 = vrot.slane %v1462, %v1465
      %v1475 = vunpack.c.l.b16 %v1454
      %v1476 = vunpack.c.l.b16 %v1455
      %v1477 = vunpack.c.l.b16 %v1456
      %v1478 = vunpack.c.l.b16 %v1457
      %v1479 = vunpack.c.l.b16 %v1458
      %v1480 = vunpack.c.l.b16 %v1459
      %v1481 = vunpack.c.l.b16 %v1460
      %v1482 = vunpack.c.l.b16 %v1461
      %v1483 = vpack.c.b16 %v1476, %v1475
      %v1484 = vpack.c.b16 %v1478, %v1477
      %v1485 = vpack.c.b16 %v1480, %v1479
      %v1486 = vpack.c.b16 %v1482, %v1481
      %v1492 = vsel %vm652, %v1453, 0
      %1494 = vmatprep.subr.bf16.mxu0 0
      %1495 = vmatpush1.bf16.msra.mxu0 0
      %1496 = vmatprep.subr.bf16.mxu0 0
      %1497 = vmatpush1.bf16.msra.mxu0 0
      %1498 = vmatprep.subr.bf16.mxu0 0
      %1499 = vmatpush1.bf16.msra.mxu0 0
      %1500 = vmatprep.subr.bf16.mxu0 0
      %1501 = vmatpush1.bf16.msra.mxu0 0
      %1502 = vmatprep.subr.bf16.mxu0 0
      %1503 = vmatpush1.bf16.msra.mxu0 %v1486
      %1504 = vmatprep.subr.bf16.mxu0 0
      %1505 = vmatpush1.bf16.msra.mxu0 %v1485
      %1506 = vmatprep.subr.bf16.mxu0 0
      %1507 = vmatpush1.bf16.msra.mxu0 %v1484
      %1508 = vmatprep.subr.bf16.mxu0 0
      %1509 = vmatpush1.bf16.msra.mxu0 %v1483
      %1510 = vmatprep.subr.bf16.mxu0 0
      %1511 = vmatpush2.bf16.msra.mxu0 0
      %1512 = vmatprep.subr.bf16.mxu0 0
      %1513 = vmatpush2.bf16.msra.mxu0 0
      %1514 = vmatprep.subr.bf16.mxu0 0
      %1515 = vmatpush2.bf16.msra.mxu0 0
      %1516 = vmatprep.subr.bf16.mxu0 0
      %1517 = vmatpush2.bf16.msra.mxu0 0
      %1518 = vmatprep.subr.bf16.mxu0 0
      %1519 = vmatpush2.bf16.msra.mxu0 0
      %1520 = vmatprep.subr.bf16.mxu0 0
      %1521 = vmatpush2.bf16.msra.mxu0 0
      %1522 = vmatprep.subr.bf16.mxu0 0
      %1523 = vmatpush2.bf16.msra.mxu0 0
      %1524 = vmatprep.subr.bf16.mxu0 0
      %1525 = vmatpush2.bf16.msra.mxu0 0
      %1526 = vmatprep.mubr.bf16.mxu0 0
      %1527 = vmatmul.mubr.bf16.gmra.mxu0 %v1492
      %v1528 = vpop.f32.mrf.mxu0
      %v1529 = vadd.f32 %v1466, %v1528
      %v1530 = vpop.f32.mrf.mxu0
      %v1531 = vpop.f32.mrf.mxu0
      %v1532 = vpop.f32.mrf.mxu0
      %1533 = vdwg.mxu0
      %v1534 = vadd.f32 %v1529, %v1352
      %v1535 = vld [vmem:[%s5 + $0x1] sm:$0x1]
      %v1536 = vld [vmem:[%s6 + $0x1] sm:$0x1]
      %v1537 = vsel %vm698, %v1534, 0.0
      %1538 = vadd.xlane.f32.xlu0 %v1537
      %v1539 = vpop.xlane.xlu0 %1538
      %v1540 = vmul.f32 %v1539, %v702
      %v1541 = vmul.f32 %v1534, %v1534
      %v1542 = vsel %vm698, %v1541, 0.0
      %1543 = vadd.xlane.f32.xlu0 %v1542
      %v1544 = vpop.xlane.xlu0 %1543
      %v1545 = vmul.f32 %v1544, %v702
      %v1546 = vmul.f32 %v1540, %v1540
      %v1547 = vsub.f32 %v1545, %v1546
      %v1548 = vsub.f32 %v1534, %v1540
      %v1549 = vadd.f32 %v1547, 1e-05
      %v1550 = vrsqrt.pop %v1549
      %v1551 = vmul.f32 %v1548, %v1550
      %v1552 = vlaneseq
      %v1553 = vshrl.u32 %v1552, 7
      %v1554 = vsub.s32 0, %v1553
      %v1555 = vrot.slane %v1535, %v1554
      %v1556 = vmul.f32 %v1551, %v1555
      %v1557 = vlaneseq
      %v1558 = vshrl.u32 %v1557, 7
      %v1559 = vsub.s32 0, %v1558
      %v1560 = vrot.slane %v1536, %v1559
      %v1561 = vadd.f32 %v1556, %v1560
      %v1562 = vpack.c.bf16 %v1561, %v1561
      %s1563 = scalar_lea.vmem %s7, 16
      %v1564 = vld [vmem:[%s1563] sm:$0xf]
      %v1565 = vld [vmem:[%s1563 + $0x4] sm:$0xf]
      %v1566 = vld [vmem:[%s1563 + $0x8] sm:$0xf]
      %v1567 = vld [vmem:[%s1563 + $0xc] sm:$0xf]
      %v1568 = vld [vmem:[%s8 + $0x1] sm:$0x1]
      %v1569 = vlaneseq
      %v1570 = vshrl.u32 %v1569, 7
      %v1571 = vsub.s32 0, %v1570
      %v1572 = vrot.slane %v1568, %v1571
      %v1577 = vunpack.c.l.b16 %v1564
      %v1578 = vunpack.c.l.b16 %v1565
      %v1579 = vunpack.c.l.b16 %v1566
      %v1580 = vunpack.c.l.b16 %v1567
      %v1581 = vpack.c.b16 %v1578, %v1577
      %v1582 = vpack.c.b16 %v1580, %v1579
      %v1586 = vsel %vm698, %v1562, 0
      %1588 = vmatprep.subr.bf16.mxu0 0
      %1589 = vmatpush1.bf16.msra.mxu0 0
      %1590 = vmatprep.subr.bf16.mxu0 0
      %1591 = vmatpush1.bf16.msra.mxu0 0
      %1592 = vmatprep.subr.bf16.mxu0 0
      %1593 = vmatpush1.bf16.msra.mxu0 0
      %1594 = vmatprep.subr.bf16.mxu0 0
      %1595 = vmatpush1.bf16.msra.mxu0 0
      %1596 = vmatprep.subr.bf16.mxu0 0
      %1597 = vmatpush1.bf16.msra.mxu0 0
      %1598 = vmatprep.subr.bf16.mxu0 0
      %1599 = vmatpush1.bf16.msra.mxu0 0
      %1600 = vmatprep.subr.bf16.mxu0 0
      %1601 = vmatpush1.bf16.msra.mxu0 %v1582
      %1602 = vmatprep.subr.bf16.mxu0 0
      %1603 = vmatpush1.bf16.msra.mxu0 %v1581
      %1604 = vmatprep.subr.bf16.mxu0 0
      %1605 = vmatpush2.bf16.msra.mxu0 0
      %1606 = vmatprep.subr.bf16.mxu0 0
      %1607 = vmatpush2.bf16.msra.mxu0 0
      %1608 = vmatprep.subr.bf16.mxu0 0
      %1609 = vmatpush2.bf16.msra.mxu0 0
      %1610 = vmatprep.subr.bf16.mxu0 0
      %1611 = vmatpush2.bf16.msra.mxu0 0
      %1612 = vmatprep.subr.bf16.mxu0 0
      %1613 = vmatpush2.bf16.msra.mxu0 0
      %1614 = vmatprep.subr.bf16.mxu0 0
      %1615 = vmatpush2.bf16.msra.mxu0 0
      %1616 = vmatprep.subr.bf16.mxu0 0
      %1617 = vmatpush2.bf16.msra.mxu0 0
      %1618 = vmatprep.subr.bf16.mxu0 0
      %1619 = vmatpush2.bf16.msra.mxu0 0
      %1620 = vmatprep.mubr.bf16.mxu0 0
      %1621 = vmatmul.mubr.bf16.gmra.mxu0 %v1586
      %v1622 = vpop.f32.mrf.mxu0
      %v1623 = vadd.f32 %v1572, %v1622
      %v1624 = vpop.f32.mrf.mxu0
      %v1625 = vpop.f32.mrf.mxu0
      %v1626 = vpop.f32.mrf.mxu0
      %1627 = vdwg.mxu0
      %v1628 = vmul.f32 %v1623, 0.35355338
      %v1629 = vpack.c.bf16 %v1628, %v1628
      %v1630 = vpack.c.bf16 %v1623, %v1623
      %1632 = vrot.lane.b32.xlu0 %v1630, 96
      %v1633 = vpop.permute.xlu0 %1632
      %v1635 = vsel %vm831, %v1629, 0
      %v1638 = vsel %vm831, %v1633, 0
      %1640 = vmatprep.subr.bf16.mxu0 0
      %1641 = vmatpush1.bf16.xpose.msra.mxu0 0
      %1642 = vmatprep.subr.bf16.mxu0 0
      %1643 = vmatpush1.bf16.xpose.msra.mxu0 0
      %1644 = vmatprep.subr.bf16.mxu0 0
      %1645 = vmatpush1.bf16.xpose.msra.mxu0 0
      %1646 = vmatprep.subr.bf16.mxu0 0
      %1647 = vmatpush1.bf16.xpose.msra.mxu0 0
      %1648 = vmatprep.subr.bf16.mxu0 0
      %1649 = vmatpush1.bf16.xpose.msra.mxu0 0
      %1650 = vmatprep.subr.bf16.mxu0 0
      %1651 = vmatpush1.bf16.xpose.msra.mxu0 0
      %1652 = vmatprep.subr.bf16.mxu0 0
      %1653 = vmatpush1.bf16.xpose.msra.mxu0 0
      %1654 = vmatprep.subr.bf16.mxu0 0
      %1655 = vmatpush1.bf16.xpose.msra.mxu0 %v1638
      %1656 = vmatprep.subr.bf16.mxu0 0
      %1657 = vmatpush2.bf16.xpose.msra.mxu0 0
      %1658 = vmatprep.subr.bf16.mxu0 0
      %1659 = vmatpush2.bf16.xpose.msra.mxu0 0
      %1660 = vmatprep.subr.bf16.mxu0 0
      %1661 = vmatpush2.bf16.xpose.msra.mxu0 0
      %1662 = vmatprep.subr.bf16.mxu0 0
      %1663 = vmatpush2.bf16.xpose.msra.mxu0 0
      %1664 = vmatprep.subr.bf16.mxu0 0
      %1665 = vmatpush2.bf16.xpose.msra.mxu0 0
      %1666 = vmatprep.subr.bf16.mxu0 0
      %1667 = vmatpush2.bf16.xpose.msra.mxu0 0
      %1668 = vmatprep.subr.bf16.mxu0 0
      %1669 = vmatpush2.bf16.xpose.msra.mxu0 0
      %1670 = vmatprep.subr.bf16.mxu0 0
      %1671 = vmatpush2.bf16.xpose.msra.mxu0 0
      %1672 = vmatprep.mubr.bf16.mxu0 0
      %1673 = vmatmul.mubr.bf16.gmra.mxu0 %v1635
      %v1674 = vpop.f32.mrf.mxu0
      %v1675 = vadd.f32 %v732, %v1674
      %v1676 = vpop.f32.mrf.mxu0
      %v1677 = vpop.f32.mrf.mxu0
      %v1678 = vpop.f32.mrf.mxu0
      %1679 = vdwg.mxu0
      %v1680 = vsel %vm831, %v1675, -inf
      %1681 = vmax.xlane.f32.xlu0 %v1680
      %v1682 = vpop.xlane.xlu0 %1681
      %v1683 = vsub.f32 %v1675, %v1682
      %v1684 = vmul.f32 %v1683, 1.442695
      %v1685 = vpow.pop %v1684
      %v1686 = vsel %vm831, %v1685, 0.0
      %1687 = vadd.xlane.f32.xlu0 %v1686
      %v1688 = vpop.xlane.xlu0 %1687
      %v1689 = vrcp.pop %v1688
      %v1690 = vmul.f32 %v1685, %v1689
      %v1691 = vpack.c.bf16 %v1690, %v1690
      %1692 = vrot.lane.b32.xlu0 %v1630, 64
      %v1693 = vpop.permute.xlu0 %1692
      %v1695 = vsel %vm831, %v1691, 0
      %v1698 = vsel %vm895, %v1693, 0
      %1700 = vmatprep.subr.bf16.mxu0 0
      %1701 = vmatpush1.bf16.msra.mxu0 0
      %1702 = vmatprep.subr.bf16.mxu0 0
      %1703 = vmatpush1.bf16.msra.mxu0 0
      %1704 = vmatprep.subr.bf16.mxu0 0
      %1705 = vmatpush1.bf16.msra.mxu0 0
      %1706 = vmatprep.subr.bf16.mxu0 0
      %1707 = vmatpush1.bf16.msra.mxu0 0
      %1708 = vmatprep.subr.bf16.mxu0 0
      %1709 = vmatpush1.bf16.msra.mxu0 0
      %1710 = vmatprep.subr.bf16.mxu0 0
      %1711 = vmatpush1.bf16.msra.mxu0 0
      %1712 = vmatprep.subr.bf16.mxu0 0
      %1713 = vmatpush1.bf16.msra.mxu0 0
      %1714 = vmatprep.subr.bf16.mxu0 0
      %1715 = vmatpush1.bf16.msra.mxu0 %v1698
      %1716 = vmatprep.subr.bf16.mxu0 0
      %1717 = vmatpush2.bf16.msra.mxu0 0
      %1718 = vmatprep.subr.bf16.mxu0 0
      %1719 = vmatpush2.bf16.msra.mxu0 0
      %1720 = vmatprep.subr.bf16.mxu0 0
      %1721 = vmatpush2.bf16.msra.mxu0 0
      %1722 = vmatprep.subr.bf16.mxu0 0
      %1723 = vmatpush2.bf16.msra.mxu0 0
      %1724 = vmatprep.subr.bf16.mxu0 0
      %1725 = vmatpush2.bf16.msra.mxu0 0
      %1726 = vmatprep.subr.bf16.mxu0 0
      %1727 = vmatpush2.bf16.msra.mxu0 0
      %1728 = vmatprep.subr.bf16.mxu0 0
      %1729 = vmatpush2.bf16.msra.mxu0 0
      %1730 = vmatprep.subr.bf16.mxu0 0
      %1731 = vmatpush2.bf16.msra.mxu0 0
      %1732 = vmatprep.mubr.bf16.mxu0 0
      %1733 = vmatmul.mubr.bf16.gmra.mxu0 %v1695
      %v1734 = vpop.f32.mrf.mxu0
      %v1735 = vadd.f32 0.0, %v1734
      %v1736 = vpop.f32.mrf.mxu0
      %v1737 = vpop.f32.mrf.mxu0
      %v1738 = vpop.f32.mrf.mxu0
      %1739 = vdwg.mxu0
      %1741 = vrot.lane.b32.xlu0 %v1629, 120
      %v1742 = vpop.permute.xlu0 %1741
      %1743 = vrot.lane.b32.xlu0 %v1630, 88
      %v1744 = vpop.permute.xlu0 %1743
      %v1746 = vsel %vm831, %v1742, 0
      %v1749 = vsel %vm831, %v1744, 0
      %1751 = vmatprep.subr.bf16.mxu0 0
      %1752 = vmatpush1.bf16.xpose.msra.mxu0 0
      %1753 = vmatprep.subr.bf16.mxu0 0
      %1754 = vmatpush1.bf16.xpose.msra.mxu0 0
      %1755 = vmatprep.subr.bf16.mxu0 0
      %1756 = vmatpush1.bf16.xpose.msra.mxu0 0
      %1757 = vmatprep.subr.bf16.mxu0 0
      %1758 = vmatpush1.bf16.xpose.msra.mxu0 0
      %1759 = vmatprep.subr.bf16.mxu0 0
      %1760 = vmatpush1.bf16.xpose.msra.mxu0 0
      %1761 = vmatprep.subr.bf16.mxu0 0
      %1762 = vmatpush1.bf16.xpose.msra.mxu0 0
      %1763 = vmatprep.subr.bf16.mxu0 0
      %1764 = vmatpush1.bf16.xpose.msra.mxu0 0
      %1765 = vmatprep.subr.bf16.mxu0 0
      %1766 = vmatpush1.bf16.xpose.msra.mxu0 %v1749
      %1767 = vmatprep.subr.bf16.mxu0 0
      %1768 = vmatpush2.bf16.xpose.msra.mxu0 0
      %1769 = vmatprep.subr.bf16.mxu0 0
      %1770 = vmatpush2.bf16.xpose.msra.mxu0 0
      %1771 = vmatprep.subr.bf16.mxu0 0
      %1772 = vmatpush2.bf16.xpose.msra.mxu0 0
      %1773 = vmatprep.subr.bf16.mxu0 0
      %1774 = vmatpush2.bf16.xpose.msra.mxu0 0
      %1775 = vmatprep.subr.bf16.mxu0 0
      %1776 = vmatpush2.bf16.xpose.msra.mxu0 0
      %1777 = vmatprep.subr.bf16.mxu0 0
      %1778 = vmatpush2.bf16.xpose.msra.mxu0 0
      %1779 = vmatprep.subr.bf16.mxu0 0
      %1780 = vmatpush2.bf16.xpose.msra.mxu0 0
      %1781 = vmatprep.subr.bf16.mxu0 0
      %1782 = vmatpush2.bf16.xpose.msra.mxu0 0
      %1783 = vmatprep.mubr.bf16.mxu0 0
      %1784 = vmatmul.mubr.bf16.gmra.mxu0 %v1746
      %v1785 = vpop.f32.mrf.mxu0
      %v1786 = vadd.f32 %v732, %v1785
      %v1787 = vpop.f32.mrf.mxu0
      %v1788 = vpop.f32.mrf.mxu0
      %v1789 = vpop.f32.mrf.mxu0
      %1790 = vdwg.mxu0
      %v1791 = vsel %vm831, %v1786, -inf
      %1792 = vmax.xlane.f32.xlu0 %v1791
      %v1793 = vpop.xlane.xlu0 %1792
      %v1794 = vsub.f32 %v1786, %v1793
      %v1795 = vmul.f32 %v1794, 1.442695
      %v1796 = vpow.pop %v1795
      %v1797 = vsel %vm831, %v1796, 0.0
      %1798 = vadd.xlane.f32.xlu0 %v1797
      %v1799 = vpop.xlane.xlu0 %1798
      %v1800 = vrcp.pop %v1799
      %v1801 = vmul.f32 %v1796, %v1800
      %v1802 = vpack.c.bf16 %v1801, %v1801
      %1803 = vrot.lane.b32.xlu0 %v1630, 56
      %v1804 = vpop.permute.xlu0 %1803
      %v1806 = vsel %vm831, %v1802, 0
      %v1809 = vsel %vm895, %v1804, 0
      %1811 = vmatprep.subr.bf16.mxu0 0
      %1812 = vmatpush1.bf16.msra.mxu0 0
      %1813 = vmatprep.subr.bf16.mxu0 0
      %1814 = vmatpush1.bf16.msra.mxu0 0
      %1815 = vmatprep.subr.bf16.mxu0 0
      %1816 = vmatpush1.bf16.msra.mxu0 0
      %1817 = vmatprep.subr.bf16.mxu0 0
      %1818 = vmatpush1.bf16.msra.mxu0 0
      %1819 = vmatprep.subr.bf16.mxu0 0
      %1820 = vmatpush1.bf16.msra.mxu0 0
      %1821 = vmatprep.subr.bf16.mxu0 0
      %1822 = vmatpush1.bf16.msra.mxu0 0
      %1823 = vmatprep.subr.bf16.mxu0 0
      %1824 = vmatpush1.bf16.msra.mxu0 0
      %1825 = vmatprep.subr.bf16.mxu0 0
      %1826 = vmatpush1.bf16.msra.mxu0 %v1809
      %1827 = vmatprep.subr.bf16.mxu0 0
      %1828 = vmatpush2.bf16.msra.mxu0 0
      %1829 = vmatprep.subr.bf16.mxu0 0
      %1830 = vmatpush2.bf16.msra.mxu0 0
      %1831 = vmatprep.subr.bf16.mxu0 0
      %1832 = vmatpush2.bf16.msra.mxu0 0
      %1833 = vmatprep.subr.bf16.mxu0 0
      %1834 = vmatpush2.bf16.msra.mxu0 0
      %1835 = vmatprep.subr.bf16.mxu0 0
      %1836 = vmatpush2.bf16.msra.mxu0 0
      %1837 = vmatprep.subr.bf16.mxu0 0
      %1838 = vmatpush2.bf16.msra.mxu0 0
      %1839 = vmatprep.subr.bf16.mxu0 0
      %1840 = vmatpush2.bf16.msra.mxu0 0
      %1841 = vmatprep.subr.bf16.mxu0 0
      %1842 = vmatpush2.bf16.msra.mxu0 0
      %1843 = vmatprep.mubr.bf16.mxu0 0
      %1844 = vmatmul.mubr.bf16.gmra.mxu0 %v1806
      %v1845 = vpop.f32.mrf.mxu0
      %v1846 = vadd.f32 0.0, %v1845
      %v1847 = vpop.f32.mrf.mxu0
      %v1848 = vpop.f32.mrf.mxu0
      %v1849 = vpop.f32.mrf.mxu0
      %1850 = vdwg.mxu0
      %1851 = vrot.lane.b32.xlu0 %v1629, 112
      %v1852 = vpop.permute.xlu0 %1851
      %1853 = vrot.lane.b32.xlu0 %v1630, 80
      %v1854 = vpop.permute.xlu0 %1853
      %v1856 = vsel %vm831, %v1852, 0
      %v1859 = vsel %vm831, %v1854, 0
      %1861 = vmatprep.subr.bf16.mxu0 0
      %1862 = vmatpush1.bf16.xpose.msra.mxu0 0
      %1863 = vmatprep.subr.bf16.mxu0 0
      %1864 = vmatpush1.bf16.xpose.msra.mxu0 0
      %1865 = vmatprep.subr.bf16.mxu0 0
      %1866 = vmatpush1.bf16.xpose.msra.mxu0 0
      %1867 = vmatprep.subr.bf16.mxu0 0
      %1868 = vmatpush1.bf16.xpose.msra.mxu0 0
      %1869 = vmatprep.subr.bf16.mxu0 0
      %1870 = vmatpush1.bf16.xpose.msra.mxu0 0
      %1871 = vmatprep.subr.bf16.mxu0 0
      %1872 = vmatpush1.bf16.xpose.msra.mxu0 0
      %1873 = vmatprep.subr.bf16.mxu0 0
      %1874 = vmatpush1.bf16.xpose.msra.mxu0 0
      %1875 = vmatprep.subr.bf16.mxu0 0
      %1876 = vmatpush1.bf16.xpose.msra.mxu0 %v1859
      %1877 = vmatprep.subr.bf16.mxu0 0
      %1878 = vmatpush2.bf16.xpose.msra.mxu0 0
      %1879 = vmatprep.subr.bf16.mxu0 0
      %1880 = vmatpush2.bf16.xpose.msra.mxu0 0
      %1881 = vmatprep.subr.bf16.mxu0 0
      %1882 = vmatpush2.bf16.xpose.msra.mxu0 0
      %1883 = vmatprep.subr.bf16.mxu0 0
      %1884 = vmatpush2.bf16.xpose.msra.mxu0 0
      %1885 = vmatprep.subr.bf16.mxu0 0
      %1886 = vmatpush2.bf16.xpose.msra.mxu0 0
      %1887 = vmatprep.subr.bf16.mxu0 0
      %1888 = vmatpush2.bf16.xpose.msra.mxu0 0
      %1889 = vmatprep.subr.bf16.mxu0 0
      %1890 = vmatpush2.bf16.xpose.msra.mxu0 0
      %1891 = vmatprep.subr.bf16.mxu0 0
      %1892 = vmatpush2.bf16.xpose.msra.mxu0 0
      %1893 = vmatprep.mubr.bf16.mxu0 0
      %1894 = vmatmul.mubr.bf16.gmra.mxu0 %v1856
      %v1895 = vpop.f32.mrf.mxu0
      %v1896 = vadd.f32 %v732, %v1895
      %v1897 = vpop.f32.mrf.mxu0
      %v1898 = vpop.f32.mrf.mxu0
      %v1899 = vpop.f32.mrf.mxu0
      %1900 = vdwg.mxu0
      %v1901 = vsel %vm831, %v1896, -inf
      %1902 = vmax.xlane.f32.xlu0 %v1901
      %v1903 = vpop.xlane.xlu0 %1902
      %v1904 = vsub.f32 %v1896, %v1903
      %v1905 = vmul.f32 %v1904, 1.442695
      %v1906 = vpow.pop %v1905
      %v1907 = vsel %vm831, %v1906, 0.0
      %1908 = vadd.xlane.f32.xlu0 %v1907
      %v1909 = vpop.xlane.xlu0 %1908
      %v1910 = vrcp.pop %v1909
      %v1911 = vmul.f32 %v1906, %v1910
      %v1912 = vpack.c.bf16 %v1911, %v1911
      %1913 = vrot.lane.b32.xlu0 %v1630, 48
      %v1914 = vpop.permute.xlu0 %1913
      %v1916 = vsel %vm831, %v1912, 0
      %v1919 = vsel %vm895, %v1914, 0
      %1921 = vmatprep.subr.bf16.mxu0 0
      %1922 = vmatpush1.bf16.msra.mxu0 0
      %1923 = vmatprep.subr.bf16.mxu0 0
      %1924 = vmatpush1.bf16.msra.mxu0 0
      %1925 = vmatprep.subr.bf16.mxu0 0
      %1926 = vmatpush1.bf16.msra.mxu0 0
      %1927 = vmatprep.subr.bf16.mxu0 0
      %1928 = vmatpush1.bf16.msra.mxu0 0
      %1929 = vmatprep.subr.bf16.mxu0 0
      %1930 = vmatpush1.bf16.msra.mxu0 0
      %1931 = vmatprep.subr.bf16.mxu0 0
      %1932 = vmatpush1.bf16.msra.mxu0 0
      %1933 = vmatprep.subr.bf16.mxu0 0
      %1934 = vmatpush1.bf16.msra.mxu0 0
      %1935 = vmatprep.subr.bf16.mxu0 0
      %1936 = vmatpush1.bf16.msra.mxu0 %v1919
      %1937 = vmatprep.subr.bf16.mxu0 0
      %1938 = vmatpush2.bf16.msra.mxu0 0
      %1939 = vmatprep.subr.bf16.mxu0 0
      %1940 = vmatpush2.bf16.msra.mxu0 0
      %1941 = vmatprep.subr.bf16.mxu0 0
      %1942 = vmatpush2.bf16.msra.mxu0 0
      %1943 = vmatprep.subr.bf16.mxu0 0
      %1944 = vmatpush2.bf16.msra.mxu0 0
      %1945 = vmatprep.subr.bf16.mxu0 0
      %1946 = vmatpush2.bf16.msra.mxu0 0
      %1947 = vmatprep.subr.bf16.mxu0 0
      %1948 = vmatpush2.bf16.msra.mxu0 0
      %1949 = vmatprep.subr.bf16.mxu0 0
      %1950 = vmatpush2.bf16.msra.mxu0 0
      %1951 = vmatprep.subr.bf16.mxu0 0
      %1952 = vmatpush2.bf16.msra.mxu0 0
      %1953 = vmatprep.mubr.bf16.mxu0 0
      %1954 = vmatmul.mubr.bf16.gmra.mxu0 %v1916
      %v1955 = vpop.f32.mrf.mxu0
      %v1956 = vadd.f32 0.0, %v1955
      %v1957 = vpop.f32.mrf.mxu0
      %v1958 = vpop.f32.mrf.mxu0
      %v1959 = vpop.f32.mrf.mxu0
      %1960 = vdwg.mxu0
      %1961 = vrot.lane.b32.xlu0 %v1629, 104
      %v1962 = vpop.permute.xlu0 %1961
      %1963 = vrot.lane.b32.xlu0 %v1630, 72
      %v1964 = vpop.permute.xlu0 %1963
      %v1966 = vsel %vm831, %v1962, 0
      %v1969 = vsel %vm831, %v1964, 0
      %1971 = vmatprep.subr.bf16.mxu0 0
      %1972 = vmatpush1.bf16.xpose.msra.mxu0 0
      %1973 = vmatprep.subr.bf16.mxu0 0
      %1974 = vmatpush1.bf16.xpose.msra.mxu0 0
      %1975 = vmatprep.subr.bf16.mxu0 0
      %1976 = vmatpush1.bf16.xpose.msra.mxu0 0
      %1977 = vmatprep.subr.bf16.mxu0 0
      %1978 = vmatpush1.bf16.xpose.msra.mxu0 0
      %1979 = vmatprep.subr.bf16.mxu0 0
      %1980 = vmatpush1.bf16.xpose.msra.mxu0 0
      %1981 = vmatprep.subr.bf16.mxu0 0
      %1982 = vmatpush1.bf16.xpose.msra.mxu0 0
      %1983 = vmatprep.subr.bf16.mxu0 0
      %1984 = vmatpush1.bf16.xpose.msra.mxu0 0
      %1985 = vmatprep.subr.bf16.mxu0 0
      %1986 = vmatpush1.bf16.xpose.msra.mxu0 %v1969
      %1987 = vmatprep.subr.bf16.mxu0 0
      %1988 = vmatpush2.bf16.xpose.msra.mxu0 0
      %1989 = vmatprep.subr.bf16.mxu0 0
      %1990 = vmatpush2.bf16.xpose.msra.mxu0 0
      %1991 = vmatprep.subr.bf16.mxu0 0
      %1992 = vmatpush2.bf16.xpose.msra.mxu0 0
      %1993 = vmatprep.subr.bf16.mxu0 0
      %1994 = vmatpush2.bf16.xpose.msra.mxu0 0
      %1995 = vmatprep.subr.bf16.mxu0 0
      %1996 = vmatpush2.bf16.xpose.msra.mxu0 0
      %1997 = vmatprep.subr.bf16.mxu0 0
      %1998 = vmatpush2.bf16.xpose.msra.mxu0 0
      %1999 = vmatprep.subr.bf16.mxu0 0
      %2000 = vmatpush2.bf16.xpose.msra.mxu0 0
      %2001 = vmatprep.subr.bf16.mxu0 0
      %2002 = vmatpush2.bf16.xpose.msra.mxu0 0
      %2003 = vmatprep.mubr.bf16.mxu0 0
      %2004 = vmatmul.mubr.bf16.gmra.mxu0 %v1966
      %v2005 = vpop.f32.mrf.mxu0
      %v2006 = vadd.f32 %v732, %v2005
      %v2007 = vpop.f32.mrf.mxu0
      %v2008 = vpop.f32.mrf.mxu0
      %v2009 = vpop.f32.mrf.mxu0
      %2010 = vdwg.mxu0
      %v2011 = vsel %vm831, %v2006, -inf
      %2012 = vmax.xlane.f32.xlu0 %v2011
      %v2013 = vpop.xlane.xlu0 %2012
      %v2014 = vsub.f32 %v2006, %v2013
      %v2015 = vmul.f32 %v2014, 1.442695
      %v2016 = vpow.pop %v2015
      %v2017 = vsel %vm831, %v2016, 0.0
      %2018 = vadd.xlane.f32.xlu0 %v2017
      %v2019 = vpop.xlane.xlu0 %2018
      %v2020 = vrcp.pop %v2019
      %v2021 = vmul.f32 %v2016, %v2020
      %v2022 = vpack.c.bf16 %v2021, %v2021
      %2023 = vrot.lane.b32.xlu0 %v1630, 40
      %v2024 = vpop.permute.xlu0 %2023
      %v2026 = vsel %vm831, %v2022, 0
      %v2029 = vsel %vm895, %v2024, 0
      %2031 = vmatprep.subr.bf16.mxu0 0
      %2032 = vmatpush1.bf16.msra.mxu0 0
      %2033 = vmatprep.subr.bf16.mxu0 0
      %2034 = vmatpush1.bf16.msra.mxu0 0
      %2035 = vmatprep.subr.bf16.mxu0 0
      %2036 = vmatpush1.bf16.msra.mxu0 0
      %2037 = vmatprep.subr.bf16.mxu0 0
      %2038 = vmatpush1.bf16.msra.mxu0 0
      %2039 = vmatprep.subr.bf16.mxu0 0
      %2040 = vmatpush1.bf16.msra.mxu0 0
      %2041 = vmatprep.subr.bf16.mxu0 0
      %2042 = vmatpush1.bf16.msra.mxu0 0
      %2043 = vmatprep.subr.bf16.mxu0 0
      %2044 = vmatpush1.bf16.msra.mxu0 0
      %2045 = vmatprep.subr.bf16.mxu0 0
      %2046 = vmatpush1.bf16.msra.mxu0 %v2029
      %2047 = vmatprep.subr.bf16.mxu0 0
      %2048 = vmatpush2.bf16.msra.mxu0 0
      %2049 = vmatprep.subr.bf16.mxu0 0
      %2050 = vmatpush2.bf16.msra.mxu0 0
      %2051 = vmatprep.subr.bf16.mxu0 0
      %2052 = vmatpush2.bf16.msra.mxu0 0
      %2053 = vmatprep.subr.bf16.mxu0 0
      %2054 = vmatpush2.bf16.msra.mxu0 0
      %2055 = vmatprep.subr.bf16.mxu0 0
      %2056 = vmatpush2.bf16.msra.mxu0 0
      %2057 = vmatprep.subr.bf16.mxu0 0
      %2058 = vmatpush2.bf16.msra.mxu0 0
      %2059 = vmatprep.subr.bf16.mxu0 0
      %2060 = vmatpush2.bf16.msra.mxu0 0
      %2061 = vmatprep.subr.bf16.mxu0 0
      %2062 = vmatpush2.bf16.msra.mxu0 0
      %2063 = vmatprep.mubr.bf16.mxu0 0
      %2064 = vmatmul.mubr.bf16.gmra.mxu0 %v2026
      %v2065 = vpop.f32.mrf.mxu0
      %v2066 = vadd.f32 0.0, %v2065
      %v2067 = vpop.f32.mrf.mxu0
      %v2068 = vpop.f32.mrf.mxu0
      %v2069 = vpop.f32.mrf.mxu0
      %2070 = vdwg.mxu0
      %2072 = vrot.lane.b32.xlu0 %v1846, 8
      %v2073 = vpop.permute.xlu0 %2072
      %2076 = vrot.lane.b32.xlu0 %v1956, 16
      %v2077 = vpop.permute.xlu0 %2076
      %2080 = vrot.lane.b32.xlu0 %v2066, 24
      %v2081 = vpop.permute.xlu0 %2080
      %v2083 = vsel %vm831, %v1735, %v2073
      %v2084 = vsel %vm1283, %v2083, %v2077
      %v2085 = vsel %vm1285, %v2084, %v2081
      %v2086 = vpack.c.bf16 %v2085, %v2085
      %s2087 = scalar_lea.vmem %s9, 16
      %v2088 = vld [vmem:[%s2087] sm:$0xf]
      %v2089 = vld [vmem:[%s2087 + $0x4] sm:$0xf]
      %v2090 = vld [vmem:[%s2087 + $0x8] sm:$0xf]
      %v2091 = vld [vmem:[%s2087 + $0xc] sm:$0xf]
      %v2092 = vld [vmem:[%s10 + $0x1] sm:$0x1]
      %v2093 = vlaneseq
      %v2094 = vshrl.u32 %v2093, 7
      %v2095 = vsub.s32 0, %v2094
      %v2096 = vrot.slane %v2092, %v2095
      %v2101 = vunpack.c.l.b16 %v2088
      %v2102 = vunpack.c.l.b16 %v2089
      %v2103 = vunpack.c.l.b16 %v2090
      %v2104 = vunpack.c.l.b16 %v2091
      %v2105 = vpack.c.b16 %v2102, %v2101
      %v2106 = vpack.c.b16 %v2104, %v2103
      %v2110 = vsel %vm698, %v2086, 0
      %2112 = vmatprep.subr.bf16.mxu0 0
      %2113 = vmatpush1.bf16.msra.mxu0 0
      %2114 = vmatprep.subr.bf16.mxu0 0
      %2115 = vmatpush1.bf16.msra.mxu0 0
      %2116 = vmatprep.subr.bf16.mxu0 0
      %2117 = vmatpush1.bf16.msra.mxu0 0
      %2118 = vmatprep.subr.bf16.mxu0 0
      %2119 = vmatpush1.bf16.msra.mxu0 0
      %2120 = vmatprep.subr.bf16.mxu0 0
      %2121 = vmatpush1.bf16.msra.mxu0 0
      %2122 = vmatprep.subr.bf16.mxu0 0
      %2123 = vmatpush1.bf16.msra.mxu0 0
      %2124 = vmatprep.subr.bf16.mxu0 0
      %2125 = vmatpush1.bf16.msra.mxu0 %v2106
      %2126 = vmatprep.subr.bf16.mxu0 0
      %2127 = vmatpush1.bf16.msra.mxu0 %v2105
      %2128 = vmatprep.subr.bf16.mxu0 0
      %2129 = vmatpush2.bf16.msra.mxu0 0
      %2130 = vmatprep.subr.bf16.mxu0 0
      %2131 = vmatpush2.bf16.msra.mxu0 0
      %2132 = vmatprep.subr.bf16.mxu0 0
      %2133 = vmatpush2.bf16.msra.mxu0 0
      %2134 = vmatprep.subr.bf16.mxu0 0
      %2135 = vmatpush2.bf16.msra.mxu0 0
      %2136 = vmatprep.subr.bf16.mxu0 0
      %2137 = vmatpush2.bf16.msra.mxu0 0
      %2138 = vmatprep.subr.bf16.mxu0 0
      %2139 = vmatpush2.bf16.msra.mxu0 0
      %2140 = vmatprep.subr.bf16.mxu0 0
      %2141 = vmatpush2.bf16.msra.mxu0 0
      %2142 = vmatprep.subr.bf16.mxu0 0
      %2143 = vmatpush2.bf16.msra.mxu0 0
      %2144 = vmatprep.mubr.bf16.mxu0 0
      %2145 = vmatmul.mubr.bf16.gmra.mxu0 %v2110
      %v2146 = vpop.f32.mrf.mxu0
      %v2147 = vadd.f32 %v2096, %v2146
      %v2148 = vpop.f32.mrf.mxu0
      %v2149 = vpop.f32.mrf.mxu0
      %v2150 = vpop.f32.mrf.mxu0
      %2151 = vdwg.mxu0
      %v2152 = vadd.f32 %v2147, %v1534
      %v2153 = vld [vmem:[%s11 + $0x1] sm:$0x1]
      %v2154 = vld [vmem:[%s12 + $0x1] sm:$0x1]
      %v2155 = vsel %vm698, %v2152, 0.0
      %2156 = vadd.xlane.f32.xlu0 %v2155
      %v2157 = vpop.xlane.xlu0 %2156
      %v2158 = vmul.f32 %v2157, %v702
      %v2159 = vmul.f32 %v2152, %v2152
      %v2160 = vsel %vm698, %v2159, 0.0
      %2161 = vadd.xlane.f32.xlu0 %v2160
      %v2162 = vpop.xlane.xlu0 %2161
      %v2163 = vmul.f32 %v2162, %v702
      %v2164 = vmul.f32 %v2158, %v2158
      %v2165 = vsub.f32 %v2163, %v2164
      %v2166 = vsub.f32 %v2152, %v2158
      %v2167 = vadd.f32 %v2165, 1e-05
      %v2168 = vrsqrt.pop %v2167
      %v2169 = vmul.f32 %v2166, %v2168
      %v2170 = vlaneseq
      %v2171 = vshrl.u32 %v2170, 7
      %v2172 = vsub.s32 0, %v2171
      %v2173 = vrot.slane %v2153, %v2172
      %v2174 = vmul.f32 %v2169, %v2173
      %v2175 = vlaneseq
      %v2176 = vshrl.u32 %v2175, 7
      %v2177 = vsub.s32 0, %v2176
      %v2178 = vrot.slane %v2154, %v2177
      %v2179 = vadd.f32 %v2174, %v2178
      %v2180 = vpack.c.bf16 %v2179, %v2179
      %s2181 = scalar_lea.vmem %s13, 16
      %v2182 = vld [vmem:[%s2181] sm:$0xf]
      %v2183 = vld [vmem:[%s2181 + $0x4] sm:$0xf]
      %v2184 = vld [vmem:[%s2181 + $0x8] sm:$0xf]
      %v2185 = vld [vmem:[%s2181 + $0xc] sm:$0xf]
      %v2186 = vld [vmem:[%s14 + $0x1] sm:$0x1]
      %v2187 = vlaneseq
      %v2188 = vshrl.u32 %v2187, 7
      %v2189 = vsub.s32 0, %v2188
      %v2190 = vrot.slane %v2186, %v2189
      %v2195 = vunpack.c.l.b16 %v2182
      %v2196 = vunpack.c.l.b16 %v2183
      %v2197 = vunpack.c.l.b16 %v2184
      %v2198 = vunpack.c.l.b16 %v2185
      %v2199 = vpack.c.b16 %v2196, %v2195
      %v2200 = vpack.c.b16 %v2198, %v2197
      %v2204 = vsel %vm698, %v2180, 0
      %2206 = vmatprep.subr.bf16.mxu0 0
      %2207 = vmatpush1.bf16.msra.mxu0 0
      %2208 = vmatprep.subr.bf16.mxu0 0
      %2209 = vmatpush1.bf16.msra.mxu0 0
      %2210 = vmatprep.subr.bf16.mxu0 0
      %2211 = vmatpush1.bf16.msra.mxu0 0
      %2212 = vmatprep.subr.bf16.mxu0 0
      %2213 = vmatpush1.bf16.msra.mxu0 0
      %2214 = vmatprep.subr.bf16.mxu0 0
      %2215 = vmatpush1.bf16.msra.mxu0 0
      %2216 = vmatprep.subr.bf16.mxu0 0
      %2217 = vmatpush1.bf16.msra.mxu0 0
      %2218 = vmatprep.subr.bf16.mxu0 0
      %2219 = vmatpush1.bf16.msra.mxu0 %v2200
      %2220 = vmatprep.subr.bf16.mxu0 0
      %2221 = vmatpush1.bf16.msra.mxu0 %v2199
      %2222 = vmatprep.subr.bf16.mxu0 0
      %2223 = vmatpush2.bf16.msra.mxu0 0
      %2224 = vmatprep.subr.bf16.mxu0 0
      %2225 = vmatpush2.bf16.msra.mxu0 0
      %2226 = vmatprep.subr.bf16.mxu0 0
      %2227 = vmatpush2.bf16.msra.mxu0 0
      %2228 = vmatprep.subr.bf16.mxu0 0
      %2229 = vmatpush2.bf16.msra.mxu0 0
      %2230 = vmatprep.subr.bf16.mxu0 0
      %2231 = vmatpush2.bf16.msra.mxu0 0
      %2232 = vmatprep.subr.bf16.mxu0 0
      %2233 = vmatpush2.bf16.msra.mxu0 0
      %2234 = vmatprep.subr.bf16.mxu0 0
      %2235 = vmatpush2.bf16.msra.mxu0 0
      %2236 = vmatprep.subr.bf16.mxu0 0
      %2237 = vmatpush2.bf16.msra.mxu0 0
      %2238 = vmatprep.mubr.bf16.mxu0 0
      %2239 = vmatmul.mubr.bf16.gmra.mxu0 %v2204
      %v2240 = vpop.f32.mrf.mxu0
      %v2241 = vadd.f32 %v2190, %v2240
      %v2242 = vpop.f32.mrf.mxu0
      %v2243 = vpop.f32.mrf.mxu0
      %v2244 = vpop.f32.mrf.mxu0
      %2245 = vdwg.mxu0
      %v2246 = vmul.f32 %v2241, 1.702
      %v2247 = vxor.u32 %v2246, 2147483648
      %v2248 = vmul.f32 %v2247, 1.442695
      %v2249 = vpow.pop %v2248
      %v2250 = vadd.f32 %v2249, 1.0
      %v2251 = vrcp.pop %v2250
      %v2252 = vmul.f32 1.0, %v2251
      %v2253 = vmul.f32 %v2241, %v2252
      %v2254 = vpack.c.bf16 %v2253, %v2253
      %s2255 = scalar_lea.vmem %s15, 32
      %v2256 = vld [vmem:[%s2255] sm:$0xf]
      %v2257 = vld [vmem:[%s2255 + $0x4] sm:$0xf]
      %v2258 = vld [vmem:[%s2255 + $0x8] sm:$0xf]
      %v2259 = vld [vmem:[%s2255 + $0xc] sm:$0xf]
      %v2260 = vld [vmem:[%s2255 + $0x10] sm:$0xf]
      %v2261 = vld [vmem:[%s2255 + $0x14] sm:$0xf]
      %v2262 = vld [vmem:[%s2255 + $0x18] sm:$0xf]
      %v2263 = vld [vmem:[%s2255 + $0x1c] sm:$0xf]
      %v2264 = vld [vmem:[%s16 + $0x1] sm:$0x1]
      %v2265 = vlaneseq
      %v2266 = vshrl.u32 %v2265, 7
      %v2267 = vsub.s32 0, %v2266
      %v2268 = vrot.slane %v2264, %v2267
      %v2277 = vunpack.c.l.b16 %v2256
      %v2278 = vunpack.c.l.b16 %v2257
      %v2279 = vunpack.c.l.b16 %v2258
      %v2280 = vunpack.c.l.b16 %v2259
      %v2281 = vunpack.c.l.b16 %v2260
      %v2282 = vunpack.c.l.b16 %v2261
      %v2283 = vunpack.c.l.b16 %v2262
      %v2284 = vunpack.c.l.b16 %v2263
      %v2285 = vpack.c.b16 %v2278, %v2277
      %v2286 = vpack.c.b16 %v2280, %v2279
      %v2287 = vpack.c.b16 %v2282, %v2281
      %v2288 = vpack.c.b16 %v2284, %v2283
      %v2294 = vsel %vm652, %v2254, 0
      %2296 = vmatprep.subr.bf16.mxu0 0
      %2297 = vmatpush1.bf16.msra.mxu0 0
      %2298 = vmatprep.subr.bf16.mxu0 0
      %2299 = vmatpush1.bf16.msra.mxu0 0
      %2300 = vmatprep.subr.bf16.mxu0 0
      %2301 = vmatpush1.bf16.msra.mxu0 0
      %2302 = vmatprep.subr.bf16.mxu0 0
      %2303 = vmatpush1.bf16.msra.mxu0 0
      %2304 = vmatprep.subr.bf16.mxu0 0
      %2305 = vmatpush1.bf16.msra.mxu0 %v2288
      %2306 = vmatprep.subr.bf16.mxu0 0
      %2307 = vmatpush1.bf16.msra.mxu0 %v2287
      %2308 = vmatprep.subr.bf16.mxu0 0
      %2309 = vmatpush1.bf16.msra.mxu0 %v2286
      %2310 = vmatprep.subr.bf16.mxu0 0
      %2311 = vmatpush1.bf16.msra.mxu0 %v2285
      %2312 = vmatprep.subr.bf16.mxu0 0
      %2313 = vmatpush2.bf16.msra.mxu0 0
      %2314 = vmatprep.subr.bf16.mxu0 0
      %2315 = vmatpush2.bf16.msra.mxu0 0
      %2316 = vmatprep.subr.bf16.mxu0 0
      %2317 = vmatpush2.bf16.msra.mxu0 0
      %2318 = vmatprep.subr.bf16.mxu0 0
      %2319 = vmatpush2.bf16.msra.mxu0 0
      %2320 = vmatprep.subr.bf16.mxu0 0
      %2321 = vmatpush2.bf16.msra.mxu0 0
      %2322 = vmatprep.subr.bf16.mxu0 0
      %2323 = vmatpush2.bf16.msra.mxu0 0
      %2324 = vmatprep.subr.bf16.mxu0 0
      %2325 = vmatpush2.bf16.msra.mxu0 0
      %2326 = vmatprep.subr.bf16.mxu0 0
      %2327 = vmatpush2.bf16.msra.mxu0 0
      %2328 = vmatprep.mubr.bf16.mxu0 0
      %2329 = vmatmul.mubr.bf16.gmra.mxu0 %v2294
      %v2330 = vpop.f32.mrf.mxu0
      %v2331 = vadd.f32 %v2268, %v2330
      %v2332 = vpop.f32.mrf.mxu0
      %v2333 = vpop.f32.mrf.mxu0
      %v2334 = vpop.f32.mrf.mxu0
      %2335 = vdwg.mxu0
      %v2336 = vadd.f32 %v2331, %v2152
      %2337 = vst.msk [vmem:[%s546] sm:$0xff] %vm698, %v2336
      %p2338 = scmp.lt.s32.totalorder %s28, 1
      %s2339 = scalar_select %p2338, %s28, 1
      %s2340 = smul.addr %s2339, 8
      %s2341 = scalar_lea.vmem %s17, %s2340
      // Predicated region
      $region89: #{clip_vision_tower_forward.1} parent=87 // pred_check
        %p2342 = pneg %p408
      $region90: #{clip_vision_tower_forward.1} parent=87 // pred_check_branch
        %2344 = sbr.rel (%p2342) target = $region92
      $region91: #{clip_vision_tower_forward.1} parent=87 // pred_region
        _
      $region92: #{clip_vision_tower_forward.1} parent=87 // pred_fallthru
        _
    $region88: #{clip_vision_tower_forward.1} parent=5 // pred_fallthru
      _
    %p2345 = scmp.le.s32.totalorder 2, %s23
    // Predicated region
    $region93: #{clip_vision_tower_forward.1} parent=5 // pred_check
      %p2346 = pneg %p2345
    $region94: #{clip_vision_tower_forward.1} parent=5 // pred_check_branch
      %2348 = sbr.rel (%p2346) target = $region96
    $region95: #{clip_vision_tower_forward.1} parent=5 // pred_region
      %s2349 = ssub.s32 %s23, 2
      // Predicated region
      $region97: #{clip_vision_tower_forward.1} parent=95 // pred_check
        %p2350 = pneg %p414
      $region98: #{clip_vision_tower_forward.1} parent=95 // pred_check_branch
        %2352 = sbr.rel (%p2350) target = $region100
      $region99: #{clip_vision_tower_forward.1} parent=95 // pred_region
        %p2353 = scmp.lt.s32.totalorder %s29, 1
        %s2354 = scalar_select %p2353, %s29, 1
        %s2355 = smul.addr %s2354, 8
        %s2356 = scalar_lea.vmem %s17, %s2355
      $region100: #{clip_vision_tower_forward.1} parent=95 // pred_fallthru
        _
    $region96: #{clip_vision_tower_forward.1} parent=5 // pred_fallthru
      _
  $region6: #{clip_vision_tower_forward.1} parent=0 // loop_footer
    %s27 = sadd.s32 1, %s23
  $region7: #{clip_vision_tower_forward.1} parent=0 // loop_footer_branch
    %22 = sbr.rel target = $region3
  $region8: #{clip_vision_tower_forward.1} parent=0 // loop_exit
    _

</llo_original>
